<compile_context>
chip_gen: v5e
topology: v5e:2x2
jax: 0.10.0
libtpu: 0.0.40
codegen_flags: <defaults>
</compile_context>

<pallas_src>
import jax
import jax.numpy as jnp
from jax.experimental import pallas as pl
from jax.experimental.pallas import tpu as pltpu

OBS_DIMS = 3            # pendulum observation dims
ACT_DIMS = 1            # pendulum action dims
IN_DIM = OBS_DIMS + ACT_DIMS
H1 = 512
H2 = 1024
TM = 256                # batch tile (MXU M dimension; multiple of 128 for v5e)


def qnet_kernel(x_ref, w1_ref, b1_ref, w2_ref, b2_ref, w3_ref, b3_ref, o_ref):
    # Layer 1: (TM, IN_DIM) @ (IN_DIM, H1) + b1, ReLU.  f32 operands (tiny K).
    h1 = (jnp.dot(x_ref[...], w1_ref[...], preferred_element_type=jnp.float32)
          + b1_ref[...])
    h1 = jnp.maximum(h1, 0.0)

    # Layer 2: bf16 MXU operands, f32 accumulation; bias/ReLU in f32.
    h2 = (jnp.dot(h1.astype(jnp.bfloat16), w2_ref[...],
                  preferred_element_type=jnp.float32)
          + b2_ref[...])
    h2 = jnp.maximum(h2, 0.0)

    # Layer 3 (N=1): VPU broadcast-multiply + lane reduction instead of an
    # MXU matmul with a single live output lane.
    q = jnp.sum(h2 * w3_ref[...], axis=-1, keepdims=True) + b3_ref[...]
    o_ref[...] = q.astype(o_ref.dtype)


def qnetwork_forward(state, action, params, *, tm=TM):
    """state: (B, OBS_DIMS) f32, action: (B, ACT_DIMS) f32 -> (B, 1) f32."""
    w1, b1, w2_bf16, b2, w3_row, b3 = params
    B = state.shape[0]

    # torch.cat([state, action], dim=1) once, in the wrapper.
    x = jnp.concatenate([state.astype(jnp.float32),
                         action.astype(jnp.float32)], axis=1)

    # Pad batch up to a full MXU tile.
    n_tiles = pl.cdiv(B, tm)
    b_pad = n_tiles * tm
    if b_pad != B:
        x = jnp.pad(x, ((0, b_pad - B), (0, 0)))

    flops = 2 * b_pad * (IN_DIM * H1 + H1 * H2 + H2)
    bytes_accessed = (x.size * 4 + w1.size * 4 + b1.size * 4
                      + w2_bf16.size * 2 + b2.size * 4
                      + w3_row.size * 4 + b3.size * 4 + b_pad * 4)

    out = pl.pallas_call(
        qnet_kernel,
        out_shape=jax.ShapeDtypeStruct((b_pad, 1), jnp.float32),
        grid_spec=pltpu.PrefetchScalarGridSpec(
            num_scalar_prefetch=0,
            grid=(n_tiles,),
            in_specs=[
                # streamed activation tile
                pl.BlockSpec((tm, IN_DIM), lambda i: (i, 0)),
                # weights / biases: resident across all grid steps
                pl.BlockSpec((IN_DIM, H1), lambda i: (0, 0)),
                pl.BlockSpec((1, H1), lambda i: (0, 0)),
                pl.BlockSpec((H1, H2), lambda i: (0, 0)),
                pl.BlockSpec((1, H2), lambda i: (0, 0)),
                pl.BlockSpec((1, H2), lambda i: (0, 0)),
                pl.BlockSpec((1, 1), lambda i: (0, 0)),
            ],
            out_specs=pl.BlockSpec((tm, 1), lambda i: (i, 0)),
        ),
        compiler_params=pltpu.CompilerParams(
            dimension_semantics=("parallel",),
            vmem_limit_bytes=32 * 1024 * 1024,
        ),
        cost_estimate=pl.CostEstimate(
            flops=int(flops), transcendentals=0,
            bytes_accessed=int(bytes_accessed)),
    )(x, w1, b1, w2_bf16, b2, w3_row, b3)

    return out[:B]


def init_params(key):
    """Deterministic init matching PyTorch nn.Linear shapes (stored transposed)."""
    def linear(key, fan_in, fan_out):
        kw, kb = jax.random.split(key)
        bound = 1.0 / jnp.sqrt(jnp.float32(fan_in))
        w = jax.random.uniform(kw, (fan_in, fan_out), jnp.float32, -bound, bound)
        b = jax.random.uniform(kb, (1, fan_out), jnp.float32, -bound, bound)
        return w, b

    k1, k2, k3 = jax.random.split(key, 3)
    w1, b1 = linear(k1, IN_DIM, H1)          # (4, 512) f32
    w2, b2 = linear(k2, H1, H2)              # (512, 1024)
    w3, b3 = linear(k3, H2, 1)               # (1024, 1)
    # W2 is the dominant byte mover: store in bf16 (f32 accumulation in-kernel).
    w2_bf16 = w2.astype(jnp.bfloat16)
    # W3 stored as a (1, H2) row for the in-kernel VPU reduction.
    w3_row = w3.T                             # (1, 1024) f32
    return (w1, b1, w2_bf16, b2, w3_row, b3)


def reference_forward(state, action, params):
    """Pure-JAX reference with the same dtype plan (bf16 W2, f32 accumulate)."""
    w1, b1, w2_bf16, b2, w3_row, b3 = params
    x = jnp.concatenate([state, action], axis=1)
    h1 = jax.nn.relu(jnp.dot(x, w1, preferred_element_type=jnp.float32) + b1)
    h2 = jax.nn.relu(jnp.dot(h1.astype(jnp.bfloat16), w2_bf16,
                             preferred_element_type=jnp.float32) + b2)
    return jnp.sum(h2 * w3_row, axis=-1, keepdims=True) + b3


if __name__ == "__main__":
    key = jax.random.PRNGKey(0)
    kp, ks, ka = jax.random.split(key, 3)

    params = init_params(kp)
    B = 8
    state = jax.random.normal(ks, (B, OBS_DIMS), jnp.float32)
    action = jax.random.normal(ka, (B, ACT_DIMS), jnp.float32)

    q = qnetwork_forward(state, action, params)
    q = jax.block_until_ready(q)

    q_ref = reference_forward(state, action, params)
    assert q.shape == (B, 1)
    assert jnp.allclose(q, q_ref, atol=1e-2, rtol=1e-2), "mismatch vs JAX reference"

    print("KERNEL_OK")
</pallas_src>

<mosaic_0001>
module attributes {stable_mosaic.version = 11 : i64} {
  func.func @qnet_kernel(%arg0: i32, %arg1: memref<256x4xf32, #tpu.memory_space<vmem>>, %arg2: memref<4x512xf32, #tpu.memory_space<vmem>>, %arg3: memref<1x512xf32, #tpu.memory_space<vmem>>, %arg4: memref<512x1024xbf16, #tpu.memory_space<vmem>>, %arg5: memref<1x1024xf32, #tpu.memory_space<vmem>>, %arg6: memref<1x1024xf32, #tpu.memory_space<vmem>>, %arg7: memref<1x1xf32, #tpu.memory_space<vmem>>, %arg8: memref<256x1xf32, #tpu.memory_space<vmem>>) attributes {dimension_semantics = [#tpu.dimension_semantics<parallel>], iteration_bounds = array<i64: 1>, scalar_prefetch = 0 : i64, scratch_operands = 0 : i64, tpu.core_type = #tpu.core_type<tc>, window_params = [{transform_indices = @transform_0, window_bounds = array<i64: 256, 4>}, {pipeline_mode = #tpu.pipeline_mode<synchronous>, transform_indices = @transform_1, window_bounds = array<i64: 4, 512>}, {pipeline_mode = #tpu.pipeline_mode<synchronous>, transform_indices = @transform_2, window_bounds = array<i64: 1, 512>}, {pipeline_mode = #tpu.pipeline_mode<synchronous>, transform_indices = @transform_3, window_bounds = array<i64: 512, 1024>}, {pipeline_mode = #tpu.pipeline_mode<synchronous>, transform_indices = @transform_4, window_bounds = array<i64: 1, 1024>}, {pipeline_mode = #tpu.pipeline_mode<synchronous>, transform_indices = @transform_5, window_bounds = array<i64: 1, 1024>}, {pipeline_mode = #tpu.pipeline_mode<synchronous>, transform_indices = @transform_6, window_bounds = array<i64: 1, 1>}, {transform_indices = @transform_7, window_bounds = array<i64: 256, 1>}]} {
    %c0 = arith.constant 0 : index
    %c0_0 = arith.constant 0 : index
    %0 = vector.load %arg1[%c0, %c0_0] : memref<256x4xf32, #tpu.memory_space<vmem>>, vector<256x4xf32>
    %c0_1 = arith.constant 0 : index
    %c0_2 = arith.constant 0 : index
    %1 = vector.load %arg2[%c0_1, %c0_2] : memref<4x512xf32, #tpu.memory_space<vmem>>, vector<4x512xf32>
    %cst = arith.constant dense<0.000000e+00> : vector<256x512xf32>
    %2 = tpu.matmul %0, %1, %cst {dimension_numbers = #tpu.dot_dimension_numbers<[1], [0], [0], [1], [0, 0, 1, 1], [], []>} : vector<256x4xf32>, vector<4x512xf32>, vector<256x512xf32> -> vector<256x512xf32>
    %c0_3 = arith.constant 0 : index
    %c0_4 = arith.constant 0 : index
    %3 = vector.load %arg3[%c0_3, %c0_4] : memref<1x512xf32, #tpu.memory_space<vmem>>, vector<1x512xf32>
    %4 = vector.broadcast %3 : vector<1x512xf32> to vector<256x512xf32>
    %5 = arith.addf %2, %4 : vector<256x512xf32>
    %cst_5 = arith.constant 0.000000e+00 : f32
    %6 = vector.broadcast %cst_5 : f32 to vector<256x512xf32>
    %7 = arith.maximumf %5, %6 : vector<256x512xf32>
    %8 = arith.truncf %7 : vector<256x512xf32> to vector<256x512xbf16>
    %c0_6 = arith.constant 0 : index
    %c0_7 = arith.constant 0 : index
    %9 = vector.load %arg4[%c0_6, %c0_7] : memref<512x1024xbf16, #tpu.memory_space<vmem>>, vector<512x1024xbf16>
    %cst_8 = arith.constant dense<0.000000e+00> : vector<256x1024xf32>
    %10 = tpu.matmul %8, %9, %cst_8 {dimension_numbers = #tpu.dot_dimension_numbers<[1], [0], [0], [1], [0, 0, 1, 1], [], []>} : vector<256x512xbf16>, vector<512x1024xbf16>, vector<256x1024xf32> -> vector<256x1024xf32>
    %c0_9 = arith.constant 0 : index
    %c0_10 = arith.constant 0 : index
    %11 = vector.load %arg5[%c0_9, %c0_10] : memref<1x1024xf32, #tpu.memory_space<vmem>>, vector<1x1024xf32>
    %12 = vector.broadcast %11 : vector<1x1024xf32> to vector<256x1024xf32>
    %13 = arith.addf %10, %12 : vector<256x1024xf32>
    %cst_11 = arith.constant 0.000000e+00 : f32
    %14 = vector.broadcast %cst_11 : f32 to vector<256x1024xf32>
    %15 = arith.maximumf %13, %14 : vector<256x1024xf32>
    %c0_12 = arith.constant 0 : index
    %c0_13 = arith.constant 0 : index
    %16 = vector.load %arg6[%c0_12, %c0_13] : memref<1x1024xf32, #tpu.memory_space<vmem>>, vector<1x1024xf32>
    %17 = vector.broadcast %16 : vector<1x1024xf32> to vector<256x1024xf32>
    %18 = arith.mulf %15, %17 : vector<256x1024xf32>
    %cst_14 = arith.constant dense<0.000000e+00> : vector<256xf32>
    %19 = vector.multi_reduction <add>, %18, %cst_14 [1] : vector<256x1024xf32> to vector<256xf32>
    %20 = vector.shape_cast %19 : vector<256xf32> to vector<256x1xf32>
    %c0_15 = arith.constant 0 : index
    %c0_16 = arith.constant 0 : index
    %21 = vector.load %arg7[%c0_15, %c0_16] : memref<1x1xf32, #tpu.memory_space<vmem>>, vector<1x1xf32>
    %22 = vector.broadcast %21 : vector<1x1xf32> to vector<256x1xf32>
    %23 = arith.addf %20, %22 : vector<256x1xf32>
    %c0_17 = arith.constant 0 : index
    %c0_18 = arith.constant 0 : index
    %24 = vector.load %arg8[%c0_17, %c0_18] : memref<256x1xf32, #tpu.memory_space<vmem>>, vector<256x1xf32>
    tpu.vector_store %arg8[%c0_17, %c0_18], %23 {strides = array<i32>} : memref<256x1xf32, #tpu.memory_space<vmem>>, vector<256x1xf32>,
    return
  }
  func.func @transform_0(%arg0: i32) -> (i32, i32) {
    %c0_i32 = arith.constant 0 : i32
    %c0_i32_0 = arith.constant 0 : i32
    return %arg0, %c0_i32 : i32, i32
  }
  func.func @transform_1(%arg0: i32) -> (i32, i32) {
    %c0_i32 = arith.constant 0 : i32
    %c0_i32_0 = arith.constant 0 : i32
    %c0_i32_1 = arith.constant 0 : i32
    return %c0_i32, %c0_i32_0 : i32, i32
  }
  func.func @transform_2(%arg0: i32) -> (i32, i32) {
    %c0_i32 = arith.constant 0 : i32
    %c0_i32_0 = arith.constant 0 : i32
    %c0_i32_1 = arith.constant 0 : i32
    return %c0_i32, %c0_i32_0 : i32, i32
  }
  func.func @transform_3(%arg0: i32) -> (i32, i32) {
    %c0_i32 = arith.constant 0 : i32
    %c0_i32_0 = arith.constant 0 : i32
    %c0_i32_1 = arith.constant 0 : i32
    return %c0_i32, %c0_i32_0 : i32, i32
  }
  func.func @transform_4(%arg0: i32) -> (i32, i32) {
    %c0_i32 = arith.constant 0 : i32
    %c0_i32_0 = arith.constant 0 : i32
    %c0_i32_1 = arith.constant 0 : i32
    return %c0_i32, %c0_i32_0 : i32, i32
  }
  func.func @transform_5(%arg0: i32) -> (i32, i32) {
    %c0_i32 = arith.constant 0 : i32
    %c0_i32_0 = arith.constant 0 : i32
    %c0_i32_1 = arith.constant 0 : i32
    return %c0_i32, %c0_i32_0 : i32, i32
  }
  func.func @transform_6(%arg0: i32) -> (i32, i32) {
    %c0_i32 = arith.constant 0 : i32
    %c0_i32_0 = arith.constant 0 : i32
    %c0_i32_1 = arith.constant 0 : i32
    return %c0_i32, %c0_i32_0 : i32, i32
  }
  func.func @transform_7(%arg0: i32) -> (i32, i32) {
    %c0_i32 = arith.constant 0 : i32
    %c0_i32_0 = arith.constant 0 : i32
    return %arg0, %c0_i32 : i32, i32
  }
}

</mosaic_0001>

<llo_original>
// kernel: tpu_custom_call.1
$region0: #{tpu_custom_call.1}
  #allocation0 [shape = 'u32[]', space=smem, size = 0x4, offset = 0x4, fixed_abs, tag = 'smem constant byte address 0x4 - core index']
  #allocation1 [shape = 'u32[72,128]{1,0:T(1,128)}', space=vmem, size = 0x9000, scoped, tag = 'internal scratch']
  #allocation2 [shape = 'f32[1,1]{1,0:T(1,128)S(1)}', space=vmem, size = 0x200, scoped, tag = 'scoped memory for tpu_custom_call.1']
  %s0 = inlined_call_operand.vmem [shape: f32[256,4], index: 0, kind: input, shape index: {}]
  %s1 = inlined_call_operand.vmem [shape: f32[4,512], index: 1, kind: input, shape index: {}]
  %s2 = inlined_call_operand.vmem [shape: f32[1,512], index: 2, kind: input, shape index: {}]
  %s3 = inlined_call_operand.hbm [shape: bf16[512,1024], index: 3, kind: input, shape index: {}]
  %s4 = inlined_call_operand.vmem [shape: f32[1,1024], index: 4, kind: input, shape index: {}]
  %s5 = inlined_call_operand.vmem [shape: f32[1,1024], index: 5, kind: input, shape index: {}]
  %s6 = inlined_call_operand.<no memory space> [shape: f32[1,1], index: 6, kind: input, shape index: {}]
  %s7 = inlined_call_operand.vmem [shape: f32[256,1], index: 7, kind: output, shape index: {}]
  %s8 = sld [smem:[#allocation0]]
  $region42: #{tpu_custom_call.1} parent=0
    _
  %s10 = ssub.s32 1, %s8
  %s11 = scalar_select 0, %s10, %s8
  %v12 = vstv %s6
  %13 = vst [vmem:[#allocation2] sm:$0x1] %v12
  $region1: #{tpu_custom_call.1} parent=0
    #allocation3 [shape = 'u8[1048576]{0}', space=vmem, size = 0x100000, scoped, tag = 'input window, operand 3, single buffered']
    #allocation4 [shape = 's32[1]{0}', space=sflag, size = 0x4, scoped, tag = 'scoped memory for tpu_custom_call.1']
    %14 = vsyncpa [#allocation4], 0
    // Predicated region
    $region2: #{tpu_custom_call.1} parent=1 // pred_check
      _
    $region3: #{tpu_custom_call.1} parent=1 // pred_check_branch
      %16 = sbr.rel (0) target = $region5
    $region4: #{tpu_custom_call.1} parent=1 // pred_region
      _
    $region5: #{tpu_custom_call.1} parent=1 // pred_fallthru
      _
    // Predicated region
    $region6: #{tpu_custom_call.1} parent=1 // pred_check
      _
    $region7: #{tpu_custom_call.1} parent=1 // pred_check_branch
      %18 = sbr.rel (0) target = $region9
    $region8: #{tpu_custom_call.1} parent=1 // pred_region
      _
    $region9: #{tpu_custom_call.1} parent=1 // pred_fallthru
      _
    // Predicated region
    $region10: #{tpu_custom_call.1} parent=1 // pred_check
      _
    $region11: #{tpu_custom_call.1} parent=1 // pred_check_branch
      %20 = sbr.rel (0) target = $region13
    $region12: #{tpu_custom_call.1} parent=1 // pred_region
      _
    $region13: #{tpu_custom_call.1} parent=1 // pred_fallthru
      _
    // Predicated region
    $region14: #{tpu_custom_call.1} parent=1 // pred_check
      _
    $region15: #{tpu_custom_call.1} parent=1 // pred_check_branch
      %22 = sbr.rel (0) target = $region17
    $region16: #{tpu_custom_call.1} parent=1 // pred_region
      %24 = vsyncadd [#allocation4], 0
      %s25 = sshll.u32 %s3, 4
      %s26 = int_to_ptr.hbm [resolvable:$true] %s25
      %s27 = sshll.u32 [#allocation3], 4
      %s28 = int_to_ptr.vmem [resolvable:$true] %s27
      %33 = dma.hbm_to_vmem [thread:$0]  %s26, 32768, %s28, [#allocation4], 512, 512, 32
    $region17: #{tpu_custom_call.1} parent=1 // pred_fallthru
      _
    // Predicated region
    $region18: #{tpu_custom_call.1} parent=1 // pred_check
      _
    $region19: #{tpu_custom_call.1} parent=1 // pred_check_branch
      %35 = sbr.rel (0) target = $region21
    $region20: #{tpu_custom_call.1} parent=1 // pred_region
      _
    $region21: #{tpu_custom_call.1} parent=1 // pred_fallthru
      _
    // Predicated region
    $region22: #{tpu_custom_call.1} parent=1 // pred_check
      _
    $region23: #{tpu_custom_call.1} parent=1 // pred_check_branch
      %37 = sbr.rel (0) target = $region25
    $region24: #{tpu_custom_call.1} parent=1 // pred_region
      _
    $region25: #{tpu_custom_call.1} parent=1 // pred_fallthru
      _
    // Predicated region
    $region26: #{tpu_custom_call.1} parent=1 // pred_check
      _
    $region27: #{tpu_custom_call.1} parent=1 // pred_check_branch
      %39 = sbr.rel (0) target = $region29
    $region28: #{tpu_custom_call.1} parent=1 // pred_region
      _
    $region29: #{tpu_custom_call.1} parent=1 // pred_fallthru
      _
    // Predicated region
    $region30: #{tpu_custom_call.1} parent=1 // pred_check
      _
    $region31: #{tpu_custom_call.1} parent=1 // pred_check_branch
      %41 = sbr.rel (0) target = $region33
    $region32: #{tpu_custom_call.1} parent=1 // pred_region
      %43 = dma.done [#allocation4], 32768
    $region33: #{tpu_custom_call.1} parent=1 // pred_fallthru
      _
    %v44 = vld [vmem:[%s0] sm:$0xff]
    %v45 = vld [vmem:[%s0 + $0x8] sm:$0xff]
    %v46 = vld [vmem:[%s0 + $0x10] sm:$0xff]
    %v47 = vld [vmem:[%s0 + $0x18] sm:$0xff]
    %v48 = vld [vmem:[%s0 + $0x20] sm:$0xff]
    %v49 = vld [vmem:[%s0 + $0x28] sm:$0xff]
    %v50 = vld [vmem:[%s0 + $0x30] sm:$0xff]
    %v51 = vld [vmem:[%s0 + $0x38] sm:$0xff]
    %v52 = vld [vmem:[%s0 + $0x40] sm:$0xff]
    %v53 = vld [vmem:[%s0 + $0x48] sm:$0xff]
    %v54 = vld [vmem:[%s0 + $0x50] sm:$0xff]
    %v55 = vld [vmem:[%s0 + $0x58] sm:$0xff]
    %v56 = vld [vmem:[%s0 + $0x60] sm:$0xff]
    %v57 = vld [vmem:[%s0 + $0x68] sm:$0xff]
    %v58 = vld [vmem:[%s0 + $0x70] sm:$0xff]
    %v59 = vld [vmem:[%s0 + $0x78] sm:$0xff]
    %v60 = vld [vmem:[%s0 + $0x80] sm:$0xff]
    %v61 = vld [vmem:[%s0 + $0x88] sm:$0xff]
    %v62 = vld [vmem:[%s0 + $0x90] sm:$0xff]
    %v63 = vld [vmem:[%s0 + $0x98] sm:$0xff]
    %v64 = vld [vmem:[%s0 + $0xa0] sm:$0xff]
    %v65 = vld [vmem:[%s0 + $0xa8] sm:$0xff]
    %v66 = vld [vmem:[%s0 + $0xb0] sm:$0xff]
    %v67 = vld [vmem:[%s0 + $0xb8] sm:$0xff]
    %v68 = vld [vmem:[%s0 + $0xc0] sm:$0xff]
    %v69 = vld [vmem:[%s0 + $0xc8] sm:$0xff]
    %v70 = vld [vmem:[%s0 + $0xd0] sm:$0xff]
    %v71 = vld [vmem:[%s0 + $0xd8] sm:$0xff]
    %v72 = vld [vmem:[%s0 + $0xe0] sm:$0xff]
    %v73 = vld [vmem:[%s0 + $0xe8] sm:$0xff]
    %v74 = vld [vmem:[%s0 + $0xf0] sm:$0xff]
    %v75 = vld [vmem:[%s0 + $0xf8] sm:$0xff]
    %v76 = vld [vmem:[%s1] sm:$0xff]
    %v77 = vld [vmem:[%s1 + $0x8] sm:$0xff]
    %v78 = vld [vmem:[%s2] sm:$0xf]
    %v80 = vperm.slane %v78, 0
    %v81 = vperm.slane %v78, 1
    %v82 = vperm.slane %v78, 2
    %v83 = vperm.slane %v78, 3
    %90 = vst [vmem:[#allocation1] ss:$2 sm:$0xff] %v76
    %s91 = scalar_lea.vmem [#allocation1], 16
    %92 = vst [vmem:[%s91] ss:$2 sm:$0xff] %v77
    %v93 = vld.sshfl [vmem:[#allocation1] sm:$0xff pattern:$0x75316420]
    %v94 = vld.sshfl [vmem:[#allocation1 + $0x8] sm:$0xff pattern:$0x75316420]
    %v95 = vld.sshfl [vmem:[#allocation1 + $0x10] sm:$0xff pattern:$0x75316420]
    %v96 = vld.sshfl [vmem:[#allocation1 + $0x18] sm:$0xff pattern:$0x75316420]
    %vm97 = vcmask 31744
    %v99 = vsel %vm97, %v44, 0
    %v102 = vsel %vm97, %v45, 0
    %v105 = vsel %vm97, %v46, 0
    %v108 = vsel %vm97, %v47, 0
    %v111 = vsel %vm97, %v48, 0
    %v114 = vsel %vm97, %v49, 0
    %v117 = vsel %vm97, %v50, 0
    %v120 = vsel %vm97, %v51, 0
    %v123 = vsel %vm97, %v52, 0
    %v126 = vsel %vm97, %v53, 0
    %v129 = vsel %vm97, %v54, 0
    %v132 = vsel %vm97, %v55, 0
    %v135 = vsel %vm97, %v56, 0
    %v138 = vsel %vm97, %v57, 0
    %v141 = vsel %vm97, %v58, 0
    %v144 = vsel %vm97, %v59, 0
    %v147 = vsel %vm97, %v60, 0
    %v150 = vsel %vm97, %v61, 0
    %v153 = vsel %vm97, %v62, 0
    %v156 = vsel %vm97, %v63, 0
    %v159 = vsel %vm97, %v64, 0
    %v162 = vsel %vm97, %v65, 0
    %v165 = vsel %vm97, %v66, 0
    %v168 = vsel %vm97, %v67, 0
    %v171 = vsel %vm97, %v68, 0
    %v174 = vsel %vm97, %v69, 0
    %v177 = vsel %vm97, %v70, 0
    %v180 = vsel %vm97, %v71, 0
    %v183 = vsel %vm97, %v72, 0
    %v186 = vsel %vm97, %v73, 0
    %v189 = vsel %vm97, %v74, 0
    %v192 = vsel %vm97, %v75, 0
    %vm194 = vcmask 1043456
    %v195 = vsel %vm194, %v93, 0
    %v197 = vsel %vm194, %v94, 0
    %v199 = vsel %vm194, %v95, 0
    %v201 = vsel %vm194, %v96, 0
    %203 = vmatpush.msra.mxu0 0.0
    %204 = vmatpush.msra.mxu0 0.0
    %205 = vmatpush.msra.mxu0 0.0
    %206 = vmatpush.msra.mxu0 0.0
    %207 = vmatpush.msra.mxu0 0.0
    %208 = vmatpush.msra.mxu0 0.0
    %209 = vmatpush.msra.mxu0 0.0
    %210 = vmatpush.msra.mxu0 0.0
    %211 = vmatpush.msra.mxu0 0.0
    %212 = vmatpush.msra.mxu0 0.0
    %213 = vmatpush.msra.mxu0 0.0
    %214 = vmatpush.msra.mxu0 0.0
    %215 = vmatpush.msra.mxu0 0.0
    %216 = vmatpush.msra.mxu0 0.0
    %217 = vmatpush.msra.mxu0 0.0
    %218 = vmatpush.msra.mxu0 %v195
    %219 = vmatmul.f32.gmra.mxu0 %v99
    %v220 = vpop.f32.mrf.mxu0
    %v221 = vadd.f32 %v80, %v220
    %222 = vmatmul.f32.gmra.mxu0 %v102
    %v223 = vpop.f32.mrf.mxu0
    %v224 = vadd.f32 %v80, %v223
    %225 = vmatmul.f32.gmra.mxu0 %v105
    %v226 = vpop.f32.mrf.mxu0
    %v227 = vadd.f32 %v80, %v226
    %228 = vmatmul.f32.gmra.mxu0 %v108
    %v229 = vpop.f32.mrf.mxu0
    %v230 = vadd.f32 %v80, %v229
    %231 = vmatmul.f32.gmra.mxu0 %v111
    %v232 = vpop.f32.mrf.mxu0
    %v233 = vadd.f32 %v80, %v232
    %234 = vmatmul.f32.gmra.mxu0 %v114
    %v235 = vpop.f32.mrf.mxu0
    %v236 = vadd.f32 %v80, %v235
    %237 = vmatmul.f32.gmra.mxu0 %v117
    %v238 = vpop.f32.mrf.mxu0
    %v239 = vadd.f32 %v80, %v238
    %240 = vmatmul.f32.gmra.mxu0 %v120
    %v241 = vpop.f32.mrf.mxu0
    %v242 = vadd.f32 %v80, %v241
    %243 = vmatmul.f32.gmra.mxu0 %v123
    %v244 = vpop.f32.mrf.mxu0
    %v245 = vadd.f32 %v80, %v244
    %246 = vmatmul.f32.gmra.mxu0 %v126
    %v247 = vpop.f32.mrf.mxu0
    %v248 = vadd.f32 %v80, %v247
    %249 = vmatmul.f32.gmra.mxu0 %v129
    %v250 = vpop.f32.mrf.mxu0
    %v251 = vadd.f32 %v80, %v250
    %252 = vmatmul.f32.gmra.mxu0 %v132
    %v253 = vpop.f32.mrf.mxu0
    %v254 = vadd.f32 %v80, %v253
    %255 = vmatmul.f32.gmra.mxu0 %v135
    %v256 = vpop.f32.mrf.mxu0
    %v257 = vadd.f32 %v80, %v256
    %258 = vmatmul.f32.gmra.mxu0 %v138
    %v259 = vpop.f32.mrf.mxu0
    %v260 = vadd.f32 %v80, %v259
    %261 = vmatmul.f32.gmra.mxu0 %v141
    %v262 = vpop.f32.mrf.mxu0
    %v263 = vadd.f32 %v80, %v262
    %264 = vmatmul.f32.gmra.mxu0 %v144
    %v265 = vpop.f32.mrf.mxu0
    %v266 = vadd.f32 %v80, %v265
    %267 = vmatmul.f32.gmra.mxu0 %v147
    %v268 = vpop.f32.mrf.mxu0
    %v269 = vadd.f32 %v80, %v268
    %270 = vmatmul.f32.gmra.mxu0 %v150
    %v271 = vpop.f32.mrf.mxu0
    %v272 = vadd.f32 %v80, %v271
    %273 = vmatmul.f32.gmra.mxu0 %v153
    %v274 = vpop.f32.mrf.mxu0
    %v275 = vadd.f32 %v80, %v274
    %276 = vmatmul.f32.gmra.mxu0 %v156
    %v277 = vpop.f32.mrf.mxu0
    %v278 = vadd.f32 %v80, %v277
    %279 = vmatmul.f32.gmra.mxu0 %v159
    %v280 = vpop.f32.mrf.mxu0
    %v281 = vadd.f32 %v80, %v280
    %282 = vmatmul.f32.gmra.mxu0 %v162
    %v283 = vpop.f32.mrf.mxu0
    %v284 = vadd.f32 %v80, %v283
    %285 = vmatmul.f32.gmra.mxu0 %v165
    %v286 = vpop.f32.mrf.mxu0
    %v287 = vadd.f32 %v80, %v286
    %288 = vmatmul.f32.gmra.mxu0 %v168
    %v289 = vpop.f32.mrf.mxu0
    %v290 = vadd.f32 %v80, %v289
    %291 = vmatmul.f32.gmra.mxu0 %v171
    %v292 = vpop.f32.mrf.mxu0
    %v293 = vadd.f32 %v80, %v292
    %294 = vmatmul.f32.gmra.mxu0 %v174
    %v295 = vpop.f32.mrf.mxu0
    %v296 = vadd.f32 %v80, %v295
    %297 = vmatmul.f32.gmra.mxu0 %v177
    %v298 = vpop.f32.mrf.mxu0
    %v299 = vadd.f32 %v80, %v298
    %300 = vmatmul.f32.gmra.mxu0 %v180
    %v301 = vpop.f32.mrf.mxu0
    %v302 = vadd.f32 %v80, %v301
    %303 = vmatmul.f32.gmra.mxu0 %v183
    %v304 = vpop.f32.mrf.mxu0
    %v305 = vadd.f32 %v80, %v304
    %306 = vmatmul.f32.gmra.mxu0 %v186
    %v307 = vpop.f32.mrf.mxu0
    %v308 = vadd.f32 %v80, %v307
    %309 = vmatmul.f32.gmra.mxu0 %v189
    %v310 = vpop.f32.mrf.mxu0
    %v311 = vadd.f32 %v80, %v310
    %312 = vmatmul.f32.gmra.mxu0 %v192
    %v313 = vpop.f32.mrf.mxu0
    %v314 = vadd.f32 %v80, %v313
    %315 = vdwg.mxu0
    %316 = vmatpush.msra.mxu0 0.0
    %317 = vmatpush.msra.mxu0 0.0
    %318 = vmatpush.msra.mxu0 0.0
    %319 = vmatpush.msra.mxu0 0.0
    %320 = vmatpush.msra.mxu0 0.0
    %321 = vmatpush.msra.mxu0 0.0
    %322 = vmatpush.msra.mxu0 0.0
    %323 = vmatpush.msra.mxu0 0.0
    %324 = vmatpush.msra.mxu0 0.0
    %325 = vmatpush.msra.mxu0 0.0
    %326 = vmatpush.msra.mxu0 0.0
    %327 = vmatpush.msra.mxu0 0.0
    %328 = vmatpush.msra.mxu0 0.0
    %329 = vmatpush.msra.mxu0 0.0
    %330 = vmatpush.msra.mxu0 0.0
    %331 = vmatpush.msra.mxu0 %v197
    %332 = vmatmul.f32.gmra.mxu0 %v99
    %v333 = vpop.f32.mrf.mxu0
    %v334 = vadd.f32 %v81, %v333
    %335 = vmatmul.f32.gmra.mxu0 %v102
    %v336 = vpop.f32.mrf.mxu0
    %v337 = vadd.f32 %v81, %v336
    %338 = vmatmul.f32.gmra.mxu0 %v105
    %v339 = vpop.f32.mrf.mxu0
    %v340 = vadd.f32 %v81, %v339
    %341 = vmatmul.f32.gmra.mxu0 %v108
    %v342 = vpop.f32.mrf.mxu0
    %v343 = vadd.f32 %v81, %v342
    %344 = vmatmul.f32.gmra.mxu0 %v111
    %v345 = vpop.f32.mrf.mxu0
    %v346 = vadd.f32 %v81, %v345
    %347 = vmatmul.f32.gmra.mxu0 %v114
    %v348 = vpop.f32.mrf.mxu0
    %v349 = vadd.f32 %v81, %v348
    %350 = vmatmul.f32.gmra.mxu0 %v117
    %v351 = vpop.f32.mrf.mxu0
    %v352 = vadd.f32 %v81, %v351
    %353 = vmatmul.f32.gmra.mxu0 %v120
    %v354 = vpop.f32.mrf.mxu0
    %v355 = vadd.f32 %v81, %v354
    %356 = vmatmul.f32.gmra.mxu0 %v123
    %v357 = vpop.f32.mrf.mxu0
    %v358 = vadd.f32 %v81, %v357
    %359 = vmatmul.f32.gmra.mxu0 %v126
    %v360 = vpop.f32.mrf.mxu0
    %v361 = vadd.f32 %v81, %v360
    %362 = vmatmul.f32.gmra.mxu0 %v129
    %v363 = vpop.f32.mrf.mxu0
    %v364 = vadd.f32 %v81, %v363
    %365 = vmatmul.f32.gmra.mxu0 %v132
    %v366 = vpop.f32.mrf.mxu0
    %v367 = vadd.f32 %v81, %v366
    %368 = vmatmul.f32.gmra.mxu0 %v135
    %v369 = vpop.f32.mrf.mxu0
    %v370 = vadd.f32 %v81, %v369
    %371 = vmatmul.f32.gmra.mxu0 %v138
    %v372 = vpop.f32.mrf.mxu0
    %v373 = vadd.f32 %v81, %v372
    %374 = vmatmul.f32.gmra.mxu0 %v141
    %v375 = vpop.f32.mrf.mxu0
    %v376 = vadd.f32 %v81, %v375
    %377 = vmatmul.f32.gmra.mxu0 %v144
    %v378 = vpop.f32.mrf.mxu0
    %v379 = vadd.f32 %v81, %v378
    %380 = vmatmul.f32.gmra.mxu0 %v147
    %v381 = vpop.f32.mrf.mxu0
    %v382 = vadd.f32 %v81, %v381
    %383 = vmatmul.f32.gmra.mxu0 %v150
    %v384 = vpop.f32.mrf.mxu0
    %v385 = vadd.f32 %v81, %v384
    %386 = vmatmul.f32.gmra.mxu0 %v153
    %v387 = vpop.f32.mrf.mxu0
    %v388 = vadd.f32 %v81, %v387
    %389 = vmatmul.f32.gmra.mxu0 %v156
    %v390 = vpop.f32.mrf.mxu0
    %v391 = vadd.f32 %v81, %v390
    %392 = vmatmul.f32.gmra.mxu0 %v159
    %v393 = vpop.f32.mrf.mxu0
    %v394 = vadd.f32 %v81, %v393
    %395 = vmatmul.f32.gmra.mxu0 %v162
    %v396 = vpop.f32.mrf.mxu0
    %v397 = vadd.f32 %v81, %v396
    %398 = vmatmul.f32.gmra.mxu0 %v165
    %v399 = vpop.f32.mrf.mxu0
    %v400 = vadd.f32 %v81, %v399
    %401 = vmatmul.f32.gmra.mxu0 %v168
    %v402 = vpop.f32.mrf.mxu0
    %v403 = vadd.f32 %v81, %v402
    %404 = vmatmul.f32.gmra.mxu0 %v171
    %v405 = vpop.f32.mrf.mxu0
    %v406 = vadd.f32 %v81, %v405
    %407 = vmatmul.f32.gmra.mxu0 %v174
    %v408 = vpop.f32.mrf.mxu0
    %v409 = vadd.f32 %v81, %v408
    %410 = vmatmul.f32.gmra.mxu0 %v177
    %v411 = vpop.f32.mrf.mxu0
    %v412 = vadd.f32 %v81, %v411
    %413 = vmatmul.f32.gmra.mxu0 %v180
    %v414 = vpop.f32.mrf.mxu0
    %v415 = vadd.f32 %v81, %v414
    %416 = vmatmul.f32.gmra.mxu0 %v183
    %v417 = vpop.f32.mrf.mxu0
    %v418 = vadd.f32 %v81, %v417
    %419 = vmatmul.f32.gmra.mxu0 %v186
    %v420 = vpop.f32.mrf.mxu0
    %v421 = vadd.f32 %v81, %v420
    %422 = vmatmul.f32.gmra.mxu0 %v189
    %v423 = vpop.f32.mrf.mxu0
    %v424 = vadd.f32 %v81, %v423
    %425 = vmatmul.f32.gmra.mxu0 %v192
    %v426 = vpop.f32.mrf.mxu0
    %v427 = vadd.f32 %v81, %v426
    %428 = vdwg.mxu0
    %429 = vmatpush.msra.mxu0 0.0
    %430 = vmatpush.msra.mxu0 0.0
    %431 = vmatpush.msra.mxu0 0.0
    %432 = vmatpush.msra.mxu0 0.0
    %433 = vmatpush.msra.mxu0 0.0
    %434 = vmatpush.msra.mxu0 0.0
    %435 = vmatpush.msra.mxu0 0.0
    %436 = vmatpush.msra.mxu0 0.0
    %437 = vmatpush.msra.mxu0 0.0
    %438 = vmatpush.msra.mxu0 0.0
    %439 = vmatpush.msra.mxu0 0.0
    %440 = vmatpush.msra.mxu0 0.0
    %441 = vmatpush.msra.mxu0 0.0
    %442 = vmatpush.msra.mxu0 0.0
    %443 = vmatpush.msra.mxu0 0.0
    %444 = vmatpush.msra.mxu0 %v199
    %445 = vmatmul.f32.gmra.mxu0 %v99
    %v446 = vpop.f32.mrf.mxu0
    %v447 = vadd.f32 %v82, %v446
    %448 = vmatmul.f32.gmra.mxu0 %v102
    %v449 = vpop.f32.mrf.mxu0
    %v450 = vadd.f32 %v82, %v449
    %451 = vmatmul.f32.gmra.mxu0 %v105
    %v452 = vpop.f32.mrf.mxu0
    %v453 = vadd.f32 %v82, %v452
    %454 = vmatmul.f32.gmra.mxu0 %v108
    %v455 = vpop.f32.mrf.mxu0
    %v456 = vadd.f32 %v82, %v455
    %457 = vmatmul.f32.gmra.mxu0 %v111
    %v458 = vpop.f32.mrf.mxu0
    %v459 = vadd.f32 %v82, %v458
    %460 = vmatmul.f32.gmra.mxu0 %v114
    %v461 = vpop.f32.mrf.mxu0
    %v462 = vadd.f32 %v82, %v461
    %463 = vmatmul.f32.gmra.mxu0 %v117
    %v464 = vpop.f32.mrf.mxu0
    %v465 = vadd.f32 %v82, %v464
    %466 = vmatmul.f32.gmra.mxu0 %v120
    %v467 = vpop.f32.mrf.mxu0
    %v468 = vadd.f32 %v82, %v467
    %469 = vmatmul.f32.gmra.mxu0 %v123
    %v470 = vpop.f32.mrf.mxu0
    %v471 = vadd.f32 %v82, %v470
    %472 = vmatmul.f32.gmra.mxu0 %v126
    %v473 = vpop.f32.mrf.mxu0
    %v474 = vadd.f32 %v82, %v473
    %475 = vmatmul.f32.gmra.mxu0 %v129
    %v476 = vpop.f32.mrf.mxu0
    %v477 = vadd.f32 %v82, %v476
    %478 = vmatmul.f32.gmra.mxu0 %v132
    %v479 = vpop.f32.mrf.mxu0
    %v480 = vadd.f32 %v82, %v479
    %481 = vmatmul.f32.gmra.mxu0 %v135
    %v482 = vpop.f32.mrf.mxu0
    %v483 = vadd.f32 %v82, %v482
    %484 = vmatmul.f32.gmra.mxu0 %v138
    %v485 = vpop.f32.mrf.mxu0
    %v486 = vadd.f32 %v82, %v485
    %487 = vmatmul.f32.gmra.mxu0 %v141
    %v488 = vpop.f32.mrf.mxu0
    %v489 = vadd.f32 %v82, %v488
    %490 = vmatmul.f32.gmra.mxu0 %v144
    %v491 = vpop.f32.mrf.mxu0
    %v492 = vadd.f32 %v82, %v491
    %493 = vmatmul.f32.gmra.mxu0 %v147
    %v494 = vpop.f32.mrf.mxu0
    %v495 = vadd.f32 %v82, %v494
    %496 = vmatmul.f32.gmra.mxu0 %v150
    %v497 = vpop.f32.mrf.mxu0
    %v498 = vadd.f32 %v82, %v497
    %499 = vmatmul.f32.gmra.mxu0 %v153
    %v500 = vpop.f32.mrf.mxu0
    %v501 = vadd.f32 %v82, %v500
    %502 = vmatmul.f32.gmra.mxu0 %v156
    %v503 = vpop.f32.mrf.mxu0
    %v504 = vadd.f32 %v82, %v503
    %505 = vmatmul.f32.gmra.mxu0 %v159
    %v506 = vpop.f32.mrf.mxu0
    %v507 = vadd.f32 %v82, %v506
    %508 = vmatmul.f32.gmra.mxu0 %v162
    %v509 = vpop.f32.mrf.mxu0
    %v510 = vadd.f32 %v82, %v509
    %511 = vmatmul.f32.gmra.mxu0 %v165
    %v512 = vpop.f32.mrf.mxu0
    %v513 = vadd.f32 %v82, %v512
    %514 = vmatmul.f32.gmra.mxu0 %v168
    %v515 = vpop.f32.mrf.mxu0
    %v516 = vadd.f32 %v82, %v515
    %517 = vmatmul.f32.gmra.mxu0 %v171
    %v518 = vpop.f32.mrf.mxu0
    %v519 = vadd.f32 %v82, %v518
    %520 = vmatmul.f32.gmra.mxu0 %v174
    %v521 = vpop.f32.mrf.mxu0
    %v522 = vadd.f32 %v82, %v521
    %523 = vmatmul.f32.gmra.mxu0 %v177
    %v524 = vpop.f32.mrf.mxu0
    %v525 = vadd.f32 %v82, %v524
    %526 = vmatmul.f32.gmra.mxu0 %v180
    %v527 = vpop.f32.mrf.mxu0
    %v528 = vadd.f32 %v82, %v527
    %529 = vmatmul.f32.gmra.mxu0 %v183
    %v530 = vpop.f32.mrf.mxu0
    %v531 = vadd.f32 %v82, %v530
    %532 = vmatmul.f32.gmra.mxu0 %v186
    %v533 = vpop.f32.mrf.mxu0
    %v534 = vadd.f32 %v82, %v533
    %535 = vmatmul.f32.gmra.mxu0 %v189
    %v536 = vpop.f32.mrf.mxu0
    %v537 = vadd.f32 %v82, %v536
    %538 = vmatmul.f32.gmra.mxu0 %v192
    %v539 = vpop.f32.mrf.mxu0
    %v540 = vadd.f32 %v82, %v539
    %541 = vdwg.mxu0
    %542 = vmatpush.msra.mxu0 0.0
    %543 = vmatpush.msra.mxu0 0.0
    %544 = vmatpush.msra.mxu0 0.0
    %545 = vmatpush.msra.mxu0 0.0
    %546 = vmatpush.msra.mxu0 0.0
    %547 = vmatpush.msra.mxu0 0.0
    %548 = vmatpush.msra.mxu0 0.0
    %549 = vmatpush.msra.mxu0 0.0
    %550 = vmatpush.msra.mxu0 0.0
    %551 = vmatpush.msra.mxu0 0.0
    %552 = vmatpush.msra.mxu0 0.0
    %553 = vmatpush.msra.mxu0 0.0
    %554 = vmatpush.msra.mxu0 0.0
    %555 = vmatpush.msra.mxu0 0.0
    %556 = vmatpush.msra.mxu0 0.0
    %557 = vmatpush.msra.mxu0 %v201
    %558 = vmatmul.f32.gmra.mxu0 %v99
    %v559 = vpop.f32.mrf.mxu0
    %v560 = vadd.f32 %v83, %v559
    %561 = vmatmul.f32.gmra.mxu0 %v102
    %v562 = vpop.f32.mrf.mxu0
    %v563 = vadd.f32 %v83, %v562
    %564 = vmatmul.f32.gmra.mxu0 %v105
    %v565 = vpop.f32.mrf.mxu0
    %v566 = vadd.f32 %v83, %v565
    %567 = vmatmul.f32.gmra.mxu0 %v108
    %v568 = vpop.f32.mrf.mxu0
    %v569 = vadd.f32 %v83, %v568
    %570 = vmatmul.f32.gmra.mxu0 %v111
    %v571 = vpop.f32.mrf.mxu0
    %v572 = vadd.f32 %v83, %v571
    %573 = vmatmul.f32.gmra.mxu0 %v114
    %v574 = vpop.f32.mrf.mxu0
    %v575 = vadd.f32 %v83, %v574
    %576 = vmatmul.f32.gmra.mxu0 %v117
    %v577 = vpop.f32.mrf.mxu0
    %v578 = vadd.f32 %v83, %v577
    %579 = vmatmul.f32.gmra.mxu0 %v120
    %v580 = vpop.f32.mrf.mxu0
    %v581 = vadd.f32 %v83, %v580
    %582 = vmatmul.f32.gmra.mxu0 %v123
    %v583 = vpop.f32.mrf.mxu0
    %v584 = vadd.f32 %v83, %v583
    %585 = vmatmul.f32.gmra.mxu0 %v126
    %v586 = vpop.f32.mrf.mxu0
    %v587 = vadd.f32 %v83, %v586
    %588 = vmatmul.f32.gmra.mxu0 %v129
    %v589 = vpop.f32.mrf.mxu0
    %v590 = vadd.f32 %v83, %v589
    %591 = vmatmul.f32.gmra.mxu0 %v132
    %v592 = vpop.f32.mrf.mxu0
    %v593 = vadd.f32 %v83, %v592
    %594 = vmatmul.f32.gmra.mxu0 %v135
    %v595 = vpop.f32.mrf.mxu0
    %v596 = vadd.f32 %v83, %v595
    %597 = vmatmul.f32.gmra.mxu0 %v138
    %v598 = vpop.f32.mrf.mxu0
    %v599 = vadd.f32 %v83, %v598
    %600 = vmatmul.f32.gmra.mxu0 %v141
    %v601 = vpop.f32.mrf.mxu0
    %v602 = vadd.f32 %v83, %v601
    %603 = vmatmul.f32.gmra.mxu0 %v144
    %v604 = vpop.f32.mrf.mxu0
    %v605 = vadd.f32 %v83, %v604
    %606 = vmatmul.f32.gmra.mxu0 %v147
    %v607 = vpop.f32.mrf.mxu0
    %v608 = vadd.f32 %v83, %v607
    %609 = vmatmul.f32.gmra.mxu0 %v150
    %v610 = vpop.f32.mrf.mxu0
    %v611 = vadd.f32 %v83, %v610
    %612 = vmatmul.f32.gmra.mxu0 %v153
    %v613 = vpop.f32.mrf.mxu0
    %v614 = vadd.f32 %v83, %v613
    %615 = vmatmul.f32.gmra.mxu0 %v156
    %v616 = vpop.f32.mrf.mxu0
    %v617 = vadd.f32 %v83, %v616
    %618 = vmatmul.f32.gmra.mxu0 %v159
    %v619 = vpop.f32.mrf.mxu0
    %v620 = vadd.f32 %v83, %v619
    %621 = vmatmul.f32.gmra.mxu0 %v162
    %v622 = vpop.f32.mrf.mxu0
    %v623 = vadd.f32 %v83, %v622
    %624 = vmatmul.f32.gmra.mxu0 %v165
    %v625 = vpop.f32.mrf.mxu0
    %v626 = vadd.f32 %v83, %v625
    %627 = vmatmul.f32.gmra.mxu0 %v168
    %v628 = vpop.f32.mrf.mxu0
    %v629 = vadd.f32 %v83, %v628
    %630 = vmatmul.f32.gmra.mxu0 %v171
    %v631 = vpop.f32.mrf.mxu0
    %v632 = vadd.f32 %v83, %v631
    %633 = vmatmul.f32.gmra.mxu0 %v174
    %v634 = vpop.f32.mrf.mxu0
    %v635 = vadd.f32 %v83, %v634
    %636 = vmatmul.f32.gmra.mxu0 %v177
    %v637 = vpop.f32.mrf.mxu0
    %v638 = vadd.f32 %v83, %v637
    %639 = vmatmul.f32.gmra.mxu0 %v180
    %v640 = vpop.f32.mrf.mxu0
    %v641 = vadd.f32 %v83, %v640
    %642 = vmatmul.f32.gmra.mxu0 %v183
    %v643 = vpop.f32.mrf.mxu0
    %v644 = vadd.f32 %v83, %v643
    %645 = vmatmul.f32.gmra.mxu0 %v186
    %v646 = vpop.f32.mrf.mxu0
    %v647 = vadd.f32 %v83, %v646
    %648 = vmatmul.f32.gmra.mxu0 %v189
    %v649 = vpop.f32.mrf.mxu0
    %v650 = vadd.f32 %v83, %v649
    %651 = vmatmul.f32.gmra.mxu0 %v192
    %v652 = vpop.f32.mrf.mxu0
    %v653 = vadd.f32 %v83, %v652
    %654 = vdwg.mxu0
    %v655 = vmax.f32 %v221, 0.0
    %v656 = vmax.f32 %v334, 0.0
    %v657 = vmax.f32 %v447, 0.0
    %v658 = vmax.f32 %v560, 0.0
    %v659 = vmax.f32 %v224, 0.0
    %v660 = vmax.f32 %v337, 0.0
    %v661 = vmax.f32 %v450, 0.0
    %v662 = vmax.f32 %v563, 0.0
    %v663 = vmax.f32 %v227, 0.0
    %v664 = vmax.f32 %v340, 0.0
    %v665 = vmax.f32 %v453, 0.0
    %v666 = vmax.f32 %v566, 0.0
    %v667 = vmax.f32 %v230, 0.0
    %v668 = vmax.f32 %v343, 0.0
    %v669 = vmax.f32 %v456, 0.0
    %v670 = vmax.f32 %v569, 0.0
    %v671 = vmax.f32 %v233, 0.0
    %v672 = vmax.f32 %v346, 0.0
    %v673 = vmax.f32 %v459, 0.0
    %v674 = vmax.f32 %v572, 0.0
    %v675 = vmax.f32 %v236, 0.0
    %v676 = vmax.f32 %v349, 0.0
    %v677 = vmax.f32 %v462, 0.0
    %v678 = vmax.f32 %v575, 0.0
    %v679 = vmax.f32 %v239, 0.0
    %v680 = vmax.f32 %v352, 0.0
    %v681 = vmax.f32 %v465, 0.0
    %v682 = vmax.f32 %v578, 0.0
    %v683 = vmax.f32 %v242, 0.0
    %v684 = vmax.f32 %v355, 0.0
    %v685 = vmax.f32 %v468, 0.0
    %v686 = vmax.f32 %v581, 0.0
    %v687 = vmax.f32 %v245, 0.0
    %v688 = vmax.f32 %v358, 0.0
    %v689 = vmax.f32 %v471, 0.0
    %v690 = vmax.f32 %v584, 0.0
    %v691 = vmax.f32 %v248, 0.0
    %v692 = vmax.f32 %v361, 0.0
    %v693 = vmax.f32 %v474, 0.0
    %v694 = vmax.f32 %v587, 0.0
    %v695 = vmax.f32 %v251, 0.0
    %v696 = vmax.f32 %v364, 0.0
    %v697 = vmax.f32 %v477, 0.0
    %v698 = vmax.f32 %v590, 0.0
    %v699 = vmax.f32 %v254, 0.0
    %v700 = vmax.f32 %v367, 0.0
    %v701 = vmax.f32 %v480, 0.0
    %v702 = vmax.f32 %v593, 0.0
    %v703 = vmax.f32 %v257, 0.0
    %v704 = vmax.f32 %v370, 0.0
    %v705 = vmax.f32 %v483, 0.0
    %v706 = vmax.f32 %v596, 0.0
    %v707 = vmax.f32 %v260, 0.0
    %v708 = vmax.f32 %v373, 0.0
    %v709 = vmax.f32 %v486, 0.0
    %v710 = vmax.f32 %v599, 0.0
    %v711 = vmax.f32 %v263, 0.0
    %v712 = vmax.f32 %v376, 0.0
    %v713 = vmax.f32 %v489, 0.0
    %v714 = vmax.f32 %v602, 0.0
    %v715 = vmax.f32 %v266, 0.0
    %v716 = vmax.f32 %v379, 0.0
    %v717 = vmax.f32 %v492, 0.0
    %v718 = vmax.f32 %v605, 0.0
    %v719 = vmax.f32 %v269, 0.0
    %v720 = vmax.f32 %v382, 0.0
    %v721 = vmax.f32 %v495, 0.0
    %v722 = vmax.f32 %v608, 0.0
    %v723 = vmax.f32 %v272, 0.0
    %v724 = vmax.f32 %v385, 0.0
    %v725 = vmax.f32 %v498, 0.0
    %v726 = vmax.f32 %v611, 0.0
    %v727 = vmax.f32 %v275, 0.0
    %v728 = vmax.f32 %v388, 0.0
    %v729 = vmax.f32 %v501, 0.0
    %v730 = vmax.f32 %v614, 0.0
    %v731 = vmax.f32 %v278, 0.0
    %v732 = vmax.f32 %v391, 0.0
    %v733 = vmax.f32 %v504, 0.0
    %v734 = vmax.f32 %v617, 0.0
    %v735 = vmax.f32 %v281, 0.0
    %v736 = vmax.f32 %v394, 0.0
    %v737 = vmax.f32 %v507, 0.0
    %v738 = vmax.f32 %v620, 0.0
    %v739 = vmax.f32 %v284, 0.0
    %v740 = vmax.f32 %v397, 0.0
    %v741 = vmax.f32 %v510, 0.0
    %v742 = vmax.f32 %v623, 0.0
    %v743 = vmax.f32 %v287, 0.0
    %v744 = vmax.f32 %v400, 0.0
    %v745 = vmax.f32 %v513, 0.0
    %v746 = vmax.f32 %v626, 0.0
    %v747 = vmax.f32 %v290, 0.0
    %v748 = vmax.f32 %v403, 0.0
    %v749 = vmax.f32 %v516, 0.0
    %v750 = vmax.f32 %v629, 0.0
    %v751 = vmax.f32 %v293, 0.0
    %v752 = vmax.f32 %v406, 0.0
    %v753 = vmax.f32 %v519, 0.0
    %v754 = vmax.f32 %v632, 0.0
    %v755 = vmax.f32 %v296, 0.0
    %v756 = vmax.f32 %v409, 0.0
    %v757 = vmax.f32 %v522, 0.0
    %v758 = vmax.f32 %v635, 0.0
    %v759 = vmax.f32 %v299, 0.0
    %v760 = vmax.f32 %v412, 0.0
    %v761 = vmax.f32 %v525, 0.0
    %v762 = vmax.f32 %v638, 0.0
    %v763 = vmax.f32 %v302, 0.0
    %v764 = vmax.f32 %v415, 0.0
    %v765 = vmax.f32 %v528, 0.0
    %v766 = vmax.f32 %v641, 0.0
    %v767 = vmax.f32 %v305, 0.0
    %v768 = vmax.f32 %v418, 0.0
    %v769 = vmax.f32 %v531, 0.0
    %v770 = vmax.f32 %v644, 0.0
    %v771 = vmax.f32 %v308, 0.0
    %v772 = vmax.f32 %v421, 0.0
    %v773 = vmax.f32 %v534, 0.0
    %v774 = vmax.f32 %v647, 0.0
    %v775 = vmax.f32 %v311, 0.0
    %v776 = vmax.f32 %v424, 0.0
    %v777 = vmax.f32 %v537, 0.0
    %v778 = vmax.f32 %v650, 0.0
    %v779 = vmax.f32 %v314, 0.0
    %v780 = vmax.f32 %v427, 0.0
    %v781 = vmax.f32 %v540, 0.0
    %v782 = vmax.f32 %v653, 0.0
    %v783 = vpack.c.bf16 %v659, %v655
    %v784 = vpack.c.bf16 %v660, %v656
    %v785 = vpack.c.bf16 %v661, %v657
    %v786 = vpack.c.bf16 %v662, %v658
    %v787 = vpack.c.bf16 %v667, %v663
    %v788 = vpack.c.bf16 %v668, %v664
    %v789 = vpack.c.bf16 %v669, %v665
    %v790 = vpack.c.bf16 %v670, %v666
    %v791 = vpack.c.bf16 %v675, %v671
    %v792 = vpack.c.bf16 %v676, %v672
    %v793 = vpack.c.bf16 %v677, %v673
    %v794 = vpack.c.bf16 %v678, %v674
    %v795 = vpack.c.bf16 %v683, %v679
    %v796 = vpack.c.bf16 %v684, %v680
    %v797 = vpack.c.bf16 %v685, %v681
    %v798 = vpack.c.bf16 %v686, %v682
    %v799 = vpack.c.bf16 %v691, %v687
    %v800 = vpack.c.bf16 %v692, %v688
    %v801 = vpack.c.bf16 %v693, %v689
    %v802 = vpack.c.bf16 %v694, %v690
    %v803 = vpack.c.bf16 %v699, %v695
    %v804 = vpack.c.bf16 %v700, %v696
    %v805 = vpack.c.bf16 %v701, %v697
    %v806 = vpack.c.bf16 %v702, %v698
    %v807 = vpack.c.bf16 %v707, %v703
    %v808 = vpack.c.bf16 %v708, %v704
    %v809 = vpack.c.bf16 %v709, %v705
    %v810 = vpack.c.bf16 %v710, %v706
    %v811 = vpack.c.bf16 %v715, %v711
    %v812 = vpack.c.bf16 %v716, %v712
    %v813 = vpack.c.bf16 %v717, %v713
    %v814 = vpack.c.bf16 %v718, %v714
    %v815 = vpack.c.bf16 %v723, %v719
    %v816 = vpack.c.bf16 %v724, %v720
    %v817 = vpack.c.bf16 %v725, %v721
    %v818 = vpack.c.bf16 %v726, %v722
    %v819 = vpack.c.bf16 %v731, %v727
    %v820 = vpack.c.bf16 %v732, %v728
    %v821 = vpack.c.bf16 %v733, %v729
    %v822 = vpack.c.bf16 %v734, %v730
    %v823 = vpack.c.bf16 %v739, %v735
    %v824 = vpack.c.bf16 %v740, %v736
    %v825 = vpack.c.bf16 %v741, %v737
    %v826 = vpack.c.bf16 %v742, %v738
    %v827 = vpack.c.bf16 %v747, %v743
    %v828 = vpack.c.bf16 %v748, %v744
    %v829 = vpack.c.bf16 %v749, %v745
    %v830 = vpack.c.bf16 %v750, %v746
    %v831 = vpack.c.bf16 %v755, %v751
    %v832 = vpack.c.bf16 %v756, %v752
    %v833 = vpack.c.bf16 %v757, %v753
    %v834 = vpack.c.bf16 %v758, %v754
    %v835 = vpack.c.bf16 %v763, %v759
    %v836 = vpack.c.bf16 %v764, %v760
    %v837 = vpack.c.bf16 %v765, %v761
    %v838 = vpack.c.bf16 %v766, %v762
    %v839 = vpack.c.bf16 %v771, %v767
    %v840 = vpack.c.bf16 %v772, %v768
    %v841 = vpack.c.bf16 %v773, %v769
    %v842 = vpack.c.bf16 %v774, %v770
    %v843 = vpack.c.bf16 %v779, %v775
    %v844 = vpack.c.bf16 %v780, %v776
    %v845 = vpack.c.bf16 %v781, %v777
    %v846 = vpack.c.bf16 %v782, %v778
    %v847 = vld [vmem:[#allocation3] sm:$0xff]
    %v848 = vld [vmem:[#allocation3 + $0x8] sm:$0xff]
    %v849 = vld [vmem:[#allocation3 + $0x10] sm:$0xff]
    %v850 = vld [vmem:[#allocation3 + $0x18] sm:$0xff]
    %v851 = vld [vmem:[#allocation3 + $0x20] sm:$0xff]
    %v852 = vld [vmem:[#allocation3 + $0x28] sm:$0xff]
    %v853 = vld [vmem:[#allocation3 + $0x30] sm:$0xff]
    %v854 = vld [vmem:[#allocation3 + $0x38] sm:$0xff]
    %v855 = vld [vmem:[#allocation3 + $0x40] sm:$0xff]
    %v856 = vld [vmem:[#allocation3 + $0x48] sm:$0xff]
    %v857 = vld [vmem:[#allocation3 + $0x50] sm:$0xff]
    %v858 = vld [vmem:[#allocation3 + $0x58] sm:$0xff]
    %v859 = vld [vmem:[#allocation3 + $0x60] sm:$0xff]
    %v860 = vld [vmem:[#allocation3 + $0x68] sm:$0xff]
    %v861 = vld [vmem:[#allocation3 + $0x70] sm:$0xff]
    %v862 = vld [vmem:[#allocation3 + $0x78] sm:$0xff]
    %v863 = vld [vmem:[#allocation3 + $0x80] sm:$0xff]
    %v864 = vld [vmem:[#allocation3 + $0x88] sm:$0xff]
    %v865 = vld [vmem:[#allocation3 + $0x90] sm:$0xff]
    %v866 = vld [vmem:[#allocation3 + $0x98] sm:$0xff]
    %v867 = vld [vmem:[#allocation3 + $0xa0] sm:$0xff]
    %v868 = vld [vmem:[#allocation3 + $0xa8] sm:$0xff]
    %v869 = vld [vmem:[#allocation3 + $0xb0] sm:$0xff]
    %v870 = vld [vmem:[#allocation3 + $0xb8] sm:$0xff]
    %v871 = vld [vmem:[#allocation3 + $0xc0] sm:$0xff]
    %v872 = vld [vmem:[#allocation3 + $0xc8] sm:$0xff]
    %v873 = vld [vmem:[#allocation3 + $0xd0] sm:$0xff]
    %v874 = vld [vmem:[#allocation3 + $0xd8] sm:$0xff]
    %v875 = vld [vmem:[#allocation3 + $0xe0] sm:$0xff]
    %v876 = vld [vmem:[#allocation3 + $0xe8] sm:$0xff]
    %v877 = vld [vmem:[#allocation3 + $0xf0] sm:$0xff]
    %v878 = vld [vmem:[#allocation3 + $0xf8] sm:$0xff]
    %v879 = vld [vmem:[#allocation3 + $0x100] sm:$0xff]
    %v880 = vld [vmem:[#allocation3 + $0x108] sm:$0xff]
    %v881 = vld [vmem:[#allocation3 + $0x110] sm:$0xff]
    %v882 = vld [vmem:[#allocation3 + $0x118] sm:$0xff]
    %v883 = vld [vmem:[#allocation3 + $0x120] sm:$0xff]
    %v884 = vld [vmem:[#allocation3 + $0x128] sm:$0xff]
    %v885 = vld [vmem:[#allocation3 + $0x130] sm:$0xff]
    %v886 = vld [vmem:[#allocation3 + $0x138] sm:$0xff]
    %v887 = vld [vmem:[#allocation3 + $0x140] sm:$0xff]
    %v888 = vld [vmem:[#allocation3 + $0x148] sm:$0xff]
    %v889 = vld [vmem:[#allocation3 + $0x150] sm:$0xff]
    %v890 = vld [vmem:[#allocation3 + $0x158] sm:$0xff]
    %v891 = vld [vmem:[#allocation3 + $0x160] sm:$0xff]
    %v892 = vld [vmem:[#allocation3 + $0x168] sm:$0xff]
    %v893 = vld [vmem:[#allocation3 + $0x170] sm:$0xff]
    %v894 = vld [vmem:[#allocation3 + $0x178] sm:$0xff]
    %v895 = vld [vmem:[#allocation3 + $0x180] sm:$0xff]
    %v896 = vld [vmem:[#allocation3 + $0x188] sm:$0xff]
    %v897 = vld [vmem:[#allocation3 + $0x190] sm:$0xff]
    %v898 = vld [vmem:[#allocation3 + $0x198] sm:$0xff]
    %v899 = vld [vmem:[#allocation3 + $0x1a0] sm:$0xff]
    %v900 = vld [vmem:[#allocation3 + $0x1a8] sm:$0xff]
    %v901 = vld [vmem:[#allocation3 + $0x1b0] sm:$0xff]
    %v902 = vld [vmem:[#allocation3 + $0x1b8] sm:$0xff]
    %v903 = vld [vmem:[#allocation3 + $0x1c0] sm:$0xff]
    %v904 = vld [vmem:[#allocation3 + $0x1c8] sm:$0xff]
    %v905 = vld [vmem:[#allocation3 + $0x1d0] sm:$0xff]
    %v906 = vld [vmem:[#allocation3 + $0x1d8] sm:$0xff]
    %v907 = vld [vmem:[#allocation3 + $0x1e0] sm:$0xff]
    %v908 = vld [vmem:[#allocation3 + $0x1e8] sm:$0xff]
    %v909 = vld [vmem:[#allocation3 + $0x1f0] sm:$0xff]
    %v910 = vld [vmem:[#allocation3 + $0x1f8] sm:$0xff]
    %v911 = vld [vmem:[#allocation3 + $0x200] sm:$0xff]
    %v912 = vld [vmem:[#allocation3 + $0x208] sm:$0xff]
    %v913 = vld [vmem:[#allocation3 + $0x210] sm:$0xff]
    %v914 = vld [vmem:[#allocation3 + $0x218] sm:$0xff]
    %v915 = vld [vmem:[#allocation3 + $0x220] sm:$0xff]
    %v916 = vld [vmem:[#allocation3 + $0x228] sm:$0xff]
    %v917 = vld [vmem:[#allocation3 + $0x230] sm:$0xff]
    %v918 = vld [vmem:[#allocation3 + $0x238] sm:$0xff]
    %v919 = vld [vmem:[#allocation3 + $0x240] sm:$0xff]
    %v920 = vld [vmem:[#allocation3 + $0x248] sm:$0xff]
    %v921 = vld [vmem:[#allocation3 + $0x250] sm:$0xff]
    %v922 = vld [vmem:[#allocation3 + $0x258] sm:$0xff]
    %v923 = vld [vmem:[#allocation3 + $0x260] sm:$0xff]
    %v924 = vld [vmem:[#allocation3 + $0x268] sm:$0xff]
    %v925 = vld [vmem:[#allocation3 + $0x270] sm:$0xff]
    %v926 = vld [vmem:[#allocation3 + $0x278] sm:$0xff]
    %v927 = vld [vmem:[#allocation3 + $0x280] sm:$0xff]
    %v928 = vld [vmem:[#allocation3 + $0x288] sm:$0xff]
    %v929 = vld [vmem:[#allocation3 + $0x290] sm:$0xff]
    %v930 = vld [vmem:[#allocation3 + $0x298] sm:$0xff]
    %v931 = vld [vmem:[#allocation3 + $0x2a0] sm:$0xff]
    %v932 = vld [vmem:[#allocation3 + $0x2a8] sm:$0xff]
    %v933 = vld [vmem:[#allocation3 + $0x2b0] sm:$0xff]
    %v934 = vld [vmem:[#allocation3 + $0x2b8] sm:$0xff]
    %v935 = vld [vmem:[#allocation3 + $0x2c0] sm:$0xff]
    %v936 = vld [vmem:[#allocation3 + $0x2c8] sm:$0xff]
    %v937 = vld [vmem:[#allocation3 + $0x2d0] sm:$0xff]
    %v938 = vld [vmem:[#allocation3 + $0x2d8] sm:$0xff]
    %v939 = vld [vmem:[#allocation3 + $0x2e0] sm:$0xff]
    %v940 = vld [vmem:[#allocation3 + $0x2e8] sm:$0xff]
    %v941 = vld [vmem:[#allocation3 + $0x2f0] sm:$0xff]
    %v942 = vld [vmem:[#allocation3 + $0x2f8] sm:$0xff]
    %v943 = vld [vmem:[#allocation3 + $0x300] sm:$0xff]
    %v944 = vld [vmem:[#allocation3 + $0x308] sm:$0xff]
    %v945 = vld [vmem:[#allocation3 + $0x310] sm:$0xff]
    %v946 = vld [vmem:[#allocation3 + $0x318] sm:$0xff]
    %v947 = vld [vmem:[#allocation3 + $0x320] sm:$0xff]
    %v948 = vld [vmem:[#allocation3 + $0x328] sm:$0xff]
    %v949 = vld [vmem:[#allocation3 + $0x330] sm:$0xff]
    %v950 = vld [vmem:[#allocation3 + $0x338] sm:$0xff]
    %v951 = vld [vmem:[#allocation3 + $0x340] sm:$0xff]
    %v952 = vld [vmem:[#allocation3 + $0x348] sm:$0xff]
    %v953 = vld [vmem:[#allocation3 + $0x350] sm:$0xff]
    %v954 = vld [vmem:[#allocation3 + $0x358] sm:$0xff]
    %v955 = vld [vmem:[#allocation3 + $0x360] sm:$0xff]
    %v956 = vld [vmem:[#allocation3 + $0x368] sm:$0xff]
    %v957 = vld [vmem:[#allocation3 + $0x370] sm:$0xff]
    %v958 = vld [vmem:[#allocation3 + $0x378] sm:$0xff]
    %v959 = vld [vmem:[#allocation3 + $0x380] sm:$0xff]
    %v960 = vld [vmem:[#allocation3 + $0x388] sm:$0xff]
    %v961 = vld [vmem:[#allocation3 + $0x390] sm:$0xff]
    %v962 = vld [vmem:[#allocation3 + $0x398] sm:$0xff]
    %v963 = vld [vmem:[#allocation3 + $0x3a0] sm:$0xff]
    %v964 = vld [vmem:[#allocation3 + $0x3a8] sm:$0xff]
    %v965 = vld [vmem:[#allocation3 + $0x3b0] sm:$0xff]
    %v966 = vld [vmem:[#allocation3 + $0x3b8] sm:$0xff]
    %v967 = vld [vmem:[#allocation3 + $0x3c0] sm:$0xff]
    %v968 = vld [vmem:[#allocation3 + $0x3c8] sm:$0xff]
    %v969 = vld [vmem:[#allocation3 + $0x3d0] sm:$0xff]
    %v970 = vld [vmem:[#allocation3 + $0x3d8] sm:$0xff]
    %v971 = vld [vmem:[#allocation3 + $0x3e0] sm:$0xff]
    %v972 = vld [vmem:[#allocation3 + $0x3e8] sm:$0xff]
    %v973 = vld [vmem:[#allocation3 + $0x3f0] sm:$0xff]
    %v974 = vld [vmem:[#allocation3 + $0x3f8] sm:$0xff]
    %v975 = vld [vmem:[#allocation3 + $0x400] sm:$0xff]
    %v976 = vld [vmem:[#allocation3 + $0x408] sm:$0xff]
    %v977 = vld [vmem:[#allocation3 + $0x410] sm:$0xff]
    %v978 = vld [vmem:[#allocation3 + $0x418] sm:$0xff]
    %v979 = vld [vmem:[#allocation3 + $0x420] sm:$0xff]
    %v980 = vld [vmem:[#allocation3 + $0x428] sm:$0xff]
    %v981 = vld [vmem:[#allocation3 + $0x430] sm:$0xff]
    %v982 = vld [vmem:[#allocation3 + $0x438] sm:$0xff]
    %v983 = vld [vmem:[#allocation3 + $0x440] sm:$0xff]
    %v984 = vld [vmem:[#allocation3 + $0x448] sm:$0xff]
    %v985 = vld [vmem:[#allocation3 + $0x450] sm:$0xff]
    %v986 = vld [vmem:[#allocation3 + $0x458] sm:$0xff]
    %v987 = vld [vmem:[#allocation3 + $0x460] sm:$0xff]
    %v988 = vld [vmem:[#allocation3 + $0x468] sm:$0xff]
    %v989 = vld [vmem:[#allocation3 + $0x470] sm:$0xff]
    %v990 = vld [vmem:[#allocation3 + $0x478] sm:$0xff]
    %v991 = vld [vmem:[#allocation3 + $0x480] sm:$0xff]
    %v992 = vld [vmem:[#allocation3 + $0x488] sm:$0xff]
    %v993 = vld [vmem:[#allocation3 + $0x490] sm:$0xff]
    %v994 = vld [vmem:[#allocation3 + $0x498] sm:$0xff]
    %v995 = vld [vmem:[#allocation3 + $0x4a0] sm:$0xff]
    %v996 = vld [vmem:[#allocation3 + $0x4a8] sm:$0xff]
    %v997 = vld [vmem:[#allocation3 + $0x4b0] sm:$0xff]
    %v998 = vld [vmem:[#allocation3 + $0x4b8] sm:$0xff]
    %v999 = vld [vmem:[#allocation3 + $0x4c0] sm:$0xff]
    %v1000 = vld [vmem:[#allocation3 + $0x4c8] sm:$0xff]
    %v1001 = vld [vmem:[#allocation3 + $0x4d0] sm:$0xff]
    %v1002 = vld [vmem:[#allocation3 + $0x4d8] sm:$0xff]
    %v1003 = vld [vmem:[#allocation3 + $0x4e0] sm:$0xff]
    %v1004 = vld [vmem:[#allocation3 + $0x4e8] sm:$0xff]
    %v1005 = vld [vmem:[#allocation3 + $0x4f0] sm:$0xff]
    %v1006 = vld [vmem:[#allocation3 + $0x4f8] sm:$0xff]
    %v1007 = vld [vmem:[#allocation3 + $0x500] sm:$0xff]
    %v1008 = vld [vmem:[#allocation3 + $0x508] sm:$0xff]
    %v1009 = vld [vmem:[#allocation3 + $0x510] sm:$0xff]
    %v1010 = vld [vmem:[#allocation3 + $0x518] sm:$0xff]
    %v1011 = vld [vmem:[#allocation3 + $0x520] sm:$0xff]
    %v1012 = vld [vmem:[#allocation3 + $0x528] sm:$0xff]
    %v1013 = vld [vmem:[#allocation3 + $0x530] sm:$0xff]
    %v1014 = vld [vmem:[#allocation3 + $0x538] sm:$0xff]
    %v1015 = vld [vmem:[#allocation3 + $0x540] sm:$0xff]
    %v1016 = vld [vmem:[#allocation3 + $0x548] sm:$0xff]
    %v1017 = vld [vmem:[#allocation3 + $0x550] sm:$0xff]
    %v1018 = vld [vmem:[#allocation3 + $0x558] sm:$0xff]
    %v1019 = vld [vmem:[#allocation3 + $0x560] sm:$0xff]
    %v1020 = vld [vmem:[#allocation3 + $0x568] sm:$0xff]
    %v1021 = vld [vmem:[#allocation3 + $0x570] sm:$0xff]
    %v1022 = vld [vmem:[#allocation3 + $0x578] sm:$0xff]
    %v1023 = vld [vmem:[#allocation3 + $0x580] sm:$0xff]
    %v1024 = vld [vmem:[#allocation3 + $0x588] sm:$0xff]
    %v1025 = vld [vmem:[#allocation3 + $0x590] sm:$0xff]
    %v1026 = vld [vmem:[#allocation3 + $0x598] sm:$0xff]
    %v1027 = vld [vmem:[#allocation3 + $0x5a0] sm:$0xff]
    %v1028 = vld [vmem:[#allocation3 + $0x5a8] sm:$0xff]
    %v1029 = vld [vmem:[#allocation3 + $0x5b0] sm:$0xff]
    %v1030 = vld [vmem:[#allocation3 + $0x5b8] sm:$0xff]
    %v1031 = vld [vmem:[#allocation3 + $0x5c0] sm:$0xff]
    %v1032 = vld [vmem:[#allocation3 + $0x5c8] sm:$0xff]
    %v1033 = vld [vmem:[#allocation3 + $0x5d0] sm:$0xff]
    %v1034 = vld [vmem:[#allocation3 + $0x5d8] sm:$0xff]
    %v1035 = vld [vmem:[#allocation3 + $0x5e0] sm:$0xff]
    %v1036 = vld [vmem:[#allocation3 + $0x5e8] sm:$0xff]
    %v1037 = vld [vmem:[#allocation3 + $0x5f0] sm:$0xff]
    %v1038 = vld [vmem:[#allocation3 + $0x5f8] sm:$0xff]
    %v1039 = vld [vmem:[#allocation3 + $0x600] sm:$0xff]
    %v1040 = vld [vmem:[#allocation3 + $0x608] sm:$0xff]
    %v1041 = vld [vmem:[#allocation3 + $0x610] sm:$0xff]
    %v1042 = vld [vmem:[#allocation3 + $0x618] sm:$0xff]
    %v1043 = vld [vmem:[#allocation3 + $0x620] sm:$0xff]
    %v1044 = vld [vmem:[#allocation3 + $0x628] sm:$0xff]
    %v1045 = vld [vmem:[#allocation3 + $0x630] sm:$0xff]
    %v1046 = vld [vmem:[#allocation3 + $0x638] sm:$0xff]
    %v1047 = vld [vmem:[#allocation3 + $0x640] sm:$0xff]
    %v1048 = vld [vmem:[#allocation3 + $0x648] sm:$0xff]
    %v1049 = vld [vmem:[#allocation3 + $0x650] sm:$0xff]
    %v1050 = vld [vmem:[#allocation3 + $0x658] sm:$0xff]
    %v1051 = vld [vmem:[#allocation3 + $0x660] sm:$0xff]
    %v1052 = vld [vmem:[#allocation3 + $0x668] sm:$0xff]
    %v1053 = vld [vmem:[#allocation3 + $0x670] sm:$0xff]
    %v1054 = vld [vmem:[#allocation3 + $0x678] sm:$0xff]
    %v1055 = vld [vmem:[#allocation3 + $0x680] sm:$0xff]
    %v1056 = vld [vmem:[#allocation3 + $0x688] sm:$0xff]
    %v1057 = vld [vmem:[#allocation3 + $0x690] sm:$0xff]
    %v1058 = vld [vmem:[#allocation3 + $0x698] sm:$0xff]
    %v1059 = vld [vmem:[#allocation3 + $0x6a0] sm:$0xff]
    %v1060 = vld [vmem:[#allocation3 + $0x6a8] sm:$0xff]
    %v1061 = vld [vmem:[#allocation3 + $0x6b0] sm:$0xff]
    %v1062 = vld [vmem:[#allocation3 + $0x6b8] sm:$0xff]
    %v1063 = vld [vmem:[#allocation3 + $0x6c0] sm:$0xff]
    %v1064 = vld [vmem:[#allocation3 + $0x6c8] sm:$0xff]
    %v1065 = vld [vmem:[#allocation3 + $0x6d0] sm:$0xff]
    %v1066 = vld [vmem:[#allocation3 + $0x6d8] sm:$0xff]
    %v1067 = vld [vmem:[#allocation3 + $0x6e0] sm:$0xff]
    %v1068 = vld [vmem:[#allocation3 + $0x6e8] sm:$0xff]
    %v1069 = vld [vmem:[#allocation3 + $0x6f0] sm:$0xff]
    %v1070 = vld [vmem:[#allocation3 + $0x6f8] sm:$0xff]
    %v1071 = vld [vmem:[#allocation3 + $0x700] sm:$0xff]
    %v1072 = vld [vmem:[#allocation3 + $0x708] sm:$0xff]
    %v1073 = vld [vmem:[#allocation3 + $0x710] sm:$0xff]
    %v1074 = vld [vmem:[#allocation3 + $0x718] sm:$0xff]
    %v1075 = vld [vmem:[#allocation3 + $0x720] sm:$0xff]
    %v1076 = vld [vmem:[#allocation3 + $0x728] sm:$0xff]
    %v1077 = vld [vmem:[#allocation3 + $0x730] sm:$0xff]
    %v1078 = vld [vmem:[#allocation3 + $0x738] sm:$0xff]
    %v1079 = vld [vmem:[#allocation3 + $0x740] sm:$0xff]
    %v1080 = vld [vmem:[#allocation3 + $0x748] sm:$0xff]
    %v1081 = vld [vmem:[#allocation3 + $0x750] sm:$0xff]
    %v1082 = vld [vmem:[#allocation3 + $0x758] sm:$0xff]
    %v1083 = vld [vmem:[#allocation3 + $0x760] sm:$0xff]
    %v1084 = vld [vmem:[#allocation3 + $0x768] sm:$0xff]
    %v1085 = vld [vmem:[#allocation3 + $0x770] sm:$0xff]
    %v1086 = vld [vmem:[#allocation3 + $0x778] sm:$0xff]
    %v1087 = vld [vmem:[#allocation3 + $0x780] sm:$0xff]
    %v1088 = vld [vmem:[#allocation3 + $0x788] sm:$0xff]
    %v1089 = vld [vmem:[#allocation3 + $0x790] sm:$0xff]
    %v1090 = vld [vmem:[#allocation3 + $0x798] sm:$0xff]
    %v1091 = vld [vmem:[#allocation3 + $0x7a0] sm:$0xff]
    %v1092 = vld [vmem:[#allocation3 + $0x7a8] sm:$0xff]
    %v1093 = vld [vmem:[#allocation3 + $0x7b0] sm:$0xff]
    %v1094 = vld [vmem:[#allocation3 + $0x7b8] sm:$0xff]
    %v1095 = vld [vmem:[#allocation3 + $0x7c0] sm:$0xff]
    %v1096 = vld [vmem:[#allocation3 + $0x7c8] sm:$0xff]
    %v1097 = vld [vmem:[#allocation3 + $0x7d0] sm:$0xff]
    %v1098 = vld [vmem:[#allocation3 + $0x7d8] sm:$0xff]
    %v1099 = vld [vmem:[#allocation3 + $0x7e0] sm:$0xff]
    %v1100 = vld [vmem:[#allocation3 + $0x7e8] sm:$0xff]
    %v1101 = vld [vmem:[#allocation3 + $0x7f0] sm:$0xff]
    %v1102 = vld [vmem:[#allocation3 + $0x7f8] sm:$0xff]
    %v1103 = vld [vmem:[%s4] sm:$0xff]
    %v1105 = vperm.slane %v1103, 0
    %v1106 = vperm.slane %v1103, 1
    %v1107 = vperm.slane %v1103, 2
    %v1108 = vperm.slane %v1103, 3
    %v1109 = vperm.slane %v1103, 4
    %v1110 = vperm.slane %v1103, 5
    %v1111 = vperm.slane %v1103, 6
    %v1112 = vperm.slane %v1103, 7
    %v1377 = vunpack.c.l.b16 %v847
    %v1378 = vunpack.c.h.b16 %v847
    %v1379 = vunpack.c.l.b16 %v848
    %v1380 = vunpack.c.h.b16 %v848
    %v1381 = vunpack.c.l.b16 %v849
    %v1382 = vunpack.c.h.b16 %v849
    %v1383 = vunpack.c.l.b16 %v850
    %v1384 = vunpack.c.h.b16 %v850
    %v1385 = vunpack.c.l.b16 %v851
    %v1386 = vunpack.c.h.b16 %v851
    %v1387 = vunpack.c.l.b16 %v852
    %v1388 = vunpack.c.h.b16 %v852
    %v1389 = vunpack.c.l.b16 %v853
    %v1390 = vunpack.c.h.b16 %v853
    %v1391 = vunpack.c.l.b16 %v854
    %v1392 = vunpack.c.h.b16 %v854
    %v1393 = vunpack.c.l.b16 %v855
    %v1394 = vunpack.c.h.b16 %v855
    %v1395 = vunpack.c.l.b16 %v856
    %v1396 = vunpack.c.h.b16 %v856
    %v1397 = vunpack.c.l.b16 %v857
    %v1398 = vunpack.c.h.b16 %v857
    %v1399 = vunpack.c.l.b16 %v858
    %v1400 = vunpack.c.h.b16 %v858
    %v1401 = vunpack.c.l.b16 %v859
    %v1402 = vunpack.c.h.b16 %v859
    %v1403 = vunpack.c.l.b16 %v860
    %v1404 = vunpack.c.h.b16 %v860
    %v1405 = vunpack.c.l.b16 %v861
    %v1406 = vunpack.c.h.b16 %v861
    %v1407 = vunpack.c.l.b16 %v862
    %v1408 = vunpack.c.h.b16 %v862
    %v1409 = vunpack.c.l.b16 %v863
    %v1410 = vunpack.c.h.b16 %v863
    %v1411 = vunpack.c.l.b16 %v864
    %v1412 = vunpack.c.h.b16 %v864
    %v1413 = vunpack.c.l.b16 %v865
    %v1414 = vunpack.c.h.b16 %v865
    %v1415 = vunpack.c.l.b16 %v866
    %v1416 = vunpack.c.h.b16 %v866
    %v1417 = vunpack.c.l.b16 %v867
    %v1418 = vunpack.c.h.b16 %v867
    %v1419 = vunpack.c.l.b16 %v868
    %v1420 = vunpack.c.h.b16 %v868
    %v1421 = vunpack.c.l.b16 %v869
    %v1422 = vunpack.c.h.b16 %v869
    %v1423 = vunpack.c.l.b16 %v870
    %v1424 = vunpack.c.h.b16 %v870
    %v1425 = vunpack.c.l.b16 %v871
    %v1426 = vunpack.c.h.b16 %v871
    %v1427 = vunpack.c.l.b16 %v872
    %v1428 = vunpack.c.h.b16 %v872
    %v1429 = vunpack.c.l.b16 %v873
    %v1430 = vunpack.c.h.b16 %v873
    %v1431 = vunpack.c.l.b16 %v874
    %v1432 = vunpack.c.h.b16 %v874
    %v1433 = vunpack.c.l.b16 %v875
    %v1434 = vunpack.c.h.b16 %v875
    %v1435 = vunpack.c.l.b16 %v876
    %v1436 = vunpack.c.h.b16 %v876
    %v1437 = vunpack.c.l.b16 %v877
    %v1438 = vunpack.c.h.b16 %v877
    %v1439 = vunpack.c.l.b16 %v878
    %v1440 = vunpack.c.h.b16 %v878
    %v1441 = vunpack.c.l.b16 %v879
    %v1442 = vunpack.c.h.b16 %v879
    %v1443 = vunpack.c.l.b16 %v880
    %v1444 = vunpack.c.h.b16 %v880
    %v1445 = vunpack.c.l.b16 %v881
    %v1446 = vunpack.c.h.b16 %v881
    %v1447 = vunpack.c.l.b16 %v882
    %v1448 = vunpack.c.h.b16 %v882
    %v1449 = vunpack.c.l.b16 %v883
    %v1450 = vunpack.c.h.b16 %v883
    %v1451 = vunpack.c.l.b16 %v884
    %v1452 = vunpack.c.h.b16 %v884
    %v1453 = vunpack.c.l.b16 %v885
    %v1454 = vunpack.c.h.b16 %v885
    %v1455 = vunpack.c.l.b16 %v886
    %v1456 = vunpack.c.h.b16 %v886
    %v1457 = vunpack.c.l.b16 %v887
    %v1458 = vunpack.c.h.b16 %v887
    %v1459 = vunpack.c.l.b16 %v888
    %v1460 = vunpack.c.h.b16 %v888
    %v1461 = vunpack.c.l.b16 %v889
    %v1462 = vunpack.c.h.b16 %v889
    %v1463 = vunpack.c.l.b16 %v890
    %v1464 = vunpack.c.h.b16 %v890
    %v1465 = vunpack.c.l.b16 %v891
    %v1466 = vunpack.c.h.b16 %v891
    %v1467 = vunpack.c.l.b16 %v892
    %v1468 = vunpack.c.h.b16 %v892
    %v1469 = vunpack.c.l.b16 %v893
    %v1470 = vunpack.c.h.b16 %v893
    %v1471 = vunpack.c.l.b16 %v894
    %v1472 = vunpack.c.h.b16 %v894
    %v1473 = vunpack.c.l.b16 %v895
    %v1474 = vunpack.c.h.b16 %v895
    %v1475 = vunpack.c.l.b16 %v896
    %v1476 = vunpack.c.h.b16 %v896
    %v1477 = vunpack.c.l.b16 %v897
    %v1478 = vunpack.c.h.b16 %v897
    %v1479 = vunpack.c.l.b16 %v898
    %v1480 = vunpack.c.h.b16 %v898
    %v1481 = vunpack.c.l.b16 %v899
    %v1482 = vunpack.c.h.b16 %v899
    %v1483 = vunpack.c.l.b16 %v900
    %v1484 = vunpack.c.h.b16 %v900
    %v1485 = vunpack.c.l.b16 %v901
    %v1486 = vunpack.c.h.b16 %v901
    %v1487 = vunpack.c.l.b16 %v902
    %v1488 = vunpack.c.h.b16 %v902
    %v1489 = vunpack.c.l.b16 %v903
    %v1490 = vunpack.c.h.b16 %v903
    %v1491 = vunpack.c.l.b16 %v904
    %v1492 = vunpack.c.h.b16 %v904
    %v1493 = vunpack.c.l.b16 %v905
    %v1494 = vunpack.c.h.b16 %v905
    %v1495 = vunpack.c.l.b16 %v906
    %v1496 = vunpack.c.h.b16 %v906
    %v1497 = vunpack.c.l.b16 %v907
    %v1498 = vunpack.c.h.b16 %v907
    %v1499 = vunpack.c.l.b16 %v908
    %v1500 = vunpack.c.h.b16 %v908
    %v1501 = vunpack.c.l.b16 %v909
    %v1502 = vunpack.c.h.b16 %v909
    %v1503 = vunpack.c.l.b16 %v910
    %v1504 = vunpack.c.h.b16 %v910
    %v1505 = vunpack.c.l.b16 %v911
    %v1506 = vunpack.c.h.b16 %v911
    %v1507 = vunpack.c.l.b16 %v912
    %v1508 = vunpack.c.h.b16 %v912
    %v1509 = vunpack.c.l.b16 %v913
    %v1510 = vunpack.c.h.b16 %v913
    %v1511 = vunpack.c.l.b16 %v914
    %v1512 = vunpack.c.h.b16 %v914
    %v1513 = vunpack.c.l.b16 %v915
    %v1514 = vunpack.c.h.b16 %v915
    %v1515 = vunpack.c.l.b16 %v916
    %v1516 = vunpack.c.h.b16 %v916
    %v1517 = vunpack.c.l.b16 %v917
    %v1518 = vunpack.c.h.b16 %v917
    %v1519 = vunpack.c.l.b16 %v918
    %v1520 = vunpack.c.h.b16 %v918
    %v1521 = vunpack.c.l.b16 %v919
    %v1522 = vunpack.c.h.b16 %v919
    %v1523 = vunpack.c.l.b16 %v920
    %v1524 = vunpack.c.h.b16 %v920
    %v1525 = vunpack.c.l.b16 %v921
    %v1526 = vunpack.c.h.b16 %v921
    %v1527 = vunpack.c.l.b16 %v922
    %v1528 = vunpack.c.h.b16 %v922
    %v1529 = vunpack.c.l.b16 %v923
    %v1530 = vunpack.c.h.b16 %v923
    %v1531 = vunpack.c.l.b16 %v924
    %v1532 = vunpack.c.h.b16 %v924
    %v1533 = vunpack.c.l.b16 %v925
    %v1534 = vunpack.c.h.b16 %v925
    %v1535 = vunpack.c.l.b16 %v926
    %v1536 = vunpack.c.h.b16 %v926
    %v1537 = vunpack.c.l.b16 %v927
    %v1538 = vunpack.c.h.b16 %v927
    %v1539 = vunpack.c.l.b16 %v928
    %v1540 = vunpack.c.h.b16 %v928
    %v1541 = vunpack.c.l.b16 %v929
    %v1542 = vunpack.c.h.b16 %v929
    %v1543 = vunpack.c.l.b16 %v930
    %v1544 = vunpack.c.h.b16 %v930
    %v1545 = vunpack.c.l.b16 %v931
    %v1546 = vunpack.c.h.b16 %v931
    %v1547 = vunpack.c.l.b16 %v932
    %v1548 = vunpack.c.h.b16 %v932
    %v1549 = vunpack.c.l.b16 %v933
    %v1550 = vunpack.c.h.b16 %v933
    %v1551 = vunpack.c.l.b16 %v934
    %v1552 = vunpack.c.h.b16 %v934
    %v1553 = vunpack.c.l.b16 %v935
    %v1554 = vunpack.c.h.b16 %v935
    %v1555 = vunpack.c.l.b16 %v936
    %v1556 = vunpack.c.h.b16 %v936
    %v1557 = vunpack.c.l.b16 %v937
    %v1558 = vunpack.c.h.b16 %v937
    %v1559 = vunpack.c.l.b16 %v938
    %v1560 = vunpack.c.h.b16 %v938
    %v1561 = vunpack.c.l.b16 %v939
    %v1562 = vunpack.c.h.b16 %v939
    %v1563 = vunpack.c.l.b16 %v940
    %v1564 = vunpack.c.h.b16 %v940
    %v1565 = vunpack.c.l.b16 %v941
    %v1566 = vunpack.c.h.b16 %v941
    %v1567 = vunpack.c.l.b16 %v942
    %v1568 = vunpack.c.h.b16 %v942
    %v1569 = vunpack.c.l.b16 %v943
    %v1570 = vunpack.c.h.b16 %v943
    %v1571 = vunpack.c.l.b16 %v944
    %v1572 = vunpack.c.h.b16 %v944
    %v1573 = vunpack.c.l.b16 %v945
    %v1574 = vunpack.c.h.b16 %v945
    %v1575 = vunpack.c.l.b16 %v946
    %v1576 = vunpack.c.h.b16 %v946
    %v1577 = vunpack.c.l.b16 %v947
    %v1578 = vunpack.c.h.b16 %v947
    %v1579 = vunpack.c.l.b16 %v948
    %v1580 = vunpack.c.h.b16 %v948
    %v1581 = vunpack.c.l.b16 %v949
    %v1582 = vunpack.c.h.b16 %v949
    %v1583 = vunpack.c.l.b16 %v950
    %v1584 = vunpack.c.h.b16 %v950
    %v1585 = vunpack.c.l.b16 %v951
    %v1586 = vunpack.c.h.b16 %v951
    %v1587 = vunpack.c.l.b16 %v952
    %v1588 = vunpack.c.h.b16 %v952
    %v1589 = vunpack.c.l.b16 %v953
    %v1590 = vunpack.c.h.b16 %v953
    %v1591 = vunpack.c.l.b16 %v954
    %v1592 = vunpack.c.h.b16 %v954
    %v1593 = vunpack.c.l.b16 %v955
    %v1594 = vunpack.c.h.b16 %v955
    %v1595 = vunpack.c.l.b16 %v956
    %v1596 = vunpack.c.h.b16 %v956
    %v1597 = vunpack.c.l.b16 %v957
    %v1598 = vunpack.c.h.b16 %v957
    %v1599 = vunpack.c.l.b16 %v958
    %v1600 = vunpack.c.h.b16 %v958
    %v1601 = vunpack.c.l.b16 %v959
    %v1602 = vunpack.c.h.b16 %v959
    %v1603 = vunpack.c.l.b16 %v960
    %v1604 = vunpack.c.h.b16 %v960
    %v1605 = vunpack.c.l.b16 %v961
    %v1606 = vunpack.c.h.b16 %v961
    %v1607 = vunpack.c.l.b16 %v962
    %v1608 = vunpack.c.h.b16 %v962
    %v1609 = vunpack.c.l.b16 %v963
    %v1610 = vunpack.c.h.b16 %v963
    %v1611 = vunpack.c.l.b16 %v964
    %v1612 = vunpack.c.h.b16 %v964
    %v1613 = vunpack.c.l.b16 %v965
    %v1614 = vunpack.c.h.b16 %v965
    %v1615 = vunpack.c.l.b16 %v966
    %v1616 = vunpack.c.h.b16 %v966
    %v1617 = vunpack.c.l.b16 %v967
    %v1618 = vunpack.c.h.b16 %v967
    %v1619 = vunpack.c.l.b16 %v968
    %v1620 = vunpack.c.h.b16 %v968
    %v1621 = vunpack.c.l.b16 %v969
    %v1622 = vunpack.c.h.b16 %v969
    %v1623 = vunpack.c.l.b16 %v970
    %v1624 = vunpack.c.h.b16 %v970
    %v1625 = vunpack.c.l.b16 %v971
    %v1626 = vunpack.c.h.b16 %v971
    %v1627 = vunpack.c.l.b16 %v972
    %v1628 = vunpack.c.h.b16 %v972
    %v1629 = vunpack.c.l.b16 %v973
    %v1630 = vunpack.c.h.b16 %v973
    %v1631 = vunpack.c.l.b16 %v974
    %v1632 = vunpack.c.h.b16 %v974
    %v1633 = vunpack.c.l.b16 %v975
    %v1634 = vunpack.c.h.b16 %v975
    %v1635 = vunpack.c.l.b16 %v976
    %v1636 = vunpack.c.h.b16 %v976
    %v1637 = vunpack.c.l.b16 %v977
    %v1638 = vunpack.c.h.b16 %v977
    %v1639 = vunpack.c.l.b16 %v978
    %v1640 = vunpack.c.h.b16 %v978
    %v1641 = vunpack.c.l.b16 %v979
    %v1642 = vunpack.c.h.b16 %v979
    %v1643 = vunpack.c.l.b16 %v980
    %v1644 = vunpack.c.h.b16 %v980
    %v1645 = vunpack.c.l.b16 %v981
    %v1646 = vunpack.c.h.b16 %v981
    %v1647 = vunpack.c.l.b16 %v982
    %v1648 = vunpack.c.h.b16 %v982
    %v1649 = vunpack.c.l.b16 %v983
    %v1650 = vunpack.c.h.b16 %v983
    %v1651 = vunpack.c.l.b16 %v984
    %v1652 = vunpack.c.h.b16 %v984
    %v1653 = vunpack.c.l.b16 %v985
    %v1654 = vunpack.c.h.b16 %v985
    %v1655 = vunpack.c.l.b16 %v986
    %v1656 = vunpack.c.h.b16 %v986
    %v1657 = vunpack.c.l.b16 %v987
    %v1658 = vunpack.c.h.b16 %v987
    %v1659 = vunpack.c.l.b16 %v988
    %v1660 = vunpack.c.h.b16 %v988
    %v1661 = vunpack.c.l.b16 %v989
    %v1662 = vunpack.c.h.b16 %v989
    %v1663 = vunpack.c.l.b16 %v990
    %v1664 = vunpack.c.h.b16 %v990
    %v1665 = vunpack.c.l.b16 %v991
    %v1666 = vunpack.c.h.b16 %v991
    %v1667 = vunpack.c.l.b16 %v992
    %v1668 = vunpack.c.h.b16 %v992
    %v1669 = vunpack.c.l.b16 %v993
    %v1670 = vunpack.c.h.b16 %v993
    %v1671 = vunpack.c.l.b16 %v994
    %v1672 = vunpack.c.h.b16 %v994
    %v1673 = vunpack.c.l.b16 %v995
    %v1674 = vunpack.c.h.b16 %v995
    %v1675 = vunpack.c.l.b16 %v996
    %v1676 = vunpack.c.h.b16 %v996
    %v1677 = vunpack.c.l.b16 %v997
    %v1678 = vunpack.c.h.b16 %v997
    %v1679 = vunpack.c.l.b16 %v998
    %v1680 = vunpack.c.h.b16 %v998
    %v1681 = vunpack.c.l.b16 %v999
    %v1682 = vunpack.c.h.b16 %v999
    %v1683 = vunpack.c.l.b16 %v1000
    %v1684 = vunpack.c.h.b16 %v1000
    %v1685 = vunpack.c.l.b16 %v1001
    %v1686 = vunpack.c.h.b16 %v1001
    %v1687 = vunpack.c.l.b16 %v1002
    %v1688 = vunpack.c.h.b16 %v1002
    %v1689 = vunpack.c.l.b16 %v1003
    %v1690 = vunpack.c.h.b16 %v1003
    %v1691 = vunpack.c.l.b16 %v1004
    %v1692 = vunpack.c.h.b16 %v1004
    %v1693 = vunpack.c.l.b16 %v1005
    %v1694 = vunpack.c.h.b16 %v1005
    %v1695 = vunpack.c.l.b16 %v1006
    %v1696 = vunpack.c.h.b16 %v1006
    %v1697 = vunpack.c.l.b16 %v1007
    %v1698 = vunpack.c.h.b16 %v1007
    %v1699 = vunpack.c.l.b16 %v1008
    %v1700 = vunpack.c.h.b16 %v1008
    %v1701 = vunpack.c.l.b16 %v1009
    %v1702 = vunpack.c.h.b16 %v1009
    %v1703 = vunpack.c.l.b16 %v1010
    %v1704 = vunpack.c.h.b16 %v1010
    %v1705 = vunpack.c.l.b16 %v1011
    %v1706 = vunpack.c.h.b16 %v1011
    %v1707 = vunpack.c.l.b16 %v1012
    %v1708 = vunpack.c.h.b16 %v1012
    %v1709 = vunpack.c.l.b16 %v1013
    %v1710 = vunpack.c.h.b16 %v1013
    %v1711 = vunpack.c.l.b16 %v1014
    %v1712 = vunpack.c.h.b16 %v1014
    %v1713 = vunpack.c.l.b16 %v1015
    %v1714 = vunpack.c.h.b16 %v1015
    %v1715 = vunpack.c.l.b16 %v1016
    %v1716 = vunpack.c.h.b16 %v1016
    %v1717 = vunpack.c.l.b16 %v1017
    %v1718 = vunpack.c.h.b16 %v1017
    %v1719 = vunpack.c.l.b16 %v1018
    %v1720 = vunpack.c.h.b16 %v1018
    %v1721 = vunpack.c.l.b16 %v1019
    %v1722 = vunpack.c.h.b16 %v1019
    %v1723 = vunpack.c.l.b16 %v1020
    %v1724 = vunpack.c.h.b16 %v1020
    %v1725 = vunpack.c.l.b16 %v1021
    %v1726 = vunpack.c.h.b16 %v1021
    %v1727 = vunpack.c.l.b16 %v1022
    %v1728 = vunpack.c.h.b16 %v1022
    %v1729 = vunpack.c.l.b16 %v1023
    %v1730 = vunpack.c.h.b16 %v1023
    %v1731 = vunpack.c.l.b16 %v1024
    %v1732 = vunpack.c.h.b16 %v1024
    %v1733 = vunpack.c.l.b16 %v1025
    %v1734 = vunpack.c.h.b16 %v1025
    %v1735 = vunpack.c.l.b16 %v1026
    %v1736 = vunpack.c.h.b16 %v1026
    %v1737 = vunpack.c.l.b16 %v1027
    %v1738 = vunpack.c.h.b16 %v1027
    %v1739 = vunpack.c.l.b16 %v1028
    %v1740 = vunpack.c.h.b16 %v1028
    %v1741 = vunpack.c.l.b16 %v1029
    %v1742 = vunpack.c.h.b16 %v1029
    %v1743 = vunpack.c.l.b16 %v1030
    %v1744 = vunpack.c.h.b16 %v1030
    %v1745 = vunpack.c.l.b16 %v1031
    %v1746 = vunpack.c.h.b16 %v1031
    %v1747 = vunpack.c.l.b16 %v1032
    %v1748 = vunpack.c.h.b16 %v1032
    %v1749 = vunpack.c.l.b16 %v1033
    %v1750 = vunpack.c.h.b16 %v1033
    %v1751 = vunpack.c.l.b16 %v1034
    %v1752 = vunpack.c.h.b16 %v1034
    %v1753 = vunpack.c.l.b16 %v1035
    %v1754 = vunpack.c.h.b16 %v1035
    %v1755 = vunpack.c.l.b16 %v1036
    %v1756 = vunpack.c.h.b16 %v1036
    %v1757 = vunpack.c.l.b16 %v1037
    %v1758 = vunpack.c.h.b16 %v1037
    %v1759 = vunpack.c.l.b16 %v1038
    %v1760 = vunpack.c.h.b16 %v1038
    %v1761 = vunpack.c.l.b16 %v1039
    %v1762 = vunpack.c.h.b16 %v1039
    %v1763 = vunpack.c.l.b16 %v1040
    %v1764 = vunpack.c.h.b16 %v1040
    %v1765 = vunpack.c.l.b16 %v1041
    %v1766 = vunpack.c.h.b16 %v1041
    %v1767 = vunpack.c.l.b16 %v1042
    %v1768 = vunpack.c.h.b16 %v1042
    %v1769 = vunpack.c.l.b16 %v1043
    %v1770 = vunpack.c.h.b16 %v1043
    %v1771 = vunpack.c.l.b16 %v1044
    %v1772 = vunpack.c.h.b16 %v1044
    %v1773 = vunpack.c.l.b16 %v1045
    %v1774 = vunpack.c.h.b16 %v1045
    %v1775 = vunpack.c.l.b16 %v1046
    %v1776 = vunpack.c.h.b16 %v1046
    %v1777 = vunpack.c.l.b16 %v1047
    %v1778 = vunpack.c.h.b16 %v1047
    %v1779 = vunpack.c.l.b16 %v1048
    %v1780 = vunpack.c.h.b16 %v1048
    %v1781 = vunpack.c.l.b16 %v1049
    %v1782 = vunpack.c.h.b16 %v1049
    %v1783 = vunpack.c.l.b16 %v1050
    %v1784 = vunpack.c.h.b16 %v1050
    %v1785 = vunpack.c.l.b16 %v1051
    %v1786 = vunpack.c.h.b16 %v1051
    %v1787 = vunpack.c.l.b16 %v1052
    %v1788 = vunpack.c.h.b16 %v1052
    %v1789 = vunpack.c.l.b16 %v1053
    %v1790 = vunpack.c.h.b16 %v1053
    %v1791 = vunpack.c.l.b16 %v1054
    %v1792 = vunpack.c.h.b16 %v1054
    %v1793 = vunpack.c.l.b16 %v1055
    %v1794 = vunpack.c.h.b16 %v1055
    %v1795 = vunpack.c.l.b16 %v1056
    %v1796 = vunpack.c.h.b16 %v1056
    %v1797 = vunpack.c.l.b16 %v1057
    %v1798 = vunpack.c.h.b16 %v1057
    %v1799 = vunpack.c.l.b16 %v1058
    %v1800 = vunpack.c.h.b16 %v1058
    %v1801 = vunpack.c.l.b16 %v1059
    %v1802 = vunpack.c.h.b16 %v1059
    %v1803 = vunpack.c.l.b16 %v1060
    %v1804 = vunpack.c.h.b16 %v1060
    %v1805 = vunpack.c.l.b16 %v1061
    %v1806 = vunpack.c.h.b16 %v1061
    %v1807 = vunpack.c.l.b16 %v1062
    %v1808 = vunpack.c.h.b16 %v1062
    %v1809 = vunpack.c.l.b16 %v1063
    %v1810 = vunpack.c.h.b16 %v1063
    %v1811 = vunpack.c.l.b16 %v1064
    %v1812 = vunpack.c.h.b16 %v1064
    %v1813 = vunpack.c.l.b16 %v1065
    %v1814 = vunpack.c.h.b16 %v1065
    %v1815 = vunpack.c.l.b16 %v1066
    %v1816 = vunpack.c.h.b16 %v1066
    %v1817 = vunpack.c.l.b16 %v1067
    %v1818 = vunpack.c.h.b16 %v1067
    %v1819 = vunpack.c.l.b16 %v1068
    %v1820 = vunpack.c.h.b16 %v1068
    %v1821 = vunpack.c.l.b16 %v1069
    %v1822 = vunpack.c.h.b16 %v1069
    %v1823 = vunpack.c.l.b16 %v1070
    %v1824 = vunpack.c.h.b16 %v1070
    %v1825 = vunpack.c.l.b16 %v1071
    %v1826 = vunpack.c.h.b16 %v1071
    %v1827 = vunpack.c.l.b16 %v1072
    %v1828 = vunpack.c.h.b16 %v1072
    %v1829 = vunpack.c.l.b16 %v1073
    %v1830 = vunpack.c.h.b16 %v1073
    %v1831 = vunpack.c.l.b16 %v1074
    %v1832 = vunpack.c.h.b16 %v1074
    %v1833 = vunpack.c.l.b16 %v1075
    %v1834 = vunpack.c.h.b16 %v1075
    %v1835 = vunpack.c.l.b16 %v1076
    %v1836 = vunpack.c.h.b16 %v1076
    %v1837 = vunpack.c.l.b16 %v1077
    %v1838 = vunpack.c.h.b16 %v1077
    %v1839 = vunpack.c.l.b16 %v1078
    %v1840 = vunpack.c.h.b16 %v1078
    %v1841 = vunpack.c.l.b16 %v1079
    %v1842 = vunpack.c.h.b16 %v1079
    %v1843 = vunpack.c.l.b16 %v1080
    %v1844 = vunpack.c.h.b16 %v1080
    %v1845 = vunpack.c.l.b16 %v1081
    %v1846 = vunpack.c.h.b16 %v1081
    %v1847 = vunpack.c.l.b16 %v1082
    %v1848 = vunpack.c.h.b16 %v1082
    %v1849 = vunpack.c.l.b16 %v1083
    %v1850 = vunpack.c.h.b16 %v1083
    %v1851 = vunpack.c.l.b16 %v1084
    %v1852 = vunpack.c.h.b16 %v1084
    %v1853 = vunpack.c.l.b16 %v1085
    %v1854 = vunpack.c.h.b16 %v1085
    %v1855 = vunpack.c.l.b16 %v1086
    %v1856 = vunpack.c.h.b16 %v1086
    %v1857 = vunpack.c.l.b16 %v1087
    %v1858 = vunpack.c.h.b16 %v1087
    %v1859 = vunpack.c.l.b16 %v1088
    %v1860 = vunpack.c.h.b16 %v1088
    %v1861 = vunpack.c.l.b16 %v1089
    %v1862 = vunpack.c.h.b16 %v1089
    %v1863 = vunpack.c.l.b16 %v1090
    %v1864 = vunpack.c.h.b16 %v1090
    %v1865 = vunpack.c.l.b16 %v1091
    %v1866 = vunpack.c.h.b16 %v1091
    %v1867 = vunpack.c.l.b16 %v1092
    %v1868 = vunpack.c.h.b16 %v1092
    %v1869 = vunpack.c.l.b16 %v1093
    %v1870 = vunpack.c.h.b16 %v1093
    %v1871 = vunpack.c.l.b16 %v1094
    %v1872 = vunpack.c.h.b16 %v1094
    %v1873 = vunpack.c.l.b16 %v1095
    %v1874 = vunpack.c.h.b16 %v1095
    %v1875 = vunpack.c.l.b16 %v1096
    %v1876 = vunpack.c.h.b16 %v1096
    %v1877 = vunpack.c.l.b16 %v1097
    %v1878 = vunpack.c.h.b16 %v1097
    %v1879 = vunpack.c.l.b16 %v1098
    %v1880 = vunpack.c.h.b16 %v1098
    %v1881 = vunpack.c.l.b16 %v1099
    %v1882 = vunpack.c.h.b16 %v1099
    %v1883 = vunpack.c.l.b16 %v1100
    %v1884 = vunpack.c.h.b16 %v1100
    %v1885 = vunpack.c.l.b16 %v1101
    %v1886 = vunpack.c.h.b16 %v1101
    %v1887 = vunpack.c.l.b16 %v1102
    %v1888 = vunpack.c.h.b16 %v1102
    %v1889 = vpack.c.b16 %v1385, %v1377
    %v1890 = vpack.c.b16 %v1386, %v1378
    %v1891 = vpack.c.b16 %v1387, %v1379
    %v1892 = vpack.c.b16 %v1388, %v1380
    %v1893 = vpack.c.b16 %v1389, %v1381
    %v1894 = vpack.c.b16 %v1390, %v1382
    %v1895 = vpack.c.b16 %v1391, %v1383
    %v1896 = vpack.c.b16 %v1392, %v1384
    %v1897 = vpack.c.b16 %v1401, %v1393
    %v1898 = vpack.c.b16 %v1402, %v1394
    %v1899 = vpack.c.b16 %v1403, %v1395
    %v1900 = vpack.c.b16 %v1404, %v1396
    %v1901 = vpack.c.b16 %v1405, %v1397
    %v1902 = vpack.c.b16 %v1406, %v1398
    %v1903 = vpack.c.b16 %v1407, %v1399
    %v1904 = vpack.c.b16 %v1408, %v1400
    %v1905 = vpack.c.b16 %v1417, %v1409
    %v1906 = vpack.c.b16 %v1418, %v1410
    %v1907 = vpack.c.b16 %v1419, %v1411
    %v1908 = vpack.c.b16 %v1420, %v1412
    %v1909 = vpack.c.b16 %v1421, %v1413
    %v1910 = vpack.c.b16 %v1422, %v1414
    %v1911 = vpack.c.b16 %v1423, %v1415
    %v1912 = vpack.c.b16 %v1424, %v1416
    %v1913 = vpack.c.b16 %v1433, %v1425
    %v1914 = vpack.c.b16 %v1434, %v1426
    %v1915 = vpack.c.b16 %v1435, %v1427
    %v1916 = vpack.c.b16 %v1436, %v1428
    %v1917 = vpack.c.b16 %v1437, %v1429
    %v1918 = vpack.c.b16 %v1438, %v1430
    %v1919 = vpack.c.b16 %v1439, %v1431
    %v1920 = vpack.c.b16 %v1440, %v1432
    %v1921 = vpack.c.b16 %v1449, %v1441
    %v1922 = vpack.c.b16 %v1450, %v1442
    %v1923 = vpack.c.b16 %v1451, %v1443
    %v1924 = vpack.c.b16 %v1452, %v1444
    %v1925 = vpack.c.b16 %v1453, %v1445
    %v1926 = vpack.c.b16 %v1454, %v1446
    %v1927 = vpack.c.b16 %v1455, %v1447
    %v1928 = vpack.c.b16 %v1456, %v1448
    %v1929 = vpack.c.b16 %v1465, %v1457
    %v1930 = vpack.c.b16 %v1466, %v1458
    %v1931 = vpack.c.b16 %v1467, %v1459
    %v1932 = vpack.c.b16 %v1468, %v1460
    %v1933 = vpack.c.b16 %v1469, %v1461
    %v1934 = vpack.c.b16 %v1470, %v1462
    %v1935 = vpack.c.b16 %v1471, %v1463
    %v1936 = vpack.c.b16 %v1472, %v1464
    %v1937 = vpack.c.b16 %v1481, %v1473
    %v1938 = vpack.c.b16 %v1482, %v1474
    %v1939 = vpack.c.b16 %v1483, %v1475
    %v1940 = vpack.c.b16 %v1484, %v1476
    %v1941 = vpack.c.b16 %v1485, %v1477
    %v1942 = vpack.c.b16 %v1486, %v1478
    %v1943 = vpack.c.b16 %v1487, %v1479
    %v1944 = vpack.c.b16 %v1488, %v1480
    %v1945 = vpack.c.b16 %v1497, %v1489
    %v1946 = vpack.c.b16 %v1498, %v1490
    %v1947 = vpack.c.b16 %v1499, %v1491
    %v1948 = vpack.c.b16 %v1500, %v1492
    %v1949 = vpack.c.b16 %v1501, %v1493
    %v1950 = vpack.c.b16 %v1502, %v1494
    %v1951 = vpack.c.b16 %v1503, %v1495
    %v1952 = vpack.c.b16 %v1504, %v1496
    %v1953 = vpack.c.b16 %v1513, %v1505
    %v1954 = vpack.c.b16 %v1514, %v1506
    %v1955 = vpack.c.b16 %v1515, %v1507
    %v1956 = vpack.c.b16 %v1516, %v1508
    %v1957 = vpack.c.b16 %v1517, %v1509
    %v1958 = vpack.c.b16 %v1518, %v1510
    %v1959 = vpack.c.b16 %v1519, %v1511
    %v1960 = vpack.c.b16 %v1520, %v1512
    %v1961 = vpack.c.b16 %v1529, %v1521
    %v1962 = vpack.c.b16 %v1530, %v1522
    %v1963 = vpack.c.b16 %v1531, %v1523
    %v1964 = vpack.c.b16 %v1532, %v1524
    %v1965 = vpack.c.b16 %v1533, %v1525
    %v1966 = vpack.c.b16 %v1534, %v1526
    %v1967 = vpack.c.b16 %v1535, %v1527
    %v1968 = vpack.c.b16 %v1536, %v1528
    %v1969 = vpack.c.b16 %v1545, %v1537
    %v1970 = vpack.c.b16 %v1546, %v1538
    %v1971 = vpack.c.b16 %v1547, %v1539
    %v1972 = vpack.c.b16 %v1548, %v1540
    %v1973 = vpack.c.b16 %v1549, %v1541
    %v1974 = vpack.c.b16 %v1550, %v1542
    %v1975 = vpack.c.b16 %v1551, %v1543
    %v1976 = vpack.c.b16 %v1552, %v1544
    %v1977 = vpack.c.b16 %v1561, %v1553
    %v1978 = vpack.c.b16 %v1562, %v1554
    %v1979 = vpack.c.b16 %v1563, %v1555
    %v1980 = vpack.c.b16 %v1564, %v1556
    %v1981 = vpack.c.b16 %v1565, %v1557
    %v1982 = vpack.c.b16 %v1566, %v1558
    %v1983 = vpack.c.b16 %v1567, %v1559
    %v1984 = vpack.c.b16 %v1568, %v1560
    %v1985 = vpack.c.b16 %v1577, %v1569
    %v1986 = vpack.c.b16 %v1578, %v1570
    %v1987 = vpack.c.b16 %v1579, %v1571
    %v1988 = vpack.c.b16 %v1580, %v1572
    %v1989 = vpack.c.b16 %v1581, %v1573
    %v1990 = vpack.c.b16 %v1582, %v1574
    %v1991 = vpack.c.b16 %v1583, %v1575
    %v1992 = vpack.c.b16 %v1584, %v1576
    %v1993 = vpack.c.b16 %v1593, %v1585
    %v1994 = vpack.c.b16 %v1594, %v1586
    %v1995 = vpack.c.b16 %v1595, %v1587
    %v1996 = vpack.c.b16 %v1596, %v1588
    %v1997 = vpack.c.b16 %v1597, %v1589
    %v1998 = vpack.c.b16 %v1598, %v1590
    %v1999 = vpack.c.b16 %v1599, %v1591
    %v2000 = vpack.c.b16 %v1600, %v1592
    %v2001 = vpack.c.b16 %v1609, %v1601
    %v2002 = vpack.c.b16 %v1610, %v1602
    %v2003 = vpack.c.b16 %v1611, %v1603
    %v2004 = vpack.c.b16 %v1612, %v1604
    %v2005 = vpack.c.b16 %v1613, %v1605
    %v2006 = vpack.c.b16 %v1614, %v1606
    %v2007 = vpack.c.b16 %v1615, %v1607
    %v2008 = vpack.c.b16 %v1616, %v1608
    %v2009 = vpack.c.b16 %v1625, %v1617
    %v2010 = vpack.c.b16 %v1626, %v1618
    %v2011 = vpack.c.b16 %v1627, %v1619
    %v2012 = vpack.c.b16 %v1628, %v1620
    %v2013 = vpack.c.b16 %v1629, %v1621
    %v2014 = vpack.c.b16 %v1630, %v1622
    %v2015 = vpack.c.b16 %v1631, %v1623
    %v2016 = vpack.c.b16 %v1632, %v1624
    %v2017 = vpack.c.b16 %v1641, %v1633
    %v2018 = vpack.c.b16 %v1642, %v1634
    %v2019 = vpack.c.b16 %v1643, %v1635
    %v2020 = vpack.c.b16 %v1644, %v1636
    %v2021 = vpack.c.b16 %v1645, %v1637
    %v2022 = vpack.c.b16 %v1646, %v1638
    %v2023 = vpack.c.b16 %v1647, %v1639
    %v2024 = vpack.c.b16 %v1648, %v1640
    %v2025 = vpack.c.b16 %v1657, %v1649
    %v2026 = vpack.c.b16 %v1658, %v1650
    %v2027 = vpack.c.b16 %v1659, %v1651
    %v2028 = vpack.c.b16 %v1660, %v1652
    %v2029 = vpack.c.b16 %v1661, %v1653
    %v2030 = vpack.c.b16 %v1662, %v1654
    %v2031 = vpack.c.b16 %v1663, %v1655
    %v2032 = vpack.c.b16 %v1664, %v1656
    %v2033 = vpack.c.b16 %v1673, %v1665
    %v2034 = vpack.c.b16 %v1674, %v1666
    %v2035 = vpack.c.b16 %v1675, %v1667
    %v2036 = vpack.c.b16 %v1676, %v1668
    %v2037 = vpack.c.b16 %v1677, %v1669
    %v2038 = vpack.c.b16 %v1678, %v1670
    %v2039 = vpack.c.b16 %v1679, %v1671
    %v2040 = vpack.c.b16 %v1680, %v1672
    %v2041 = vpack.c.b16 %v1689, %v1681
    %v2042 = vpack.c.b16 %v1690, %v1682
    %v2043 = vpack.c.b16 %v1691, %v1683
    %v2044 = vpack.c.b16 %v1692, %v1684
    %v2045 = vpack.c.b16 %v1693, %v1685
    %v2046 = vpack.c.b16 %v1694, %v1686
    %v2047 = vpack.c.b16 %v1695, %v1687
    %v2048 = vpack.c.b16 %v1696, %v1688
    %v2049 = vpack.c.b16 %v1705, %v1697
    %v2050 = vpack.c.b16 %v1706, %v1698
    %v2051 = vpack.c.b16 %v1707, %v1699
    %v2052 = vpack.c.b16 %v1708, %v1700
    %v2053 = vpack.c.b16 %v1709, %v1701
    %v2054 = vpack.c.b16 %v1710, %v1702
    %v2055 = vpack.c.b16 %v1711, %v1703
    %v2056 = vpack.c.b16 %v1712, %v1704
    %v2057 = vpack.c.b16 %v1721, %v1713
    %v2058 = vpack.c.b16 %v1722, %v1714
    %v2059 = vpack.c.b16 %v1723, %v1715
    %v2060 = vpack.c.b16 %v1724, %v1716
    %v2061 = vpack.c.b16 %v1725, %v1717
    %v2062 = vpack.c.b16 %v1726, %v1718
    %v2063 = vpack.c.b16 %v1727, %v1719
    %v2064 = vpack.c.b16 %v1728, %v1720
    %v2065 = vpack.c.b16 %v1737, %v1729
    %v2066 = vpack.c.b16 %v1738, %v1730
    %v2067 = vpack.c.b16 %v1739, %v1731
    %v2068 = vpack.c.b16 %v1740, %v1732
    %v2069 = vpack.c.b16 %v1741, %v1733
    %v2070 = vpack.c.b16 %v1742, %v1734
    %v2071 = vpack.c.b16 %v1743, %v1735
    %v2072 = vpack.c.b16 %v1744, %v1736
    %v2073 = vpack.c.b16 %v1753, %v1745
    %v2074 = vpack.c.b16 %v1754, %v1746
    %v2075 = vpack.c.b16 %v1755, %v1747
    %v2076 = vpack.c.b16 %v1756, %v1748
    %v2077 = vpack.c.b16 %v1757, %v1749
    %v2078 = vpack.c.b16 %v1758, %v1750
    %v2079 = vpack.c.b16 %v1759, %v1751
    %v2080 = vpack.c.b16 %v1760, %v1752
    %v2081 = vpack.c.b16 %v1769, %v1761
    %v2082 = vpack.c.b16 %v1770, %v1762
    %v2083 = vpack.c.b16 %v1771, %v1763
    %v2084 = vpack.c.b16 %v1772, %v1764
    %v2085 = vpack.c.b16 %v1773, %v1765
    %v2086 = vpack.c.b16 %v1774, %v1766
    %v2087 = vpack.c.b16 %v1775, %v1767
    %v2088 = vpack.c.b16 %v1776, %v1768
    %v2089 = vpack.c.b16 %v1785, %v1777
    %v2090 = vpack.c.b16 %v1786, %v1778
    %v2091 = vpack.c.b16 %v1787, %v1779
    %v2092 = vpack.c.b16 %v1788, %v1780
    %v2093 = vpack.c.b16 %v1789, %v1781
    %v2094 = vpack.c.b16 %v1790, %v1782
    %v2095 = vpack.c.b16 %v1791, %v1783
    %v2096 = vpack.c.b16 %v1792, %v1784
    %v2097 = vpack.c.b16 %v1801, %v1793
    %v2098 = vpack.c.b16 %v1802, %v1794
    %v2099 = vpack.c.b16 %v1803, %v1795
    %v2100 = vpack.c.b16 %v1804, %v1796
    %v2101 = vpack.c.b16 %v1805, %v1797
    %v2102 = vpack.c.b16 %v1806, %v1798
    %v2103 = vpack.c.b16 %v1807, %v1799
    %v2104 = vpack.c.b16 %v1808, %v1800
    %v2105 = vpack.c.b16 %v1817, %v1809
    %v2106 = vpack.c.b16 %v1818, %v1810
    %v2107 = vpack.c.b16 %v1819, %v1811
    %v2108 = vpack.c.b16 %v1820, %v1812
    %v2109 = vpack.c.b16 %v1821, %v1813
    %v2110 = vpack.c.b16 %v1822, %v1814
    %v2111 = vpack.c.b16 %v1823, %v1815
    %v2112 = vpack.c.b16 %v1824, %v1816
    %v2113 = vpack.c.b16 %v1833, %v1825
    %v2114 = vpack.c.b16 %v1834, %v1826
    %v2115 = vpack.c.b16 %v1835, %v1827
    %v2116 = vpack.c.b16 %v1836, %v1828
    %v2117 = vpack.c.b16 %v1837, %v1829
    %v2118 = vpack.c.b16 %v1838, %v1830
    %v2119 = vpack.c.b16 %v1839, %v1831
    %v2120 = vpack.c.b16 %v1840, %v1832
    %v2121 = vpack.c.b16 %v1849, %v1841
    %v2122 = vpack.c.b16 %v1850, %v1842
    %v2123 = vpack.c.b16 %v1851, %v1843
    %v2124 = vpack.c.b16 %v1852, %v1844
    %v2125 = vpack.c.b16 %v1853, %v1845
    %v2126 = vpack.c.b16 %v1854, %v1846
    %v2127 = vpack.c.b16 %v1855, %v1847
    %v2128 = vpack.c.b16 %v1856, %v1848
    %v2129 = vpack.c.b16 %v1865, %v1857
    %v2130 = vpack.c.b16 %v1866, %v1858
    %v2131 = vpack.c.b16 %v1867, %v1859
    %v2132 = vpack.c.b16 %v1868, %v1860
    %v2133 = vpack.c.b16 %v1869, %v1861
    %v2134 = vpack.c.b16 %v1870, %v1862
    %v2135 = vpack.c.b16 %v1871, %v1863
    %v2136 = vpack.c.b16 %v1872, %v1864
    %v2137 = vpack.c.b16 %v1881, %v1873
    %v2138 = vpack.c.b16 %v1882, %v1874
    %v2139 = vpack.c.b16 %v1883, %v1875
    %v2140 = vpack.c.b16 %v1884, %v1876
    %v2141 = vpack.c.b16 %v1885, %v1877
    %v2142 = vpack.c.b16 %v1886, %v1878
    %v2143 = vpack.c.b16 %v1887, %v1879
    %v2144 = vpack.c.b16 %v1888, %v1880
    %2401 = vmatpush.bf16.msra.mxu0 %v1945
    %2402 = vmatpush.bf16.msra.mxu0 %v1937
    %2403 = vmatpush.bf16.msra.mxu0 %v1929
    %2404 = vmatpush.bf16.msra.mxu0 %v1921
    %2405 = vmatpush.bf16.msra.mxu0 %v1913
    %2406 = vmatpush.bf16.msra.mxu0 %v1905
    %2407 = vmatpush.bf16.msra.mxu0 %v1897
    %2408 = vmatpush.bf16.msra.mxu0 %v1889
    %2409 = vmatmul.bf16.gmra.mxu0 %v783
    %v2410 = vpop.f32.mrf.mxu0
    %v2411 = vadd.f32 %v1105, %v2410
    %v2412 = vpop.f32.mrf.mxu0
    %v2413 = vadd.f32 %v1105, %v2412
    %2414 = vmatmul.bf16.gmra.mxu0 %v787
    %v2415 = vpop.f32.mrf.mxu0
    %v2416 = vadd.f32 %v1105, %v2415
    %v2417 = vpop.f32.mrf.mxu0
    %v2418 = vadd.f32 %v1105, %v2417
    %2419 = vmatmul.bf16.gmra.mxu0 %v791
    %v2420 = vpop.f32.mrf.mxu0
    %v2421 = vadd.f32 %v1105, %v2420
    %v2422 = vpop.f32.mrf.mxu0
    %v2423 = vadd.f32 %v1105, %v2422
    %2424 = vmatmul.bf16.gmra.mxu0 %v795
    %v2425 = vpop.f32.mrf.mxu0
    %v2426 = vadd.f32 %v1105, %v2425
    %v2427 = vpop.f32.mrf.mxu0
    %v2428 = vadd.f32 %v1105, %v2427
    %2429 = vmatmul.bf16.gmra.mxu0 %v799
    %v2430 = vpop.f32.mrf.mxu0
    %v2431 = vadd.f32 %v1105, %v2430
    %v2432 = vpop.f32.mrf.mxu0
    %v2433 = vadd.f32 %v1105, %v2432
    %2434 = vmatmul.bf16.gmra.mxu0 %v803
    %v2435 = vpop.f32.mrf.mxu0
    %v2436 = vadd.f32 %v1105, %v2435
    %v2437 = vpop.f32.mrf.mxu0
    %v2438 = vadd.f32 %v1105, %v2437
    %2439 = vmatmul.bf16.gmra.mxu0 %v807
    %v2440 = vpop.f32.mrf.mxu0
    %v2441 = vadd.f32 %v1105, %v2440
    %v2442 = vpop.f32.mrf.mxu0
    %v2443 = vadd.f32 %v1105, %v2442
    %2444 = vmatmul.bf16.gmra.mxu0 %v811
    %v2445 = vpop.f32.mrf.mxu0
    %v2446 = vadd.f32 %v1105, %v2445
    %v2447 = vpop.f32.mrf.mxu0
    %v2448 = vadd.f32 %v1105, %v2447
    %2449 = vmatmul.bf16.gmra.mxu0 %v815
    %v2450 = vpop.f32.mrf.mxu0
    %v2451 = vadd.f32 %v1105, %v2450
    %v2452 = vpop.f32.mrf.mxu0
    %v2453 = vadd.f32 %v1105, %v2452
    %2454 = vmatmul.bf16.gmra.mxu0 %v819
    %v2455 = vpop.f32.mrf.mxu0
    %v2456 = vadd.f32 %v1105, %v2455
    %v2457 = vpop.f32.mrf.mxu0
    %v2458 = vadd.f32 %v1105, %v2457
    %2459 = vmatmul.bf16.gmra.mxu0 %v823
    %v2460 = vpop.f32.mrf.mxu0
    %v2461 = vadd.f32 %v1105, %v2460
    %v2462 = vpop.f32.mrf.mxu0
    %v2463 = vadd.f32 %v1105, %v2462
    %2464 = vmatmul.bf16.gmra.mxu0 %v827
    %v2465 = vpop.f32.mrf.mxu0
    %v2466 = vadd.f32 %v1105, %v2465
    %v2467 = vpop.f32.mrf.mxu0
    %v2468 = vadd.f32 %v1105, %v2467
    %2469 = vmatmul.bf16.gmra.mxu0 %v831
    %v2470 = vpop.f32.mrf.mxu0
    %v2471 = vadd.f32 %v1105, %v2470
    %v2472 = vpop.f32.mrf.mxu0
    %v2473 = vadd.f32 %v1105, %v2472
    %2474 = vmatmul.bf16.gmra.mxu0 %v835
    %v2475 = vpop.f32.mrf.mxu0
    %v2476 = vadd.f32 %v1105, %v2475
    %v2477 = vpop.f32.mrf.mxu0
    %v2478 = vadd.f32 %v1105, %v2477
    %2479 = vmatmul.bf16.gmra.mxu0 %v839
    %v2480 = vpop.f32.mrf.mxu0
    %v2481 = vadd.f32 %v1105, %v2480
    %v2482 = vpop.f32.mrf.mxu0
    %v2483 = vadd.f32 %v1105, %v2482
    %2484 = vmatmul.bf16.gmra.mxu0 %v843
    %v2485 = vpop.f32.mrf.mxu0
    %v2486 = vadd.f32 %v1105, %v2485
    %v2487 = vpop.f32.mrf.mxu0
    %v2488 = vadd.f32 %v1105, %v2487
    %2489 = vdwg.mxu0
    %2490 = vmatpush.bf16.msra.mxu0 %v2009
    %2491 = vmatpush.bf16.msra.mxu0 %v2001
    %2492 = vmatpush.bf16.msra.mxu0 %v1993
    %2493 = vmatpush.bf16.msra.mxu0 %v1985
    %2494 = vmatpush.bf16.msra.mxu0 %v1977
    %2495 = vmatpush.bf16.msra.mxu0 %v1969
    %2496 = vmatpush.bf16.msra.mxu0 %v1961
    %2497 = vmatpush.bf16.msra.mxu0 %v1953
    %2498 = vmatmul.bf16.gmra.mxu0 %v784
    %v2499 = vpop.f32.mrf.mxu0
    %v2500 = vadd.f32 %v2411, %v2499
    %v2501 = vpop.f32.mrf.mxu0
    %v2502 = vadd.f32 %v2413, %v2501
    %2503 = vmatmul.bf16.gmra.mxu0 %v788
    %v2504 = vpop.f32.mrf.mxu0
    %v2505 = vadd.f32 %v2416, %v2504
    %v2506 = vpop.f32.mrf.mxu0
    %v2507 = vadd.f32 %v2418, %v2506
    %2508 = vmatmul.bf16.gmra.mxu0 %v792
    %v2509 = vpop.f32.mrf.mxu0
    %v2510 = vadd.f32 %v2421, %v2509
    %v2511 = vpop.f32.mrf.mxu0
    %v2512 = vadd.f32 %v2423, %v2511
    %2513 = vmatmul.bf16.gmra.mxu0 %v796
    %v2514 = vpop.f32.mrf.mxu0
    %v2515 = vadd.f32 %v2426, %v2514
    %v2516 = vpop.f32.mrf.mxu0
    %v2517 = vadd.f32 %v2428, %v2516
    %2518 = vmatmul.bf16.gmra.mxu0 %v800
    %v2519 = vpop.f32.mrf.mxu0
    %v2520 = vadd.f32 %v2431, %v2519
    %v2521 = vpop.f32.mrf.mxu0
    %v2522 = vadd.f32 %v2433, %v2521
    %2523 = vmatmul.bf16.gmra.mxu0 %v804
    %v2524 = vpop.f32.mrf.mxu0
    %v2525 = vadd.f32 %v2436, %v2524
    %v2526 = vpop.f32.mrf.mxu0
    %v2527 = vadd.f32 %v2438, %v2526
    %2528 = vmatmul.bf16.gmra.mxu0 %v808
    %v2529 = vpop.f32.mrf.mxu0
    %v2530 = vadd.f32 %v2441, %v2529
    %v2531 = vpop.f32.mrf.mxu0
    %v2532 = vadd.f32 %v2443, %v2531
    %2533 = vmatmul.bf16.gmra.mxu0 %v812
    %v2534 = vpop.f32.mrf.mxu0
    %v2535 = vadd.f32 %v2446, %v2534
    %v2536 = vpop.f32.mrf.mxu0
    %v2537 = vadd.f32 %v2448, %v2536
    %2538 = vmatmul.bf16.gmra.mxu0 %v816
    %v2539 = vpop.f32.mrf.mxu0
    %v2540 = vadd.f32 %v2451, %v2539
    %v2541 = vpop.f32.mrf.mxu0
    %v2542 = vadd.f32 %v2453, %v2541
    %2543 = vmatmul.bf16.gmra.mxu0 %v820
    %v2544 = vpop.f32.mrf.mxu0
    %v2545 = vadd.f32 %v2456, %v2544
    %v2546 = vpop.f32.mrf.mxu0
    %v2547 = vadd.f32 %v2458, %v2546
    %2548 = vmatmul.bf16.gmra.mxu0 %v824
    %v2549 = vpop.f32.mrf.mxu0
    %v2550 = vadd.f32 %v2461, %v2549
    %v2551 = vpop.f32.mrf.mxu0
    %v2552 = vadd.f32 %v2463, %v2551
    %2553 = vmatmul.bf16.gmra.mxu0 %v828
    %v2554 = vpop.f32.mrf.mxu0
    %v2555 = vadd.f32 %v2466, %v2554
    %v2556 = vpop.f32.mrf.mxu0
    %v2557 = vadd.f32 %v2468, %v2556
    %2558 = vmatmul.bf16.gmra.mxu0 %v832
    %v2559 = vpop.f32.mrf.mxu0
    %v2560 = vadd.f32 %v2471, %v2559
    %v2561 = vpop.f32.mrf.mxu0
    %v2562 = vadd.f32 %v2473, %v2561
    %2563 = vmatmul.bf16.gmra.mxu0 %v836
    %v2564 = vpop.f32.mrf.mxu0
    %v2565 = vadd.f32 %v2476, %v2564
    %v2566 = vpop.f32.mrf.mxu0
    %v2567 = vadd.f32 %v2478, %v2566
    %2568 = vmatmul.bf16.gmra.mxu0 %v840
    %v2569 = vpop.f32.mrf.mxu0
    %v2570 = vadd.f32 %v2481, %v2569
    %v2571 = vpop.f32.mrf.mxu0
    %v2572 = vadd.f32 %v2483, %v2571
    %2573 = vmatmul.bf16.gmra.mxu0 %v844
    %v2574 = vpop.f32.mrf.mxu0
    %v2575 = vadd.f32 %v2486, %v2574
    %v2576 = vpop.f32.mrf.mxu0
    %v2577 = vadd.f32 %v2488, %v2576
    %2578 = vdwg.mxu0
    %2579 = vmatpush.bf16.msra.mxu0 %v2073
    %2580 = vmatpush.bf16.msra.mxu0 %v2065
    %2581 = vmatpush.bf16.msra.mxu0 %v2057
    %2582 = vmatpush.bf16.msra.mxu0 %v2049
    %2583 = vmatpush.bf16.msra.mxu0 %v2041
    %2584 = vmatpush.bf16.msra.mxu0 %v2033
    %2585 = vmatpush.bf16.msra.mxu0 %v2025
    %2586 = vmatpush.bf16.msra.mxu0 %v2017
    %2587 = vmatmul.bf16.gmra.mxu0 %v785
    %v2588 = vpop.f32.mrf.mxu0
    %v2589 = vadd.f32 %v2500, %v2588
    %v2590 = vpop.f32.mrf.mxu0
    %v2591 = vadd.f32 %v2502, %v2590
    %2592 = vmatmul.bf16.gmra.mxu0 %v789
    %v2593 = vpop.f32.mrf.mxu0
    %v2594 = vadd.f32 %v2505, %v2593
    %v2595 = vpop.f32.mrf.mxu0
    %v2596 = vadd.f32 %v2507, %v2595
    %2597 = vmatmul.bf16.gmra.mxu0 %v793
    %v2598 = vpop.f32.mrf.mxu0
    %v2599 = vadd.f32 %v2510, %v2598
    %v2600 = vpop.f32.mrf.mxu0
    %v2601 = vadd.f32 %v2512, %v2600
    %2602 = vmatmul.bf16.gmra.mxu0 %v797
    %v2603 = vpop.f32.mrf.mxu0
    %v2604 = vadd.f32 %v2515, %v2603
    %v2605 = vpop.f32.mrf.mxu0
    %v2606 = vadd.f32 %v2517, %v2605
    %2607 = vmatmul.bf16.gmra.mxu0 %v801
    %v2608 = vpop.f32.mrf.mxu0
    %v2609 = vadd.f32 %v2520, %v2608
    %v2610 = vpop.f32.mrf.mxu0
    %v2611 = vadd.f32 %v2522, %v2610
    %2612 = vmatmul.bf16.gmra.mxu0 %v805
    %v2613 = vpop.f32.mrf.mxu0
    %v2614 = vadd.f32 %v2525, %v2613
    %v2615 = vpop.f32.mrf.mxu0
    %v2616 = vadd.f32 %v2527, %v2615
    %2617 = vmatmul.bf16.gmra.mxu0 %v809
    %v2618 = vpop.f32.mrf.mxu0
    %v2619 = vadd.f32 %v2530, %v2618
    %v2620 = vpop.f32.mrf.mxu0
    %v2621 = vadd.f32 %v2532, %v2620
    %2622 = vmatmul.bf16.gmra.mxu0 %v813
    %v2623 = vpop.f32.mrf.mxu0
    %v2624 = vadd.f32 %v2535, %v2623
    %v2625 = vpop.f32.mrf.mxu0
    %v2626 = vadd.f32 %v2537, %v2625
    %2627 = vmatmul.bf16.gmra.mxu0 %v817
    %v2628 = vpop.f32.mrf.mxu0
    %v2629 = vadd.f32 %v2540, %v2628
    %v2630 = vpop.f32.mrf.mxu0
    %v2631 = vadd.f32 %v2542, %v2630
    %2632 = vmatmul.bf16.gmra.mxu0 %v821
    %v2633 = vpop.f32.mrf.mxu0
    %v2634 = vadd.f32 %v2545, %v2633
    %v2635 = vpop.f32.mrf.mxu0
    %v2636 = vadd.f32 %v2547, %v2635
    %2637 = vmatmul.bf16.gmra.mxu0 %v825
    %v2638 = vpop.f32.mrf.mxu0
    %v2639 = vadd.f32 %v2550, %v2638
    %v2640 = vpop.f32.mrf.mxu0
    %v2641 = vadd.f32 %v2552, %v2640
    %2642 = vmatmul.bf16.gmra.mxu0 %v829
    %v2643 = vpop.f32.mrf.mxu0
    %v2644 = vadd.f32 %v2555, %v2643
    %v2645 = vpop.f32.mrf.mxu0
    %v2646 = vadd.f32 %v2557, %v2645
    %2647 = vmatmul.bf16.gmra.mxu0 %v833
    %v2648 = vpop.f32.mrf.mxu0
    %v2649 = vadd.f32 %v2560, %v2648
    %v2650 = vpop.f32.mrf.mxu0
    %v2651 = vadd.f32 %v2562, %v2650
    %2652 = vmatmul.bf16.gmra.mxu0 %v837
    %v2653 = vpop.f32.mrf.mxu0
    %v2654 = vadd.f32 %v2565, %v2653
    %v2655 = vpop.f32.mrf.mxu0
    %v2656 = vadd.f32 %v2567, %v2655
    %2657 = vmatmul.bf16.gmra.mxu0 %v841
    %v2658 = vpop.f32.mrf.mxu0
    %v2659 = vadd.f32 %v2570, %v2658
    %v2660 = vpop.f32.mrf.mxu0
    %v2661 = vadd.f32 %v2572, %v2660
    %2662 = vmatmul.bf16.gmra.mxu0 %v845
    %v2663 = vpop.f32.mrf.mxu0
    %v2664 = vadd.f32 %v2575, %v2663
    %v2665 = vpop.f32.mrf.mxu0
    %v2666 = vadd.f32 %v2577, %v2665
    %2667 = vdwg.mxu0
    %2668 = vmatpush.bf16.msra.mxu0 %v2137
    %2669 = vmatpush.bf16.msra.mxu0 %v2129
    %2670 = vmatpush.bf16.msra.mxu0 %v2121
    %2671 = vmatpush.bf16.msra.mxu0 %v2113
    %2672 = vmatpush.bf16.msra.mxu0 %v2105
    %2673 = vmatpush.bf16.msra.mxu0 %v2097
    %2674 = vmatpush.bf16.msra.mxu0 %v2089
    %2675 = vmatpush.bf16.msra.mxu0 %v2081
    %2676 = vmatmul.bf16.gmra.mxu0 %v786
    %v2677 = vpop.f32.mrf.mxu0
    %v2678 = vadd.f32 %v2589, %v2677
    %v2679 = vpop.f32.mrf.mxu0
    %v2680 = vadd.f32 %v2591, %v2679
    %2681 = vmatmul.bf16.gmra.mxu0 %v790
    %v2682 = vpop.f32.mrf.mxu0
    %v2683 = vadd.f32 %v2594, %v2682
    %v2684 = vpop.f32.mrf.mxu0
    %v2685 = vadd.f32 %v2596, %v2684
    %2686 = vmatmul.bf16.gmra.mxu0 %v794
    %v2687 = vpop.f32.mrf.mxu0
    %v2688 = vadd.f32 %v2599, %v2687
    %v2689 = vpop.f32.mrf.mxu0
    %v2690 = vadd.f32 %v2601, %v2689
    %2691 = vmatmul.bf16.gmra.mxu0 %v798
    %v2692 = vpop.f32.mrf.mxu0
    %v2693 = vadd.f32 %v2604, %v2692
    %v2694 = vpop.f32.mrf.mxu0
    %v2695 = vadd.f32 %v2606, %v2694
    %2696 = vmatmul.bf16.gmra.mxu0 %v802
    %v2697 = vpop.f32.mrf.mxu0
    %v2698 = vadd.f32 %v2609, %v2697
    %v2699 = vpop.f32.mrf.mxu0
    %v2700 = vadd.f32 %v2611, %v2699
    %2701 = vmatmul.bf16.gmra.mxu0 %v806
    %v2702 = vpop.f32.mrf.mxu0
    %v2703 = vadd.f32 %v2614, %v2702
    %v2704 = vpop.f32.mrf.mxu0
    %v2705 = vadd.f32 %v2616, %v2704
    %2706 = vmatmul.bf16.gmra.mxu0 %v810
    %v2707 = vpop.f32.mrf.mxu0
    %v2708 = vadd.f32 %v2619, %v2707
    %v2709 = vpop.f32.mrf.mxu0
    %v2710 = vadd.f32 %v2621, %v2709
    %2711 = vmatmul.bf16.gmra.mxu0 %v814
    %v2712 = vpop.f32.mrf.mxu0
    %v2713 = vadd.f32 %v2624, %v2712
    %v2714 = vpop.f32.mrf.mxu0
    %v2715 = vadd.f32 %v2626, %v2714
    %2716 = vmatmul.bf16.gmra.mxu0 %v818
    %v2717 = vpop.f32.mrf.mxu0
    %v2718 = vadd.f32 %v2629, %v2717
    %v2719 = vpop.f32.mrf.mxu0
    %v2720 = vadd.f32 %v2631, %v2719
    %2721 = vmatmul.bf16.gmra.mxu0 %v822
    %v2722 = vpop.f32.mrf.mxu0
    %v2723 = vadd.f32 %v2634, %v2722
    %v2724 = vpop.f32.mrf.mxu0
    %v2725 = vadd.f32 %v2636, %v2724
    %2726 = vmatmul.bf16.gmra.mxu0 %v826
    %v2727 = vpop.f32.mrf.mxu0
    %v2728 = vadd.f32 %v2639, %v2727
    %v2729 = vpop.f32.mrf.mxu0
    %v2730 = vadd.f32 %v2641, %v2729
    %2731 = vmatmul.bf16.gmra.mxu0 %v830
    %v2732 = vpop.f32.mrf.mxu0
    %v2733 = vadd.f32 %v2644, %v2732
    %v2734 = vpop.f32.mrf.mxu0
    %v2735 = vadd.f32 %v2646, %v2734
    %2736 = vmatmul.bf16.gmra.mxu0 %v834
    %v2737 = vpop.f32.mrf.mxu0
    %v2738 = vadd.f32 %v2649, %v2737
    %v2739 = vpop.f32.mrf.mxu0
    %v2740 = vadd.f32 %v2651, %v2739
    %2741 = vmatmul.bf16.gmra.mxu0 %v838
    %v2742 = vpop.f32.mrf.mxu0
    %v2743 = vadd.f32 %v2654, %v2742
    %v2744 = vpop.f32.mrf.mxu0
    %v2745 = vadd.f32 %v2656, %v2744
    %2746 = vmatmul.bf16.gmra.mxu0 %v842
    %v2747 = vpop.f32.mrf.mxu0
    %v2748 = vadd.f32 %v2659, %v2747
    %v2749 = vpop.f32.mrf.mxu0
    %v2750 = vadd.f32 %v2661, %v2749
    %2751 = vmatmul.bf16.gmra.mxu0 %v846
    %v2752 = vpop.f32.mrf.mxu0
    %v2753 = vadd.f32 %v2664, %v2752
    %v2754 = vpop.f32.mrf.mxu0
    %v2755 = vadd.f32 %v2666, %v2754
    %2756 = vdwg.mxu0
    %2757 = vmatpush.bf16.msra.mxu0 %v1946
    %2758 = vmatpush.bf16.msra.mxu0 %v1938
    %2759 = vmatpush.bf16.msra.mxu0 %v1930
    %2760 = vmatpush.bf16.msra.mxu0 %v1922
    %2761 = vmatpush.bf16.msra.mxu0 %v1914
    %2762 = vmatpush.bf16.msra.mxu0 %v1906
    %2763 = vmatpush.bf16.msra.mxu0 %v1898
    %2764 = vmatpush.bf16.msra.mxu0 %v1890
    %2765 = vmatmul.bf16.gmra.mxu0 %v783
    %v2766 = vpop.f32.mrf.mxu0
    %v2767 = vadd.f32 %v1106, %v2766
    %v2768 = vpop.f32.mrf.mxu0
    %v2769 = vadd.f32 %v1106, %v2768
    %2770 = vmatmul.bf16.gmra.mxu0 %v787
    %v2771 = vpop.f32.mrf.mxu0
    %v2772 = vadd.f32 %v1106, %v2771
    %v2773 = vpop.f32.mrf.mxu0
    %v2774 = vadd.f32 %v1106, %v2773
    %2775 = vmatmul.bf16.gmra.mxu0 %v791
    %v2776 = vpop.f32.mrf.mxu0
    %v2777 = vadd.f32 %v1106, %v2776
    %v2778 = vpop.f32.mrf.mxu0
    %v2779 = vadd.f32 %v1106, %v2778
    %2780 = vmatmul.bf16.gmra.mxu0 %v795
    %v2781 = vpop.f32.mrf.mxu0
    %v2782 = vadd.f32 %v1106, %v2781
    %v2783 = vpop.f32.mrf.mxu0
    %v2784 = vadd.f32 %v1106, %v2783
    %2785 = vmatmul.bf16.gmra.mxu0 %v799
    %v2786 = vpop.f32.mrf.mxu0
    %v2787 = vadd.f32 %v1106, %v2786
    %v2788 = vpop.f32.mrf.mxu0
    %v2789 = vadd.f32 %v1106, %v2788
    %2790 = vmatmul.bf16.gmra.mxu0 %v803
    %v2791 = vpop.f32.mrf.mxu0
    %v2792 = vadd.f32 %v1106, %v2791
    %v2793 = vpop.f32.mrf.mxu0
    %v2794 = vadd.f32 %v1106, %v2793
    %2795 = vmatmul.bf16.gmra.mxu0 %v807
    %v2796 = vpop.f32.mrf.mxu0
    %v2797 = vadd.f32 %v1106, %v2796
    %v2798 = vpop.f32.mrf.mxu0
    %v2799 = vadd.f32 %v1106, %v2798
    %2800 = vmatmul.bf16.gmra.mxu0 %v811
    %v2801 = vpop.f32.mrf.mxu0
    %v2802 = vadd.f32 %v1106, %v2801
    %v2803 = vpop.f32.mrf.mxu0
    %v2804 = vadd.f32 %v1106, %v2803
    %2805 = vmatmul.bf16.gmra.mxu0 %v815
    %v2806 = vpop.f32.mrf.mxu0
    %v2807 = vadd.f32 %v1106, %v2806
    %v2808 = vpop.f32.mrf.mxu0
    %v2809 = vadd.f32 %v1106, %v2808
    %2810 = vmatmul.bf16.gmra.mxu0 %v819
    %v2811 = vpop.f32.mrf.mxu0
    %v2812 = vadd.f32 %v1106, %v2811
    %v2813 = vpop.f32.mrf.mxu0
    %v2814 = vadd.f32 %v1106, %v2813
    %2815 = vmatmul.bf16.gmra.mxu0 %v823
    %v2816 = vpop.f32.mrf.mxu0
    %v2817 = vadd.f32 %v1106, %v2816
    %v2818 = vpop.f32.mrf.mxu0
    %v2819 = vadd.f32 %v1106, %v2818
    %2820 = vmatmul.bf16.gmra.mxu0 %v827
    %v2821 = vpop.f32.mrf.mxu0
    %v2822 = vadd.f32 %v1106, %v2821
    %v2823 = vpop.f32.mrf.mxu0
    %v2824 = vadd.f32 %v1106, %v2823
    %2825 = vmatmul.bf16.gmra.mxu0 %v831
    %v2826 = vpop.f32.mrf.mxu0
    %v2827 = vadd.f32 %v1106, %v2826
    %v2828 = vpop.f32.mrf.mxu0
    %v2829 = vadd.f32 %v1106, %v2828
    %2830 = vmatmul.bf16.gmra.mxu0 %v835
    %v2831 = vpop.f32.mrf.mxu0
    %v2832 = vadd.f32 %v1106, %v2831
    %v2833 = vpop.f32.mrf.mxu0
    %v2834 = vadd.f32 %v1106, %v2833
    %2835 = vmatmul.bf16.gmra.mxu0 %v839
    %v2836 = vpop.f32.mrf.mxu0
    %v2837 = vadd.f32 %v1106, %v2836
    %v2838 = vpop.f32.mrf.mxu0
    %v2839 = vadd.f32 %v1106, %v2838
    %2840 = vmatmul.bf16.gmra.mxu0 %v843
    %v2841 = vpop.f32.mrf.mxu0
    %v2842 = vadd.f32 %v1106, %v2841
    %v2843 = vpop.f32.mrf.mxu0
    %v2844 = vadd.f32 %v1106, %v2843
    %2845 = vdwg.mxu0
    %2846 = vmatpush.bf16.msra.mxu0 %v2010
    %2847 = vmatpush.bf16.msra.mxu0 %v2002
    %2848 = vmatpush.bf16.msra.mxu0 %v1994
    %2849 = vmatpush.bf16.msra.mxu0 %v1986
    %2850 = vmatpush.bf16.msra.mxu0 %v1978
    %2851 = vmatpush.bf16.msra.mxu0 %v1970
    %2852 = vmatpush.bf16.msra.mxu0 %v1962
    %2853 = vmatpush.bf16.msra.mxu0 %v1954
    %2854 = vmatmul.bf16.gmra.mxu0 %v784
    %v2855 = vpop.f32.mrf.mxu0
    %v2856 = vadd.f32 %v2767, %v2855
    %v2857 = vpop.f32.mrf.mxu0
    %v2858 = vadd.f32 %v2769, %v2857
    %2859 = vmatmul.bf16.gmra.mxu0 %v788
    %v2860 = vpop.f32.mrf.mxu0
    %v2861 = vadd.f32 %v2772, %v2860
    %v2862 = vpop.f32.mrf.mxu0
    %v2863 = vadd.f32 %v2774, %v2862
    %2864 = vmatmul.bf16.gmra.mxu0 %v792
    %v2865 = vpop.f32.mrf.mxu0
    %v2866 = vadd.f32 %v2777, %v2865
    %v2867 = vpop.f32.mrf.mxu0
    %v2868 = vadd.f32 %v2779, %v2867
    %2869 = vmatmul.bf16.gmra.mxu0 %v796
    %v2870 = vpop.f32.mrf.mxu0
    %v2871 = vadd.f32 %v2782, %v2870
    %v2872 = vpop.f32.mrf.mxu0
    %v2873 = vadd.f32 %v2784, %v2872
    %2874 = vmatmul.bf16.gmra.mxu0 %v800
    %v2875 = vpop.f32.mrf.mxu0
    %v2876 = vadd.f32 %v2787, %v2875
    %v2877 = vpop.f32.mrf.mxu0
    %v2878 = vadd.f32 %v2789, %v2877
    %2879 = vmatmul.bf16.gmra.mxu0 %v804
    %v2880 = vpop.f32.mrf.mxu0
    %v2881 = vadd.f32 %v2792, %v2880
    %v2882 = vpop.f32.mrf.mxu0
    %v2883 = vadd.f32 %v2794, %v2882
    %2884 = vmatmul.bf16.gmra.mxu0 %v808
    %v2885 = vpop.f32.mrf.mxu0
    %v2886 = vadd.f32 %v2797, %v2885
    %v2887 = vpop.f32.mrf.mxu0
    %v2888 = vadd.f32 %v2799, %v2887
    %2889 = vmatmul.bf16.gmra.mxu0 %v812
    %v2890 = vpop.f32.mrf.mxu0
    %v2891 = vadd.f32 %v2802, %v2890
    %v2892 = vpop.f32.mrf.mxu0
    %v2893 = vadd.f32 %v2804, %v2892
    %2894 = vmatmul.bf16.gmra.mxu0 %v816
    %v2895 = vpop.f32.mrf.mxu0
    %v2896 = vadd.f32 %v2807, %v2895
    %v2897 = vpop.f32.mrf.mxu0
    %v2898 = vadd.f32 %v2809, %v2897
    %2899 = vmatmul.bf16.gmra.mxu0 %v820
    %v2900 = vpop.f32.mrf.mxu0
    %v2901 = vadd.f32 %v2812, %v2900
    %v2902 = vpop.f32.mrf.mxu0
    %v2903 = vadd.f32 %v2814, %v2902
    %2904 = vmatmul.bf16.gmra.mxu0 %v824
    %v2905 = vpop.f32.mrf.mxu0
    %v2906 = vadd.f32 %v2817, %v2905
    %v2907 = vpop.f32.mrf.mxu0
    %v2908 = vadd.f32 %v2819, %v2907
    %2909 = vmatmul.bf16.gmra.mxu0 %v828
    %v2910 = vpop.f32.mrf.mxu0
    %v2911 = vadd.f32 %v2822, %v2910
    %v2912 = vpop.f32.mrf.mxu0
    %v2913 = vadd.f32 %v2824, %v2912
    %2914 = vmatmul.bf16.gmra.mxu0 %v832
    %v2915 = vpop.f32.mrf.mxu0
    %v2916 = vadd.f32 %v2827, %v2915
    %v2917 = vpop.f32.mrf.mxu0
    %v2918 = vadd.f32 %v2829, %v2917
    %2919 = vmatmul.bf16.gmra.mxu0 %v836
    %v2920 = vpop.f32.mrf.mxu0
    %v2921 = vadd.f32 %v2832, %v2920
    %v2922 = vpop.f32.mrf.mxu0
    %v2923 = vadd.f32 %v2834, %v2922
    %2924 = vmatmul.bf16.gmra.mxu0 %v840
    %v2925 = vpop.f32.mrf.mxu0
    %v2926 = vadd.f32 %v2837, %v2925
    %v2927 = vpop.f32.mrf.mxu0
    %v2928 = vadd.f32 %v2839, %v2927
    %2929 = vmatmul.bf16.gmra.mxu0 %v844
    %v2930 = vpop.f32.mrf.mxu0
    %v2931 = vadd.f32 %v2842, %v2930
    %v2932 = vpop.f32.mrf.mxu0
    %v2933 = vadd.f32 %v2844, %v2932
    %2934 = vdwg.mxu0
    %2935 = vmatpush.bf16.msra.mxu0 %v2074
    %2936 = vmatpush.bf16.msra.mxu0 %v2066
    %2937 = vmatpush.bf16.msra.mxu0 %v2058
    %2938 = vmatpush.bf16.msra.mxu0 %v2050
    %2939 = vmatpush.bf16.msra.mxu0 %v2042
    %2940 = vmatpush.bf16.msra.mxu0 %v2034
    %2941 = vmatpush.bf16.msra.mxu0 %v2026
    %2942 = vmatpush.bf16.msra.mxu0 %v2018
    %2943 = vmatmul.bf16.gmra.mxu0 %v785
    %v2944 = vpop.f32.mrf.mxu0
    %v2945 = vadd.f32 %v2856, %v2944
    %v2946 = vpop.f32.mrf.mxu0
    %v2947 = vadd.f32 %v2858, %v2946
    %2948 = vmatmul.bf16.gmra.mxu0 %v789
    %v2949 = vpop.f32.mrf.mxu0
    %v2950 = vadd.f32 %v2861, %v2949
    %v2951 = vpop.f32.mrf.mxu0
    %v2952 = vadd.f32 %v2863, %v2951
    %2953 = vmatmul.bf16.gmra.mxu0 %v793
    %v2954 = vpop.f32.mrf.mxu0
    %v2955 = vadd.f32 %v2866, %v2954
    %v2956 = vpop.f32.mrf.mxu0
    %v2957 = vadd.f32 %v2868, %v2956
    %2958 = vmatmul.bf16.gmra.mxu0 %v797
    %v2959 = vpop.f32.mrf.mxu0
    %v2960 = vadd.f32 %v2871, %v2959
    %v2961 = vpop.f32.mrf.mxu0
    %v2962 = vadd.f32 %v2873, %v2961
    %2963 = vmatmul.bf16.gmra.mxu0 %v801
    %v2964 = vpop.f32.mrf.mxu0
    %v2965 = vadd.f32 %v2876, %v2964
    %v2966 = vpop.f32.mrf.mxu0
    %v2967 = vadd.f32 %v2878, %v2966
    %2968 = vmatmul.bf16.gmra.mxu0 %v805
    %v2969 = vpop.f32.mrf.mxu0
    %v2970 = vadd.f32 %v2881, %v2969
    %v2971 = vpop.f32.mrf.mxu0
    %v2972 = vadd.f32 %v2883, %v2971
    %2973 = vmatmul.bf16.gmra.mxu0 %v809
    %v2974 = vpop.f32.mrf.mxu0
    %v2975 = vadd.f32 %v2886, %v2974
    %v2976 = vpop.f32.mrf.mxu0
    %v2977 = vadd.f32 %v2888, %v2976
    %2978 = vmatmul.bf16.gmra.mxu0 %v813
    %v2979 = vpop.f32.mrf.mxu0
    %v2980 = vadd.f32 %v2891, %v2979
    %v2981 = vpop.f32.mrf.mxu0
    %v2982 = vadd.f32 %v2893, %v2981
    %2983 = vmatmul.bf16.gmra.mxu0 %v817
    %v2984 = vpop.f32.mrf.mxu0
    %v2985 = vadd.f32 %v2896, %v2984
    %v2986 = vpop.f32.mrf.mxu0
    %v2987 = vadd.f32 %v2898, %v2986
    %2988 = vmatmul.bf16.gmra.mxu0 %v821
    %v2989 = vpop.f32.mrf.mxu0
    %v2990 = vadd.f32 %v2901, %v2989
    %v2991 = vpop.f32.mrf.mxu0
    %v2992 = vadd.f32 %v2903, %v2991
    %2993 = vmatmul.bf16.gmra.mxu0 %v825
    %v2994 = vpop.f32.mrf.mxu0
    %v2995 = vadd.f32 %v2906, %v2994
    %v2996 = vpop.f32.mrf.mxu0
    %v2997 = vadd.f32 %v2908, %v2996
    %2998 = vmatmul.bf16.gmra.mxu0 %v829
    %v2999 = vpop.f32.mrf.mxu0
    %v3000 = vadd.f32 %v2911, %v2999
    %v3001 = vpop.f32.mrf.mxu0
    %v3002 = vadd.f32 %v2913, %v3001
    %3003 = vmatmul.bf16.gmra.mxu0 %v833
    %v3004 = vpop.f32.mrf.mxu0
    %v3005 = vadd.f32 %v2916, %v3004
    %v3006 = vpop.f32.mrf.mxu0
    %v3007 = vadd.f32 %v2918, %v3006
    %3008 = vmatmul.bf16.gmra.mxu0 %v837
    %v3009 = vpop.f32.mrf.mxu0
    %v3010 = vadd.f32 %v2921, %v3009
    %v3011 = vpop.f32.mrf.mxu0
    %v3012 = vadd.f32 %v2923, %v3011
    %3013 = vmatmul.bf16.gmra.mxu0 %v841
    %v3014 = vpop.f32.mrf.mxu0
    %v3015 = vadd.f32 %v2926, %v3014
    %v3016 = vpop.f32.mrf.mxu0
    %v3017 = vadd.f32 %v2928, %v3016
    %3018 = vmatmul.bf16.gmra.mxu0 %v845
    %v3019 = vpop.f32.mrf.mxu0
    %v3020 = vadd.f32 %v2931, %v3019
    %v3021 = vpop.f32.mrf.mxu0
    %v3022 = vadd.f32 %v2933, %v3021
    %3023 = vdwg.mxu0
    %3024 = vmatpush.bf16.msra.mxu0 %v2138
    %3025 = vmatpush.bf16.msra.mxu0 %v2130
    %3026 = vmatpush.bf16.msra.mxu0 %v2122
    %3027 = vmatpush.bf16.msra.mxu0 %v2114
    %3028 = vmatpush.bf16.msra.mxu0 %v2106
    %3029 = vmatpush.bf16.msra.mxu0 %v2098
    %3030 = vmatpush.bf16.msra.mxu0 %v2090
    %3031 = vmatpush.bf16.msra.mxu0 %v2082
    %3032 = vmatmul.bf16.gmra.mxu0 %v786
    %v3033 = vpop.f32.mrf.mxu0
    %v3034 = vadd.f32 %v2945, %v3033
    %v3035 = vpop.f32.mrf.mxu0
    %v3036 = vadd.f32 %v2947, %v3035
    %3037 = vmatmul.bf16.gmra.mxu0 %v790
    %v3038 = vpop.f32.mrf.mxu0
    %v3039 = vadd.f32 %v2950, %v3038
    %v3040 = vpop.f32.mrf.mxu0
    %v3041 = vadd.f32 %v2952, %v3040
    %3042 = vmatmul.bf16.gmra.mxu0 %v794
    %v3043 = vpop.f32.mrf.mxu0
    %v3044 = vadd.f32 %v2955, %v3043
    %v3045 = vpop.f32.mrf.mxu0
    %v3046 = vadd.f32 %v2957, %v3045
    %3047 = vmatmul.bf16.gmra.mxu0 %v798
    %v3048 = vpop.f32.mrf.mxu0
    %v3049 = vadd.f32 %v2960, %v3048
    %v3050 = vpop.f32.mrf.mxu0
    %v3051 = vadd.f32 %v2962, %v3050
    %3052 = vmatmul.bf16.gmra.mxu0 %v802
    %v3053 = vpop.f32.mrf.mxu0
    %v3054 = vadd.f32 %v2965, %v3053
    %v3055 = vpop.f32.mrf.mxu0
    %v3056 = vadd.f32 %v2967, %v3055
    %3057 = vmatmul.bf16.gmra.mxu0 %v806
    %v3058 = vpop.f32.mrf.mxu0
    %v3059 = vadd.f32 %v2970, %v3058
    %v3060 = vpop.f32.mrf.mxu0
    %v3061 = vadd.f32 %v2972, %v3060
    %3062 = vmatmul.bf16.gmra.mxu0 %v810
    %v3063 = vpop.f32.mrf.mxu0
    %v3064 = vadd.f32 %v2975, %v3063
    %v3065 = vpop.f32.mrf.mxu0
    %v3066 = vadd.f32 %v2977, %v3065
    %3067 = vmatmul.bf16.gmra.mxu0 %v814
    %v3068 = vpop.f32.mrf.mxu0
    %v3069 = vadd.f32 %v2980, %v3068
    %v3070 = vpop.f32.mrf.mxu0
    %v3071 = vadd.f32 %v2982, %v3070
    %3072 = vmatmul.bf16.gmra.mxu0 %v818
    %v3073 = vpop.f32.mrf.mxu0
    %v3074 = vadd.f32 %v2985, %v3073
    %v3075 = vpop.f32.mrf.mxu0
    %v3076 = vadd.f32 %v2987, %v3075
    %3077 = vmatmul.bf16.gmra.mxu0 %v822
    %v3078 = vpop.f32.mrf.mxu0
    %v3079 = vadd.f32 %v2990, %v3078
    %v3080 = vpop.f32.mrf.mxu0
    %v3081 = vadd.f32 %v2992, %v3080
    %3082 = vmatmul.bf16.gmra.mxu0 %v826
    %v3083 = vpop.f32.mrf.mxu0
    %v3084 = vadd.f32 %v2995, %v3083
    %v3085 = vpop.f32.mrf.mxu0
    %v3086 = vadd.f32 %v2997, %v3085
    %3087 = vmatmul.bf16.gmra.mxu0 %v830
    %v3088 = vpop.f32.mrf.mxu0
    %v3089 = vadd.f32 %v3000, %v3088
    %v3090 = vpop.f32.mrf.mxu0
    %v3091 = vadd.f32 %v3002, %v3090
    %3092 = vmatmul.bf16.gmra.mxu0 %v834
    %v3093 = vpop.f32.mrf.mxu0
    %v3094 = vadd.f32 %v3005, %v3093
    %v3095 = vpop.f32.mrf.mxu0
    %v3096 = vadd.f32 %v3007, %v3095
    %3097 = vmatmul.bf16.gmra.mxu0 %v838
    %v3098 = vpop.f32.mrf.mxu0
    %v3099 = vadd.f32 %v3010, %v3098
    %v3100 = vpop.f32.mrf.mxu0
    %v3101 = vadd.f32 %v3012, %v3100
    %3102 = vmatmul.bf16.gmra.mxu0 %v842
    %v3103 = vpop.f32.mrf.mxu0
    %v3104 = vadd.f32 %v3015, %v3103
    %v3105 = vpop.f32.mrf.mxu0
    %v3106 = vadd.f32 %v3017, %v3105
    %3107 = vmatmul.bf16.gmra.mxu0 %v846
    %v3108 = vpop.f32.mrf.mxu0
    %v3109 = vadd.f32 %v3020, %v3108
    %v3110 = vpop.f32.mrf.mxu0
    %v3111 = vadd.f32 %v3022, %v3110
    %3112 = vdwg.mxu0
    %3113 = vmatpush.bf16.msra.mxu0 %v1947
    %3114 = vmatpush.bf16.msra.mxu0 %v1939
    %3115 = vmatpush.bf16.msra.mxu0 %v1931
    %3116 = vmatpush.bf16.msra.mxu0 %v1923
    %3117 = vmatpush.bf16.msra.mxu0 %v1915
    %3118 = vmatpush.bf16.msra.mxu0 %v1907
    %3119 = vmatpush.bf16.msra.mxu0 %v1899
    %3120 = vmatpush.bf16.msra.mxu0 %v1891
    %3121 = vmatmul.bf16.gmra.mxu0 %v783
    %v3122 = vpop.f32.mrf.mxu0
    %v3123 = vadd.f32 %v1107, %v3122
    %v3124 = vpop.f32.mrf.mxu0
    %v3125 = vadd.f32 %v1107, %v3124
    %3126 = vmatmul.bf16.gmra.mxu0 %v787
    %v3127 = vpop.f32.mrf.mxu0
    %v3128 = vadd.f32 %v1107, %v3127
    %v3129 = vpop.f32.mrf.mxu0
    %v3130 = vadd.f32 %v1107, %v3129
    %3131 = vmatmul.bf16.gmra.mxu0 %v791
    %v3132 = vpop.f32.mrf.mxu0
    %v3133 = vadd.f32 %v1107, %v3132
    %v3134 = vpop.f32.mrf.mxu0
    %v3135 = vadd.f32 %v1107, %v3134
    %3136 = vmatmul.bf16.gmra.mxu0 %v795
    %v3137 = vpop.f32.mrf.mxu0
    %v3138 = vadd.f32 %v1107, %v3137
    %v3139 = vpop.f32.mrf.mxu0
    %v3140 = vadd.f32 %v1107, %v3139
    %3141 = vmatmul.bf16.gmra.mxu0 %v799
    %v3142 = vpop.f32.mrf.mxu0
    %v3143 = vadd.f32 %v1107, %v3142
    %v3144 = vpop.f32.mrf.mxu0
    %v3145 = vadd.f32 %v1107, %v3144
    %3146 = vmatmul.bf16.gmra.mxu0 %v803
    %v3147 = vpop.f32.mrf.mxu0
    %v3148 = vadd.f32 %v1107, %v3147
    %v3149 = vpop.f32.mrf.mxu0
    %v3150 = vadd.f32 %v1107, %v3149
    %3151 = vmatmul.bf16.gmra.mxu0 %v807
    %v3152 = vpop.f32.mrf.mxu0
    %v3153 = vadd.f32 %v1107, %v3152
    %v3154 = vpop.f32.mrf.mxu0
    %v3155 = vadd.f32 %v1107, %v3154
    %3156 = vmatmul.bf16.gmra.mxu0 %v811
    %v3157 = vpop.f32.mrf.mxu0
    %v3158 = vadd.f32 %v1107, %v3157
    %v3159 = vpop.f32.mrf.mxu0
    %v3160 = vadd.f32 %v1107, %v3159
    %3161 = vmatmul.bf16.gmra.mxu0 %v815
    %v3162 = vpop.f32.mrf.mxu0
    %v3163 = vadd.f32 %v1107, %v3162
    %v3164 = vpop.f32.mrf.mxu0
    %v3165 = vadd.f32 %v1107, %v3164
    %3166 = vmatmul.bf16.gmra.mxu0 %v819
    %v3167 = vpop.f32.mrf.mxu0
    %v3168 = vadd.f32 %v1107, %v3167
    %v3169 = vpop.f32.mrf.mxu0
    %v3170 = vadd.f32 %v1107, %v3169
    %3171 = vmatmul.bf16.gmra.mxu0 %v823
    %v3172 = vpop.f32.mrf.mxu0
    %v3173 = vadd.f32 %v1107, %v3172
    %v3174 = vpop.f32.mrf.mxu0
    %v3175 = vadd.f32 %v1107, %v3174
    %3176 = vmatmul.bf16.gmra.mxu0 %v827
    %v3177 = vpop.f32.mrf.mxu0
    %v3178 = vadd.f32 %v1107, %v3177
    %v3179 = vpop.f32.mrf.mxu0
    %v3180 = vadd.f32 %v1107, %v3179
    %3181 = vmatmul.bf16.gmra.mxu0 %v831
    %v3182 = vpop.f32.mrf.mxu0
    %v3183 = vadd.f32 %v1107, %v3182
    %v3184 = vpop.f32.mrf.mxu0
    %v3185 = vadd.f32 %v1107, %v3184
    %3186 = vmatmul.bf16.gmra.mxu0 %v835
    %v3187 = vpop.f32.mrf.mxu0
    %v3188 = vadd.f32 %v1107, %v3187
    %v3189 = vpop.f32.mrf.mxu0
    %v3190 = vadd.f32 %v1107, %v3189
    %3191 = vmatmul.bf16.gmra.mxu0 %v839
    %v3192 = vpop.f32.mrf.mxu0
    %v3193 = vadd.f32 %v1107, %v3192
    %v3194 = vpop.f32.mrf.mxu0
    %v3195 = vadd.f32 %v1107, %v3194
    %3196 = vmatmul.bf16.gmra.mxu0 %v843
    %v3197 = vpop.f32.mrf.mxu0
    %v3198 = vadd.f32 %v1107, %v3197
    %v3199 = vpop.f32.mrf.mxu0
    %v3200 = vadd.f32 %v1107, %v3199
    %3201 = vdwg.mxu0
    %3202 = vmatpush.bf16.msra.mxu0 %v2011
    %3203 = vmatpush.bf16.msra.mxu0 %v2003
    %3204 = vmatpush.bf16.msra.mxu0 %v1995
    %3205 = vmatpush.bf16.msra.mxu0 %v1987
    %3206 = vmatpush.bf16.msra.mxu0 %v1979
    %3207 = vmatpush.bf16.msra.mxu0 %v1971
    %3208 = vmatpush.bf16.msra.mxu0 %v1963
    %3209 = vmatpush.bf16.msra.mxu0 %v1955
    %3210 = vmatmul.bf16.gmra.mxu0 %v784
    %v3211 = vpop.f32.mrf.mxu0
    %v3212 = vadd.f32 %v3123, %v3211
    %v3213 = vpop.f32.mrf.mxu0
    %v3214 = vadd.f32 %v3125, %v3213
    %3215 = vmatmul.bf16.gmra.mxu0 %v788
    %v3216 = vpop.f32.mrf.mxu0
    %v3217 = vadd.f32 %v3128, %v3216
    %v3218 = vpop.f32.mrf.mxu0
    %v3219 = vadd.f32 %v3130, %v3218
    %3220 = vmatmul.bf16.gmra.mxu0 %v792
    %v3221 = vpop.f32.mrf.mxu0
    %v3222 = vadd.f32 %v3133, %v3221
    %v3223 = vpop.f32.mrf.mxu0
    %v3224 = vadd.f32 %v3135, %v3223
    %3225 = vmatmul.bf16.gmra.mxu0 %v796
    %v3226 = vpop.f32.mrf.mxu0
    %v3227 = vadd.f32 %v3138, %v3226
    %v3228 = vpop.f32.mrf.mxu0
    %v3229 = vadd.f32 %v3140, %v3228
    %3230 = vmatmul.bf16.gmra.mxu0 %v800
    %v3231 = vpop.f32.mrf.mxu0
    %v3232 = vadd.f32 %v3143, %v3231
    %v3233 = vpop.f32.mrf.mxu0
    %v3234 = vadd.f32 %v3145, %v3233
    %3235 = vmatmul.bf16.gmra.mxu0 %v804
    %v3236 = vpop.f32.mrf.mxu0
    %v3237 = vadd.f32 %v3148, %v3236
    %v3238 = vpop.f32.mrf.mxu0
    %v3239 = vadd.f32 %v3150, %v3238
    %3240 = vmatmul.bf16.gmra.mxu0 %v808
    %v3241 = vpop.f32.mrf.mxu0
    %v3242 = vadd.f32 %v3153, %v3241
    %v3243 = vpop.f32.mrf.mxu0
    %v3244 = vadd.f32 %v3155, %v3243
    %3245 = vmatmul.bf16.gmra.mxu0 %v812
    %v3246 = vpop.f32.mrf.mxu0
    %v3247 = vadd.f32 %v3158, %v3246
    %v3248 = vpop.f32.mrf.mxu0
    %v3249 = vadd.f32 %v3160, %v3248
    %3250 = vmatmul.bf16.gmra.mxu0 %v816
    %v3251 = vpop.f32.mrf.mxu0
    %v3252 = vadd.f32 %v3163, %v3251
    %v3253 = vpop.f32.mrf.mxu0
    %v3254 = vadd.f32 %v3165, %v3253
    %3255 = vmatmul.bf16.gmra.mxu0 %v820
    %v3256 = vpop.f32.mrf.mxu0
    %v3257 = vadd.f32 %v3168, %v3256
    %v3258 = vpop.f32.mrf.mxu0
    %v3259 = vadd.f32 %v3170, %v3258
    %3260 = vmatmul.bf16.gmra.mxu0 %v824
    %v3261 = vpop.f32.mrf.mxu0
    %v3262 = vadd.f32 %v3173, %v3261
    %v3263 = vpop.f32.mrf.mxu0
    %v3264 = vadd.f32 %v3175, %v3263
    %3265 = vmatmul.bf16.gmra.mxu0 %v828
    %v3266 = vpop.f32.mrf.mxu0
    %v3267 = vadd.f32 %v3178, %v3266
    %v3268 = vpop.f32.mrf.mxu0
    %v3269 = vadd.f32 %v3180, %v3268
    %3270 = vmatmul.bf16.gmra.mxu0 %v832
    %v3271 = vpop.f32.mrf.mxu0
    %v3272 = vadd.f32 %v3183, %v3271
    %v3273 = vpop.f32.mrf.mxu0
    %v3274 = vadd.f32 %v3185, %v3273
    %3275 = vmatmul.bf16.gmra.mxu0 %v836
    %v3276 = vpop.f32.mrf.mxu0
    %v3277 = vadd.f32 %v3188, %v3276
    %v3278 = vpop.f32.mrf.mxu0
    %v3279 = vadd.f32 %v3190, %v3278
    %3280 = vmatmul.bf16.gmra.mxu0 %v840
    %v3281 = vpop.f32.mrf.mxu0
    %v3282 = vadd.f32 %v3193, %v3281
    %v3283 = vpop.f32.mrf.mxu0
    %v3284 = vadd.f32 %v3195, %v3283
    %3285 = vmatmul.bf16.gmra.mxu0 %v844
    %v3286 = vpop.f32.mrf.mxu0
    %v3287 = vadd.f32 %v3198, %v3286
    %v3288 = vpop.f32.mrf.mxu0
    %v3289 = vadd.f32 %v3200, %v3288
    %3290 = vdwg.mxu0
    %3291 = vmatpush.bf16.msra.mxu0 %v2075
    %3292 = vmatpush.bf16.msra.mxu0 %v2067
    %3293 = vmatpush.bf16.msra.mxu0 %v2059
    %3294 = vmatpush.bf16.msra.mxu0 %v2051
    %3295 = vmatpush.bf16.msra.mxu0 %v2043
    %3296 = vmatpush.bf16.msra.mxu0 %v2035
    %3297 = vmatpush.bf16.msra.mxu0 %v2027
    %3298 = vmatpush.bf16.msra.mxu0 %v2019
    %3299 = vmatmul.bf16.gmra.mxu0 %v785
    %v3300 = vpop.f32.mrf.mxu0
    %v3301 = vadd.f32 %v3212, %v3300
    %v3302 = vpop.f32.mrf.mxu0
    %v3303 = vadd.f32 %v3214, %v3302
    %3304 = vmatmul.bf16.gmra.mxu0 %v789
    %v3305 = vpop.f32.mrf.mxu0
    %v3306 = vadd.f32 %v3217, %v3305
    %v3307 = vpop.f32.mrf.mxu0
    %v3308 = vadd.f32 %v3219, %v3307
    %3309 = vmatmul.bf16.gmra.mxu0 %v793
    %v3310 = vpop.f32.mrf.mxu0
    %v3311 = vadd.f32 %v3222, %v3310
    %v3312 = vpop.f32.mrf.mxu0
    %v3313 = vadd.f32 %v3224, %v3312
    %3314 = vmatmul.bf16.gmra.mxu0 %v797
    %v3315 = vpop.f32.mrf.mxu0
    %v3316 = vadd.f32 %v3227, %v3315
    %v3317 = vpop.f32.mrf.mxu0
    %v3318 = vadd.f32 %v3229, %v3317
    %3319 = vmatmul.bf16.gmra.mxu0 %v801
    %v3320 = vpop.f32.mrf.mxu0
    %v3321 = vadd.f32 %v3232, %v3320
    %v3322 = vpop.f32.mrf.mxu0
    %v3323 = vadd.f32 %v3234, %v3322
    %3324 = vmatmul.bf16.gmra.mxu0 %v805
    %v3325 = vpop.f32.mrf.mxu0
    %v3326 = vadd.f32 %v3237, %v3325
    %v3327 = vpop.f32.mrf.mxu0
    %v3328 = vadd.f32 %v3239, %v3327
    %3329 = vmatmul.bf16.gmra.mxu0 %v809
    %v3330 = vpop.f32.mrf.mxu0
    %v3331 = vadd.f32 %v3242, %v3330
    %v3332 = vpop.f32.mrf.mxu0
    %v3333 = vadd.f32 %v3244, %v3332
    %3334 = vmatmul.bf16.gmra.mxu0 %v813
    %v3335 = vpop.f32.mrf.mxu0
    %v3336 = vadd.f32 %v3247, %v3335
    %v3337 = vpop.f32.mrf.mxu0
    %v3338 = vadd.f32 %v3249, %v3337
    %3339 = vmatmul.bf16.gmra.mxu0 %v817
    %v3340 = vpop.f32.mrf.mxu0
    %v3341 = vadd.f32 %v3252, %v3340
    %v3342 = vpop.f32.mrf.mxu0
    %v3343 = vadd.f32 %v3254, %v3342
    %3344 = vmatmul.bf16.gmra.mxu0 %v821
    %v3345 = vpop.f32.mrf.mxu0
    %v3346 = vadd.f32 %v3257, %v3345
    %v3347 = vpop.f32.mrf.mxu0
    %v3348 = vadd.f32 %v3259, %v3347
    %3349 = vmatmul.bf16.gmra.mxu0 %v825
    %v3350 = vpop.f32.mrf.mxu0
    %v3351 = vadd.f32 %v3262, %v3350
    %v3352 = vpop.f32.mrf.mxu0
    %v3353 = vadd.f32 %v3264, %v3352
    %3354 = vmatmul.bf16.gmra.mxu0 %v829
    %v3355 = vpop.f32.mrf.mxu0
    %v3356 = vadd.f32 %v3267, %v3355
    %v3357 = vpop.f32.mrf.mxu0
    %v3358 = vadd.f32 %v3269, %v3357
    %3359 = vmatmul.bf16.gmra.mxu0 %v833
    %v3360 = vpop.f32.mrf.mxu0
    %v3361 = vadd.f32 %v3272, %v3360
    %v3362 = vpop.f32.mrf.mxu0
    %v3363 = vadd.f32 %v3274, %v3362
    %3364 = vmatmul.bf16.gmra.mxu0 %v837
    %v3365 = vpop.f32.mrf.mxu0
    %v3366 = vadd.f32 %v3277, %v3365
    %v3367 = vpop.f32.mrf.mxu0
    %v3368 = vadd.f32 %v3279, %v3367
    %3369 = vmatmul.bf16.gmra.mxu0 %v841
    %v3370 = vpop.f32.mrf.mxu0
    %v3371 = vadd.f32 %v3282, %v3370
    %v3372 = vpop.f32.mrf.mxu0
    %v3373 = vadd.f32 %v3284, %v3372
    %3374 = vmatmul.bf16.gmra.mxu0 %v845
    %v3375 = vpop.f32.mrf.mxu0
    %v3376 = vadd.f32 %v3287, %v3375
    %v3377 = vpop.f32.mrf.mxu0
    %v3378 = vadd.f32 %v3289, %v3377
    %3379 = vdwg.mxu0
    %3380 = vmatpush.bf16.msra.mxu0 %v2139
    %3381 = vmatpush.bf16.msra.mxu0 %v2131
    %3382 = vmatpush.bf16.msra.mxu0 %v2123
    %3383 = vmatpush.bf16.msra.mxu0 %v2115
    %3384 = vmatpush.bf16.msra.mxu0 %v2107
    %3385 = vmatpush.bf16.msra.mxu0 %v2099
    %3386 = vmatpush.bf16.msra.mxu0 %v2091
    %3387 = vmatpush.bf16.msra.mxu0 %v2083
    %3388 = vmatmul.bf16.gmra.mxu0 %v786
    %v3389 = vpop.f32.mrf.mxu0
    %v3390 = vadd.f32 %v3301, %v3389
    %v3391 = vpop.f32.mrf.mxu0
    %v3392 = vadd.f32 %v3303, %v3391
    %3393 = vmatmul.bf16.gmra.mxu0 %v790
    %v3394 = vpop.f32.mrf.mxu0
    %v3395 = vadd.f32 %v3306, %v3394
    %v3396 = vpop.f32.mrf.mxu0
    %v3397 = vadd.f32 %v3308, %v3396
    %3398 = vmatmul.bf16.gmra.mxu0 %v794
    %v3399 = vpop.f32.mrf.mxu0
    %v3400 = vadd.f32 %v3311, %v3399
    %v3401 = vpop.f32.mrf.mxu0
    %v3402 = vadd.f32 %v3313, %v3401
    %3403 = vmatmul.bf16.gmra.mxu0 %v798
    %v3404 = vpop.f32.mrf.mxu0
    %v3405 = vadd.f32 %v3316, %v3404
    %v3406 = vpop.f32.mrf.mxu0
    %v3407 = vadd.f32 %v3318, %v3406
    %3408 = vmatmul.bf16.gmra.mxu0 %v802
    %v3409 = vpop.f32.mrf.mxu0
    %v3410 = vadd.f32 %v3321, %v3409
    %v3411 = vpop.f32.mrf.mxu0
    %v3412 = vadd.f32 %v3323, %v3411
    %3413 = vmatmul.bf16.gmra.mxu0 %v806
    %v3414 = vpop.f32.mrf.mxu0
    %v3415 = vadd.f32 %v3326, %v3414
    %v3416 = vpop.f32.mrf.mxu0
    %v3417 = vadd.f32 %v3328, %v3416
    %3418 = vmatmul.bf16.gmra.mxu0 %v810
    %v3419 = vpop.f32.mrf.mxu0
    %v3420 = vadd.f32 %v3331, %v3419
    %v3421 = vpop.f32.mrf.mxu0
    %v3422 = vadd.f32 %v3333, %v3421
    %3423 = vmatmul.bf16.gmra.mxu0 %v814
    %v3424 = vpop.f32.mrf.mxu0
    %v3425 = vadd.f32 %v3336, %v3424
    %v3426 = vpop.f32.mrf.mxu0
    %v3427 = vadd.f32 %v3338, %v3426
    %3428 = vmatmul.bf16.gmra.mxu0 %v818
    %v3429 = vpop.f32.mrf.mxu0
    %v3430 = vadd.f32 %v3341, %v3429
    %v3431 = vpop.f32.mrf.mxu0
    %v3432 = vadd.f32 %v3343, %v3431
    %3433 = vmatmul.bf16.gmra.mxu0 %v822
    %v3434 = vpop.f32.mrf.mxu0
    %v3435 = vadd.f32 %v3346, %v3434
    %v3436 = vpop.f32.mrf.mxu0
    %v3437 = vadd.f32 %v3348, %v3436
    %3438 = vmatmul.bf16.gmra.mxu0 %v826
    %v3439 = vpop.f32.mrf.mxu0
    %v3440 = vadd.f32 %v3351, %v3439
    %v3441 = vpop.f32.mrf.mxu0
    %v3442 = vadd.f32 %v3353, %v3441
    %3443 = vmatmul.bf16.gmra.mxu0 %v830
    %v3444 = vpop.f32.mrf.mxu0
    %v3445 = vadd.f32 %v3356, %v3444
    %v3446 = vpop.f32.mrf.mxu0
    %v3447 = vadd.f32 %v3358, %v3446
    %3448 = vmatmul.bf16.gmra.mxu0 %v834
    %v3449 = vpop.f32.mrf.mxu0
    %v3450 = vadd.f32 %v3361, %v3449
    %v3451 = vpop.f32.mrf.mxu0
    %v3452 = vadd.f32 %v3363, %v3451
    %3453 = vmatmul.bf16.gmra.mxu0 %v838
    %v3454 = vpop.f32.mrf.mxu0
    %v3455 = vadd.f32 %v3366, %v3454
    %v3456 = vpop.f32.mrf.mxu0
    %v3457 = vadd.f32 %v3368, %v3456
    %3458 = vmatmul.bf16.gmra.mxu0 %v842
    %v3459 = vpop.f32.mrf.mxu0
    %v3460 = vadd.f32 %v3371, %v3459
    %v3461 = vpop.f32.mrf.mxu0
    %v3462 = vadd.f32 %v3373, %v3461
    %3463 = vmatmul.bf16.gmra.mxu0 %v846
    %v3464 = vpop.f32.mrf.mxu0
    %v3465 = vadd.f32 %v3376, %v3464
    %v3466 = vpop.f32.mrf.mxu0
    %v3467 = vadd.f32 %v3378, %v3466
    %3468 = vdwg.mxu0
    %3469 = vmatpush.bf16.msra.mxu0 %v1948
    %3470 = vmatpush.bf16.msra.mxu0 %v1940
    %3471 = vmatpush.bf16.msra.mxu0 %v1932
    %3472 = vmatpush.bf16.msra.mxu0 %v1924
    %3473 = vmatpush.bf16.msra.mxu0 %v1916
    %3474 = vmatpush.bf16.msra.mxu0 %v1908
    %3475 = vmatpush.bf16.msra.mxu0 %v1900
    %3476 = vmatpush.bf16.msra.mxu0 %v1892
    %3477 = vmatmul.bf16.gmra.mxu0 %v783
    %v3478 = vpop.f32.mrf.mxu0
    %v3479 = vadd.f32 %v1108, %v3478
    %v3480 = vpop.f32.mrf.mxu0
    %v3481 = vadd.f32 %v1108, %v3480
    %3482 = vmatmul.bf16.gmra.mxu0 %v787
    %v3483 = vpop.f32.mrf.mxu0
    %v3484 = vadd.f32 %v1108, %v3483
    %v3485 = vpop.f32.mrf.mxu0
    %v3486 = vadd.f32 %v1108, %v3485
    %3487 = vmatmul.bf16.gmra.mxu0 %v791
    %v3488 = vpop.f32.mrf.mxu0
    %v3489 = vadd.f32 %v1108, %v3488
    %v3490 = vpop.f32.mrf.mxu0
    %v3491 = vadd.f32 %v1108, %v3490
    %3492 = vmatmul.bf16.gmra.mxu0 %v795
    %v3493 = vpop.f32.mrf.mxu0
    %v3494 = vadd.f32 %v1108, %v3493
    %v3495 = vpop.f32.mrf.mxu0
    %v3496 = vadd.f32 %v1108, %v3495
    %3497 = vmatmul.bf16.gmra.mxu0 %v799
    %v3498 = vpop.f32.mrf.mxu0
    %v3499 = vadd.f32 %v1108, %v3498
    %v3500 = vpop.f32.mrf.mxu0
    %v3501 = vadd.f32 %v1108, %v3500
    %3502 = vmatmul.bf16.gmra.mxu0 %v803
    %v3503 = vpop.f32.mrf.mxu0
    %v3504 = vadd.f32 %v1108, %v3503
    %v3505 = vpop.f32.mrf.mxu0
    %v3506 = vadd.f32 %v1108, %v3505
    %3507 = vmatmul.bf16.gmra.mxu0 %v807
    %v3508 = vpop.f32.mrf.mxu0
    %v3509 = vadd.f32 %v1108, %v3508
    %v3510 = vpop.f32.mrf.mxu0
    %v3511 = vadd.f32 %v1108, %v3510
    %3512 = vmatmul.bf16.gmra.mxu0 %v811
    %v3513 = vpop.f32.mrf.mxu0
    %v3514 = vadd.f32 %v1108, %v3513
    %v3515 = vpop.f32.mrf.mxu0
    %v3516 = vadd.f32 %v1108, %v3515
    %3517 = vmatmul.bf16.gmra.mxu0 %v815
    %v3518 = vpop.f32.mrf.mxu0
    %v3519 = vadd.f32 %v1108, %v3518
    %v3520 = vpop.f32.mrf.mxu0
    %v3521 = vadd.f32 %v1108, %v3520
    %3522 = vmatmul.bf16.gmra.mxu0 %v819
    %v3523 = vpop.f32.mrf.mxu0
    %v3524 = vadd.f32 %v1108, %v3523
    %v3525 = vpop.f32.mrf.mxu0
    %v3526 = vadd.f32 %v1108, %v3525
    %3527 = vmatmul.bf16.gmra.mxu0 %v823
    %v3528 = vpop.f32.mrf.mxu0
    %v3529 = vadd.f32 %v1108, %v3528
    %v3530 = vpop.f32.mrf.mxu0
    %v3531 = vadd.f32 %v1108, %v3530
    %3532 = vmatmul.bf16.gmra.mxu0 %v827
    %v3533 = vpop.f32.mrf.mxu0
    %v3534 = vadd.f32 %v1108, %v3533
    %v3535 = vpop.f32.mrf.mxu0
    %v3536 = vadd.f32 %v1108, %v3535
    %3537 = vmatmul.bf16.gmra.mxu0 %v831
    %v3538 = vpop.f32.mrf.mxu0
    %v3539 = vadd.f32 %v1108, %v3538
    %v3540 = vpop.f32.mrf.mxu0
    %v3541 = vadd.f32 %v1108, %v3540
    %3542 = vmatmul.bf16.gmra.mxu0 %v835
    %v3543 = vpop.f32.mrf.mxu0
    %v3544 = vadd.f32 %v1108, %v3543
    %v3545 = vpop.f32.mrf.mxu0
    %v3546 = vadd.f32 %v1108, %v3545
    %3547 = vmatmul.bf16.gmra.mxu0 %v839
    %v3548 = vpop.f32.mrf.mxu0
    %v3549 = vadd.f32 %v1108, %v3548
    %v3550 = vpop.f32.mrf.mxu0
    %v3551 = vadd.f32 %v1108, %v3550
    %3552 = vmatmul.bf16.gmra.mxu0 %v843
    %v3553 = vpop.f32.mrf.mxu0
    %v3554 = vadd.f32 %v1108, %v3553
    %v3555 = vpop.f32.mrf.mxu0
    %v3556 = vadd.f32 %v1108, %v3555
    %3557 = vdwg.mxu0
    %3558 = vmatpush.bf16.msra.mxu0 %v2012
    %3559 = vmatpush.bf16.msra.mxu0 %v2004
    %3560 = vmatpush.bf16.msra.mxu0 %v1996
    %3561 = vmatpush.bf16.msra.mxu0 %v1988
    %3562 = vmatpush.bf16.msra.mxu0 %v1980
    %3563 = vmatpush.bf16.msra.mxu0 %v1972
    %3564 = vmatpush.bf16.msra.mxu0 %v1964
    %3565 = vmatpush.bf16.msra.mxu0 %v1956
    %3566 = vmatmul.bf16.gmra.mxu0 %v784
    %v3567 = vpop.f32.mrf.mxu0
    %v3568 = vadd.f32 %v3479, %v3567
    %v3569 = vpop.f32.mrf.mxu0
    %v3570 = vadd.f32 %v3481, %v3569
    %3571 = vmatmul.bf16.gmra.mxu0 %v788
    %v3572 = vpop.f32.mrf.mxu0
    %v3573 = vadd.f32 %v3484, %v3572
    %v3574 = vpop.f32.mrf.mxu0
    %v3575 = vadd.f32 %v3486, %v3574
    %3576 = vmatmul.bf16.gmra.mxu0 %v792
    %v3577 = vpop.f32.mrf.mxu0
    %v3578 = vadd.f32 %v3489, %v3577
    %v3579 = vpop.f32.mrf.mxu0
    %v3580 = vadd.f32 %v3491, %v3579
    %3581 = vmatmul.bf16.gmra.mxu0 %v796
    %v3582 = vpop.f32.mrf.mxu0
    %v3583 = vadd.f32 %v3494, %v3582
    %v3584 = vpop.f32.mrf.mxu0
    %v3585 = vadd.f32 %v3496, %v3584
    %3586 = vmatmul.bf16.gmra.mxu0 %v800
    %v3587 = vpop.f32.mrf.mxu0
    %v3588 = vadd.f32 %v3499, %v3587
    %v3589 = vpop.f32.mrf.mxu0
    %v3590 = vadd.f32 %v3501, %v3589
    %3591 = vmatmul.bf16.gmra.mxu0 %v804
    %v3592 = vpop.f32.mrf.mxu0
    %v3593 = vadd.f32 %v3504, %v3592
    %v3594 = vpop.f32.mrf.mxu0
    %v3595 = vadd.f32 %v3506, %v3594
    %3596 = vmatmul.bf16.gmra.mxu0 %v808
    %v3597 = vpop.f32.mrf.mxu0
    %v3598 = vadd.f32 %v3509, %v3597
    %v3599 = vpop.f32.mrf.mxu0
    %v3600 = vadd.f32 %v3511, %v3599
    %3601 = vmatmul.bf16.gmra.mxu0 %v812
    %v3602 = vpop.f32.mrf.mxu0
    %v3603 = vadd.f32 %v3514, %v3602
    %v3604 = vpop.f32.mrf.mxu0
    %v3605 = vadd.f32 %v3516, %v3604
    %3606 = vmatmul.bf16.gmra.mxu0 %v816
    %v3607 = vpop.f32.mrf.mxu0
    %v3608 = vadd.f32 %v3519, %v3607
    %v3609 = vpop.f32.mrf.mxu0
    %v3610 = vadd.f32 %v3521, %v3609
    %3611 = vmatmul.bf16.gmra.mxu0 %v820
    %v3612 = vpop.f32.mrf.mxu0
    %v3613 = vadd.f32 %v3524, %v3612
    %v3614 = vpop.f32.mrf.mxu0
    %v3615 = vadd.f32 %v3526, %v3614
    %3616 = vmatmul.bf16.gmra.mxu0 %v824
    %v3617 = vpop.f32.mrf.mxu0
    %v3618 = vadd.f32 %v3529, %v3617
    %v3619 = vpop.f32.mrf.mxu0
    %v3620 = vadd.f32 %v3531, %v3619
    %3621 = vmatmul.bf16.gmra.mxu0 %v828
    %v3622 = vpop.f32.mrf.mxu0
    %v3623 = vadd.f32 %v3534, %v3622
    %v3624 = vpop.f32.mrf.mxu0
    %v3625 = vadd.f32 %v3536, %v3624
    %3626 = vmatmul.bf16.gmra.mxu0 %v832
    %v3627 = vpop.f32.mrf.mxu0
    %v3628 = vadd.f32 %v3539, %v3627
    %v3629 = vpop.f32.mrf.mxu0
    %v3630 = vadd.f32 %v3541, %v3629
    %3631 = vmatmul.bf16.gmra.mxu0 %v836
    %v3632 = vpop.f32.mrf.mxu0
    %v3633 = vadd.f32 %v3544, %v3632
    %v3634 = vpop.f32.mrf.mxu0
    %v3635 = vadd.f32 %v3546, %v3634
    %3636 = vmatmul.bf16.gmra.mxu0 %v840
    %v3637 = vpop.f32.mrf.mxu0
    %v3638 = vadd.f32 %v3549, %v3637
    %v3639 = vpop.f32.mrf.mxu0
    %v3640 = vadd.f32 %v3551, %v3639
    %3641 = vmatmul.bf16.gmra.mxu0 %v844
    %v3642 = vpop.f32.mrf.mxu0
    %v3643 = vadd.f32 %v3554, %v3642
    %v3644 = vpop.f32.mrf.mxu0
    %v3645 = vadd.f32 %v3556, %v3644
    %3646 = vdwg.mxu0
    %3647 = vmatpush.bf16.msra.mxu0 %v2076
    %3648 = vmatpush.bf16.msra.mxu0 %v2068
    %3649 = vmatpush.bf16.msra.mxu0 %v2060
    %3650 = vmatpush.bf16.msra.mxu0 %v2052
    %3651 = vmatpush.bf16.msra.mxu0 %v2044
    %3652 = vmatpush.bf16.msra.mxu0 %v2036
    %3653 = vmatpush.bf16.msra.mxu0 %v2028
    %3654 = vmatpush.bf16.msra.mxu0 %v2020
    %3655 = vmatmul.bf16.gmra.mxu0 %v785
    %v3656 = vpop.f32.mrf.mxu0
    %v3657 = vadd.f32 %v3568, %v3656
    %v3658 = vpop.f32.mrf.mxu0
    %v3659 = vadd.f32 %v3570, %v3658
    %3660 = vmatmul.bf16.gmra.mxu0 %v789
    %v3661 = vpop.f32.mrf.mxu0
    %v3662 = vadd.f32 %v3573, %v3661
    %v3663 = vpop.f32.mrf.mxu0
    %v3664 = vadd.f32 %v3575, %v3663
    %3665 = vmatmul.bf16.gmra.mxu0 %v793
    %v3666 = vpop.f32.mrf.mxu0
    %v3667 = vadd.f32 %v3578, %v3666
    %v3668 = vpop.f32.mrf.mxu0
    %v3669 = vadd.f32 %v3580, %v3668
    %3670 = vmatmul.bf16.gmra.mxu0 %v797
    %v3671 = vpop.f32.mrf.mxu0
    %v3672 = vadd.f32 %v3583, %v3671
    %v3673 = vpop.f32.mrf.mxu0
    %v3674 = vadd.f32 %v3585, %v3673
    %3675 = vmatmul.bf16.gmra.mxu0 %v801
    %v3676 = vpop.f32.mrf.mxu0
    %v3677 = vadd.f32 %v3588, %v3676
    %v3678 = vpop.f32.mrf.mxu0
    %v3679 = vadd.f32 %v3590, %v3678
    %3680 = vmatmul.bf16.gmra.mxu0 %v805
    %v3681 = vpop.f32.mrf.mxu0
    %v3682 = vadd.f32 %v3593, %v3681
    %v3683 = vpop.f32.mrf.mxu0
    %v3684 = vadd.f32 %v3595, %v3683
    %3685 = vmatmul.bf16.gmra.mxu0 %v809
    %v3686 = vpop.f32.mrf.mxu0
    %v3687 = vadd.f32 %v3598, %v3686
    %v3688 = vpop.f32.mrf.mxu0
    %v3689 = vadd.f32 %v3600, %v3688
    %3690 = vmatmul.bf16.gmra.mxu0 %v813
    %v3691 = vpop.f32.mrf.mxu0
    %v3692 = vadd.f32 %v3603, %v3691
    %v3693 = vpop.f32.mrf.mxu0
    %v3694 = vadd.f32 %v3605, %v3693
    %3695 = vmatmul.bf16.gmra.mxu0 %v817
    %v3696 = vpop.f32.mrf.mxu0
    %v3697 = vadd.f32 %v3608, %v3696
    %v3698 = vpop.f32.mrf.mxu0
    %v3699 = vadd.f32 %v3610, %v3698
    %3700 = vmatmul.bf16.gmra.mxu0 %v821
    %v3701 = vpop.f32.mrf.mxu0
    %v3702 = vadd.f32 %v3613, %v3701
    %v3703 = vpop.f32.mrf.mxu0
    %v3704 = vadd.f32 %v3615, %v3703
    %3705 = vmatmul.bf16.gmra.mxu0 %v825
    %v3706 = vpop.f32.mrf.mxu0
    %v3707 = vadd.f32 %v3618, %v3706
    %v3708 = vpop.f32.mrf.mxu0
    %v3709 = vadd.f32 %v3620, %v3708
    %3710 = vmatmul.bf16.gmra.mxu0 %v829
    %v3711 = vpop.f32.mrf.mxu0
    %v3712 = vadd.f32 %v3623, %v3711
    %v3713 = vpop.f32.mrf.mxu0
    %v3714 = vadd.f32 %v3625, %v3713
    %3715 = vmatmul.bf16.gmra.mxu0 %v833
    %v3716 = vpop.f32.mrf.mxu0
    %v3717 = vadd.f32 %v3628, %v3716
    %v3718 = vpop.f32.mrf.mxu0
    %v3719 = vadd.f32 %v3630, %v3718
    %3720 = vmatmul.bf16.gmra.mxu0 %v837
    %v3721 = vpop.f32.mrf.mxu0
    %v3722 = vadd.f32 %v3633, %v3721
    %v3723 = vpop.f32.mrf.mxu0
    %v3724 = vadd.f32 %v3635, %v3723
    %3725 = vmatmul.bf16.gmra.mxu0 %v841
    %v3726 = vpop.f32.mrf.mxu0
    %v3727 = vadd.f32 %v3638, %v3726
    %v3728 = vpop.f32.mrf.mxu0
    %v3729 = vadd.f32 %v3640, %v3728
    %3730 = vmatmul.bf16.gmra.mxu0 %v845
    %v3731 = vpop.f32.mrf.mxu0
    %v3732 = vadd.f32 %v3643, %v3731
    %v3733 = vpop.f32.mrf.mxu0
    %v3734 = vadd.f32 %v3645, %v3733
    %3735 = vdwg.mxu0
    %3736 = vmatpush.bf16.msra.mxu0 %v2140
    %3737 = vmatpush.bf16.msra.mxu0 %v2132
    %3738 = vmatpush.bf16.msra.mxu0 %v2124
    %3739 = vmatpush.bf16.msra.mxu0 %v2116
    %3740 = vmatpush.bf16.msra.mxu0 %v2108
    %3741 = vmatpush.bf16.msra.mxu0 %v2100
    %3742 = vmatpush.bf16.msra.mxu0 %v2092
    %3743 = vmatpush.bf16.msra.mxu0 %v2084
    %3744 = vmatmul.bf16.gmra.mxu0 %v786
    %v3745 = vpop.f32.mrf.mxu0
    %v3746 = vadd.f32 %v3657, %v3745
    %v3747 = vpop.f32.mrf.mxu0
    %v3748 = vadd.f32 %v3659, %v3747
    %3749 = vmatmul.bf16.gmra.mxu0 %v790
    %v3750 = vpop.f32.mrf.mxu0
    %v3751 = vadd.f32 %v3662, %v3750
    %v3752 = vpop.f32.mrf.mxu0
    %v3753 = vadd.f32 %v3664, %v3752
    %3754 = vmatmul.bf16.gmra.mxu0 %v794
    %v3755 = vpop.f32.mrf.mxu0
    %v3756 = vadd.f32 %v3667, %v3755
    %v3757 = vpop.f32.mrf.mxu0
    %v3758 = vadd.f32 %v3669, %v3757
    %3759 = vmatmul.bf16.gmra.mxu0 %v798
    %v3760 = vpop.f32.mrf.mxu0
    %v3761 = vadd.f32 %v3672, %v3760
    %v3762 = vpop.f32.mrf.mxu0
    %v3763 = vadd.f32 %v3674, %v3762
    %3764 = vmatmul.bf16.gmra.mxu0 %v802
    %v3765 = vpop.f32.mrf.mxu0
    %v3766 = vadd.f32 %v3677, %v3765
    %v3767 = vpop.f32.mrf.mxu0
    %v3768 = vadd.f32 %v3679, %v3767
    %3769 = vmatmul.bf16.gmra.mxu0 %v806
    %v3770 = vpop.f32.mrf.mxu0
    %v3771 = vadd.f32 %v3682, %v3770
    %v3772 = vpop.f32.mrf.mxu0
    %v3773 = vadd.f32 %v3684, %v3772
    %3774 = vmatmul.bf16.gmra.mxu0 %v810
    %v3775 = vpop.f32.mrf.mxu0
    %v3776 = vadd.f32 %v3687, %v3775
    %v3777 = vpop.f32.mrf.mxu0
    %v3778 = vadd.f32 %v3689, %v3777
    %3779 = vmatmul.bf16.gmra.mxu0 %v814
    %v3780 = vpop.f32.mrf.mxu0
    %v3781 = vadd.f32 %v3692, %v3780
    %v3782 = vpop.f32.mrf.mxu0
    %v3783 = vadd.f32 %v3694, %v3782
    %3784 = vmatmul.bf16.gmra.mxu0 %v818
    %v3785 = vpop.f32.mrf.mxu0
    %v3786 = vadd.f32 %v3697, %v3785
    %v3787 = vpop.f32.mrf.mxu0
    %v3788 = vadd.f32 %v3699, %v3787
    %3789 = vmatmul.bf16.gmra.mxu0 %v822
    %v3790 = vpop.f32.mrf.mxu0
    %v3791 = vadd.f32 %v3702, %v3790
    %v3792 = vpop.f32.mrf.mxu0
    %v3793 = vadd.f32 %v3704, %v3792
    %3794 = vmatmul.bf16.gmra.mxu0 %v826
    %v3795 = vpop.f32.mrf.mxu0
    %v3796 = vadd.f32 %v3707, %v3795
    %v3797 = vpop.f32.mrf.mxu0
    %v3798 = vadd.f32 %v3709, %v3797
    %3799 = vmatmul.bf16.gmra.mxu0 %v830
    %v3800 = vpop.f32.mrf.mxu0
    %v3801 = vadd.f32 %v3712, %v3800
    %v3802 = vpop.f32.mrf.mxu0
    %v3803 = vadd.f32 %v3714, %v3802
    %3804 = vmatmul.bf16.gmra.mxu0 %v834
    %v3805 = vpop.f32.mrf.mxu0
    %v3806 = vadd.f32 %v3717, %v3805
    %v3807 = vpop.f32.mrf.mxu0
    %v3808 = vadd.f32 %v3719, %v3807
    %3809 = vmatmul.bf16.gmra.mxu0 %v838
    %v3810 = vpop.f32.mrf.mxu0
    %v3811 = vadd.f32 %v3722, %v3810
    %v3812 = vpop.f32.mrf.mxu0
    %v3813 = vadd.f32 %v3724, %v3812
    %3814 = vmatmul.bf16.gmra.mxu0 %v842
    %v3815 = vpop.f32.mrf.mxu0
    %v3816 = vadd.f32 %v3727, %v3815
    %v3817 = vpop.f32.mrf.mxu0
    %v3818 = vadd.f32 %v3729, %v3817
    %3819 = vmatmul.bf16.gmra.mxu0 %v846
    %v3820 = vpop.f32.mrf.mxu0
    %v3821 = vadd.f32 %v3732, %v3820
    %v3822 = vpop.f32.mrf.mxu0
    %v3823 = vadd.f32 %v3734, %v3822
    %3824 = vdwg.mxu0
    %3825 = vmatpush.bf16.msra.mxu0 %v1949
    %3826 = vmatpush.bf16.msra.mxu0 %v1941
    %3827 = vmatpush.bf16.msra.mxu0 %v1933
    %3828 = vmatpush.bf16.msra.mxu0 %v1925
    %3829 = vmatpush.bf16.msra.mxu0 %v1917
    %3830 = vmatpush.bf16.msra.mxu0 %v1909
    %3831 = vmatpush.bf16.msra.mxu0 %v1901
    %3832 = vmatpush.bf16.msra.mxu0 %v1893
    %3833 = vmatmul.bf16.gmra.mxu0 %v783
    %v3834 = vpop.f32.mrf.mxu0
    %v3835 = vadd.f32 %v1109, %v3834
    %v3836 = vpop.f32.mrf.mxu0
    %v3837 = vadd.f32 %v1109, %v3836
    %3838 = vmatmul.bf16.gmra.mxu0 %v787
    %v3839 = vpop.f32.mrf.mxu0
    %v3840 = vadd.f32 %v1109, %v3839
    %v3841 = vpop.f32.mrf.mxu0
    %v3842 = vadd.f32 %v1109, %v3841
    %3843 = vmatmul.bf16.gmra.mxu0 %v791
    %v3844 = vpop.f32.mrf.mxu0
    %v3845 = vadd.f32 %v1109, %v3844
    %v3846 = vpop.f32.mrf.mxu0
    %v3847 = vadd.f32 %v1109, %v3846
    %3848 = vmatmul.bf16.gmra.mxu0 %v795
    %v3849 = vpop.f32.mrf.mxu0
    %v3850 = vadd.f32 %v1109, %v3849
    %v3851 = vpop.f32.mrf.mxu0
    %v3852 = vadd.f32 %v1109, %v3851
    %3853 = vmatmul.bf16.gmra.mxu0 %v799
    %v3854 = vpop.f32.mrf.mxu0
    %v3855 = vadd.f32 %v1109, %v3854
    %v3856 = vpop.f32.mrf.mxu0
    %v3857 = vadd.f32 %v1109, %v3856
    %3858 = vmatmul.bf16.gmra.mxu0 %v803
    %v3859 = vpop.f32.mrf.mxu0
    %v3860 = vadd.f32 %v1109, %v3859
    %v3861 = vpop.f32.mrf.mxu0
    %v3862 = vadd.f32 %v1109, %v3861
    %3863 = vmatmul.bf16.gmra.mxu0 %v807
    %v3864 = vpop.f32.mrf.mxu0
    %v3865 = vadd.f32 %v1109, %v3864
    %v3866 = vpop.f32.mrf.mxu0
    %v3867 = vadd.f32 %v1109, %v3866
    %3868 = vmatmul.bf16.gmra.mxu0 %v811
    %v3869 = vpop.f32.mrf.mxu0
    %v3870 = vadd.f32 %v1109, %v3869
    %v3871 = vpop.f32.mrf.mxu0
    %v3872 = vadd.f32 %v1109, %v3871
    %3873 = vmatmul.bf16.gmra.mxu0 %v815
    %v3874 = vpop.f32.mrf.mxu0
    %v3875 = vadd.f32 %v1109, %v3874
    %v3876 = vpop.f32.mrf.mxu0
    %v3877 = vadd.f32 %v1109, %v3876
    %3878 = vmatmul.bf16.gmra.mxu0 %v819
    %v3879 = vpop.f32.mrf.mxu0
    %v3880 = vadd.f32 %v1109, %v3879
    %v3881 = vpop.f32.mrf.mxu0
    %v3882 = vadd.f32 %v1109, %v3881
    %3883 = vmatmul.bf16.gmra.mxu0 %v823
    %v3884 = vpop.f32.mrf.mxu0
    %v3885 = vadd.f32 %v1109, %v3884
    %v3886 = vpop.f32.mrf.mxu0
    %v3887 = vadd.f32 %v1109, %v3886
    %3888 = vmatmul.bf16.gmra.mxu0 %v827
    %v3889 = vpop.f32.mrf.mxu0
    %v3890 = vadd.f32 %v1109, %v3889
    %v3891 = vpop.f32.mrf.mxu0
    %v3892 = vadd.f32 %v1109, %v3891
    %3893 = vmatmul.bf16.gmra.mxu0 %v831
    %v3894 = vpop.f32.mrf.mxu0
    %v3895 = vadd.f32 %v1109, %v3894
    %v3896 = vpop.f32.mrf.mxu0
    %v3897 = vadd.f32 %v1109, %v3896
    %3898 = vmatmul.bf16.gmra.mxu0 %v835
    %v3899 = vpop.f32.mrf.mxu0
    %v3900 = vadd.f32 %v1109, %v3899
    %v3901 = vpop.f32.mrf.mxu0
    %v3902 = vadd.f32 %v1109, %v3901
    %3903 = vmatmul.bf16.gmra.mxu0 %v839
    %v3904 = vpop.f32.mrf.mxu0
    %v3905 = vadd.f32 %v1109, %v3904
    %v3906 = vpop.f32.mrf.mxu0
    %v3907 = vadd.f32 %v1109, %v3906
    %3908 = vmatmul.bf16.gmra.mxu0 %v843
    %v3909 = vpop.f32.mrf.mxu0
    %v3910 = vadd.f32 %v1109, %v3909
    %v3911 = vpop.f32.mrf.mxu0
    %v3912 = vadd.f32 %v1109, %v3911
    %3913 = vdwg.mxu0
    %3914 = vmatpush.bf16.msra.mxu0 %v2013
    %3915 = vmatpush.bf16.msra.mxu0 %v2005
    %3916 = vmatpush.bf16.msra.mxu0 %v1997
    %3917 = vmatpush.bf16.msra.mxu0 %v1989
    %3918 = vmatpush.bf16.msra.mxu0 %v1981
    %3919 = vmatpush.bf16.msra.mxu0 %v1973
    %3920 = vmatpush.bf16.msra.mxu0 %v1965
    %3921 = vmatpush.bf16.msra.mxu0 %v1957
    %3922 = vmatmul.bf16.gmra.mxu0 %v784
    %v3923 = vpop.f32.mrf.mxu0
    %v3924 = vadd.f32 %v3835, %v3923
    %v3925 = vpop.f32.mrf.mxu0
    %v3926 = vadd.f32 %v3837, %v3925
    %3927 = vmatmul.bf16.gmra.mxu0 %v788
    %v3928 = vpop.f32.mrf.mxu0
    %v3929 = vadd.f32 %v3840, %v3928
    %v3930 = vpop.f32.mrf.mxu0
    %v3931 = vadd.f32 %v3842, %v3930
    %3932 = vmatmul.bf16.gmra.mxu0 %v792
    %v3933 = vpop.f32.mrf.mxu0
    %v3934 = vadd.f32 %v3845, %v3933
    %v3935 = vpop.f32.mrf.mxu0
    %v3936 = vadd.f32 %v3847, %v3935
    %3937 = vmatmul.bf16.gmra.mxu0 %v796
    %v3938 = vpop.f32.mrf.mxu0
    %v3939 = vadd.f32 %v3850, %v3938
    %v3940 = vpop.f32.mrf.mxu0
    %v3941 = vadd.f32 %v3852, %v3940
    %3942 = vmatmul.bf16.gmra.mxu0 %v800
    %v3943 = vpop.f32.mrf.mxu0
    %v3944 = vadd.f32 %v3855, %v3943
    %v3945 = vpop.f32.mrf.mxu0
    %v3946 = vadd.f32 %v3857, %v3945
    %3947 = vmatmul.bf16.gmra.mxu0 %v804
    %v3948 = vpop.f32.mrf.mxu0
    %v3949 = vadd.f32 %v3860, %v3948
    %v3950 = vpop.f32.mrf.mxu0
    %v3951 = vadd.f32 %v3862, %v3950
    %3952 = vmatmul.bf16.gmra.mxu0 %v808
    %v3953 = vpop.f32.mrf.mxu0
    %v3954 = vadd.f32 %v3865, %v3953
    %v3955 = vpop.f32.mrf.mxu0
    %v3956 = vadd.f32 %v3867, %v3955
    %3957 = vmatmul.bf16.gmra.mxu0 %v812
    %v3958 = vpop.f32.mrf.mxu0
    %v3959 = vadd.f32 %v3870, %v3958
    %v3960 = vpop.f32.mrf.mxu0
    %v3961 = vadd.f32 %v3872, %v3960
    %3962 = vmatmul.bf16.gmra.mxu0 %v816
    %v3963 = vpop.f32.mrf.mxu0
    %v3964 = vadd.f32 %v3875, %v3963
    %v3965 = vpop.f32.mrf.mxu0
    %v3966 = vadd.f32 %v3877, %v3965
    %3967 = vmatmul.bf16.gmra.mxu0 %v820
    %v3968 = vpop.f32.mrf.mxu0
    %v3969 = vadd.f32 %v3880, %v3968
    %v3970 = vpop.f32.mrf.mxu0
    %v3971 = vadd.f32 %v3882, %v3970
    %3972 = vmatmul.bf16.gmra.mxu0 %v824
    %v3973 = vpop.f32.mrf.mxu0
    %v3974 = vadd.f32 %v3885, %v3973
    %v3975 = vpop.f32.mrf.mxu0
    %v3976 = vadd.f32 %v3887, %v3975
    %3977 = vmatmul.bf16.gmra.mxu0 %v828
    %v3978 = vpop.f32.mrf.mxu0
    %v3979 = vadd.f32 %v3890, %v3978
    %v3980 = vpop.f32.mrf.mxu0
    %v3981 = vadd.f32 %v3892, %v3980
    %3982 = vmatmul.bf16.gmra.mxu0 %v832
    %v3983 = vpop.f32.mrf.mxu0
    %v3984 = vadd.f32 %v3895, %v3983
    %v3985 = vpop.f32.mrf.mxu0
    %v3986 = vadd.f32 %v3897, %v3985
    %3987 = vmatmul.bf16.gmra.mxu0 %v836
    %v3988 = vpop.f32.mrf.mxu0
    %v3989 = vadd.f32 %v3900, %v3988
    %v3990 = vpop.f32.mrf.mxu0
    %v3991 = vadd.f32 %v3902, %v3990
    %3992 = vmatmul.bf16.gmra.mxu0 %v840
    %v3993 = vpop.f32.mrf.mxu0
    %v3994 = vadd.f32 %v3905, %v3993
    %v3995 = vpop.f32.mrf.mxu0
    %v3996 = vadd.f32 %v3907, %v3995
    %3997 = vmatmul.bf16.gmra.mxu0 %v844
    %v3998 = vpop.f32.mrf.mxu0
    %v3999 = vadd.f32 %v3910, %v3998
    %v4000 = vpop.f32.mrf.mxu0
    %v4001 = vadd.f32 %v3912, %v4000
    %4002 = vdwg.mxu0
    %4003 = vmatpush.bf16.msra.mxu0 %v2077
    %4004 = vmatpush.bf16.msra.mxu0 %v2069
    %4005 = vmatpush.bf16.msra.mxu0 %v2061
    %4006 = vmatpush.bf16.msra.mxu0 %v2053
    %4007 = vmatpush.bf16.msra.mxu0 %v2045
    %4008 = vmatpush.bf16.msra.mxu0 %v2037
    %4009 = vmatpush.bf16.msra.mxu0 %v2029
    %4010 = vmatpush.bf16.msra.mxu0 %v2021
    %4011 = vmatmul.bf16.gmra.mxu0 %v785
    %v4012 = vpop.f32.mrf.mxu0
    %v4013 = vadd.f32 %v3924, %v4012
    %v4014 = vpop.f32.mrf.mxu0
    %v4015 = vadd.f32 %v3926, %v4014
    %4016 = vmatmul.bf16.gmra.mxu0 %v789
    %v4017 = vpop.f32.mrf.mxu0
    %v4018 = vadd.f32 %v3929, %v4017
    %v4019 = vpop.f32.mrf.mxu0
    %v4020 = vadd.f32 %v3931, %v4019
    %4021 = vmatmul.bf16.gmra.mxu0 %v793
    %v4022 = vpop.f32.mrf.mxu0
    %v4023 = vadd.f32 %v3934, %v4022
    %v4024 = vpop.f32.mrf.mxu0
    %v4025 = vadd.f32 %v3936, %v4024
    %4026 = vmatmul.bf16.gmra.mxu0 %v797
    %v4027 = vpop.f32.mrf.mxu0
    %v4028 = vadd.f32 %v3939, %v4027
    %v4029 = vpop.f32.mrf.mxu0
    %v4030 = vadd.f32 %v3941, %v4029
    %4031 = vmatmul.bf16.gmra.mxu0 %v801
    %v4032 = vpop.f32.mrf.mxu0
    %v4033 = vadd.f32 %v3944, %v4032
    %v4034 = vpop.f32.mrf.mxu0
    %v4035 = vadd.f32 %v3946, %v4034
    %4036 = vmatmul.bf16.gmra.mxu0 %v805
    %v4037 = vpop.f32.mrf.mxu0
    %v4038 = vadd.f32 %v3949, %v4037
    %v4039 = vpop.f32.mrf.mxu0
    %v4040 = vadd.f32 %v3951, %v4039
    %4041 = vmatmul.bf16.gmra.mxu0 %v809
    %v4042 = vpop.f32.mrf.mxu0
    %v4043 = vadd.f32 %v3954, %v4042
    %v4044 = vpop.f32.mrf.mxu0
    %v4045 = vadd.f32 %v3956, %v4044
    %4046 = vmatmul.bf16.gmra.mxu0 %v813
    %v4047 = vpop.f32.mrf.mxu0
    %v4048 = vadd.f32 %v3959, %v4047
    %v4049 = vpop.f32.mrf.mxu0
    %v4050 = vadd.f32 %v3961, %v4049
    %4051 = vmatmul.bf16.gmra.mxu0 %v817
    %v4052 = vpop.f32.mrf.mxu0
    %v4053 = vadd.f32 %v3964, %v4052
    %v4054 = vpop.f32.mrf.mxu0
    %v4055 = vadd.f32 %v3966, %v4054
    %4056 = vmatmul.bf16.gmra.mxu0 %v821
    %v4057 = vpop.f32.mrf.mxu0
    %v4058 = vadd.f32 %v3969, %v4057
    %v4059 = vpop.f32.mrf.mxu0
    %v4060 = vadd.f32 %v3971, %v4059
    %4061 = vmatmul.bf16.gmra.mxu0 %v825
    %v4062 = vpop.f32.mrf.mxu0
    %v4063 = vadd.f32 %v3974, %v4062
    %v4064 = vpop.f32.mrf.mxu0
    %v4065 = vadd.f32 %v3976, %v4064
    %4066 = vmatmul.bf16.gmra.mxu0 %v829
    %v4067 = vpop.f32.mrf.mxu0
    %v4068 = vadd.f32 %v3979, %v4067
    %v4069 = vpop.f32.mrf.mxu0
    %v4070 = vadd.f32 %v3981, %v4069
    %4071 = vmatmul.bf16.gmra.mxu0 %v833
    %v4072 = vpop.f32.mrf.mxu0
    %v4073 = vadd.f32 %v3984, %v4072
    %v4074 = vpop.f32.mrf.mxu0
    %v4075 = vadd.f32 %v3986, %v4074
    %4076 = vmatmul.bf16.gmra.mxu0 %v837
    %v4077 = vpop.f32.mrf.mxu0
    %v4078 = vadd.f32 %v3989, %v4077
    %v4079 = vpop.f32.mrf.mxu0
    %v4080 = vadd.f32 %v3991, %v4079
    %4081 = vmatmul.bf16.gmra.mxu0 %v841
    %v4082 = vpop.f32.mrf.mxu0
    %v4083 = vadd.f32 %v3994, %v4082
    %v4084 = vpop.f32.mrf.mxu0
    %v4085 = vadd.f32 %v3996, %v4084
    %4086 = vmatmul.bf16.gmra.mxu0 %v845
    %v4087 = vpop.f32.mrf.mxu0
    %v4088 = vadd.f32 %v3999, %v4087
    %v4089 = vpop.f32.mrf.mxu0
    %v4090 = vadd.f32 %v4001, %v4089
    %4091 = vdwg.mxu0
    %4092 = vmatpush.bf16.msra.mxu0 %v2141
    %4093 = vmatpush.bf16.msra.mxu0 %v2133
    %4094 = vmatpush.bf16.msra.mxu0 %v2125
    %4095 = vmatpush.bf16.msra.mxu0 %v2117
    %4096 = vmatpush.bf16.msra.mxu0 %v2109
    %4097 = vmatpush.bf16.msra.mxu0 %v2101
    %4098 = vmatpush.bf16.msra.mxu0 %v2093
    %4099 = vmatpush.bf16.msra.mxu0 %v2085
    %4100 = vmatmul.bf16.gmra.mxu0 %v786
    %v4101 = vpop.f32.mrf.mxu0
    %v4102 = vadd.f32 %v4013, %v4101
    %v4103 = vpop.f32.mrf.mxu0
    %v4104 = vadd.f32 %v4015, %v4103
    %4105 = vmatmul.bf16.gmra.mxu0 %v790
    %v4106 = vpop.f32.mrf.mxu0
    %v4107 = vadd.f32 %v4018, %v4106
    %v4108 = vpop.f32.mrf.mxu0
    %v4109 = vadd.f32 %v4020, %v4108
    %4110 = vmatmul.bf16.gmra.mxu0 %v794
    %v4111 = vpop.f32.mrf.mxu0
    %v4112 = vadd.f32 %v4023, %v4111
    %v4113 = vpop.f32.mrf.mxu0
    %v4114 = vadd.f32 %v4025, %v4113
    %4115 = vmatmul.bf16.gmra.mxu0 %v798
    %v4116 = vpop.f32.mrf.mxu0
    %v4117 = vadd.f32 %v4028, %v4116
    %v4118 = vpop.f32.mrf.mxu0
    %v4119 = vadd.f32 %v4030, %v4118
    %4120 = vmatmul.bf16.gmra.mxu0 %v802
    %v4121 = vpop.f32.mrf.mxu0
    %v4122 = vadd.f32 %v4033, %v4121
    %v4123 = vpop.f32.mrf.mxu0
    %v4124 = vadd.f32 %v4035, %v4123
    %4125 = vmatmul.bf16.gmra.mxu0 %v806
    %v4126 = vpop.f32.mrf.mxu0
    %v4127 = vadd.f32 %v4038, %v4126
    %v4128 = vpop.f32.mrf.mxu0
    %v4129 = vadd.f32 %v4040, %v4128
    %4130 = vmatmul.bf16.gmra.mxu0 %v810
    %v4131 = vpop.f32.mrf.mxu0
    %v4132 = vadd.f32 %v4043, %v4131
    %v4133 = vpop.f32.mrf.mxu0
    %v4134 = vadd.f32 %v4045, %v4133
    %4135 = vmatmul.bf16.gmra.mxu0 %v814
    %v4136 = vpop.f32.mrf.mxu0
    %v4137 = vadd.f32 %v4048, %v4136
    %v4138 = vpop.f32.mrf.mxu0
    %v4139 = vadd.f32 %v4050, %v4138
    %4140 = vmatmul.bf16.gmra.mxu0 %v818
    %v4141 = vpop.f32.mrf.mxu0
    %v4142 = vadd.f32 %v4053, %v4141
    %v4143 = vpop.f32.mrf.mxu0
    %v4144 = vadd.f32 %v4055, %v4143
    %4145 = vmatmul.bf16.gmra.mxu0 %v822
    %v4146 = vpop.f32.mrf.mxu0
    %v4147 = vadd.f32 %v4058, %v4146
    %v4148 = vpop.f32.mrf.mxu0
    %v4149 = vadd.f32 %v4060, %v4148
    %4150 = vmatmul.bf16.gmra.mxu0 %v826
    %v4151 = vpop.f32.mrf.mxu0
    %v4152 = vadd.f32 %v4063, %v4151
    %v4153 = vpop.f32.mrf.mxu0
    %v4154 = vadd.f32 %v4065, %v4153
    %4155 = vmatmul.bf16.gmra.mxu0 %v830
    %v4156 = vpop.f32.mrf.mxu0
    %v4157 = vadd.f32 %v4068, %v4156
    %v4158 = vpop.f32.mrf.mxu0
    %v4159 = vadd.f32 %v4070, %v4158
    %4160 = vmatmul.bf16.gmra.mxu0 %v834
    %v4161 = vpop.f32.mrf.mxu0
    %v4162 = vadd.f32 %v4073, %v4161
    %v4163 = vpop.f32.mrf.mxu0
    %v4164 = vadd.f32 %v4075, %v4163
    %4165 = vmatmul.bf16.gmra.mxu0 %v838
    %v4166 = vpop.f32.mrf.mxu0
    %v4167 = vadd.f32 %v4078, %v4166
    %v4168 = vpop.f32.mrf.mxu0
    %v4169 = vadd.f32 %v4080, %v4168
    %4170 = vmatmul.bf16.gmra.mxu0 %v842
    %v4171 = vpop.f32.mrf.mxu0
    %v4172 = vadd.f32 %v4083, %v4171
    %v4173 = vpop.f32.mrf.mxu0
    %v4174 = vadd.f32 %v4085, %v4173
    %4175 = vmatmul.bf16.gmra.mxu0 %v846
    %v4176 = vpop.f32.mrf.mxu0
    %v4177 = vadd.f32 %v4088, %v4176
    %v4178 = vpop.f32.mrf.mxu0
    %v4179 = vadd.f32 %v4090, %v4178
    %4180 = vdwg.mxu0
    %4181 = vmatpush.bf16.msra.mxu0 %v1950
    %4182 = vmatpush.bf16.msra.mxu0 %v1942
    %4183 = vmatpush.bf16.msra.mxu0 %v1934
    %4184 = vmatpush.bf16.msra.mxu0 %v1926
    %4185 = vmatpush.bf16.msra.mxu0 %v1918
    %4186 = vmatpush.bf16.msra.mxu0 %v1910
    %4187 = vmatpush.bf16.msra.mxu0 %v1902
    %4188 = vmatpush.bf16.msra.mxu0 %v1894
    %4189 = vmatmul.bf16.gmra.mxu0 %v783
    %v4190 = vpop.f32.mrf.mxu0
    %v4191 = vadd.f32 %v1110, %v4190
    %v4192 = vpop.f32.mrf.mxu0
    %v4193 = vadd.f32 %v1110, %v4192
    %4194 = vmatmul.bf16.gmra.mxu0 %v787
    %v4195 = vpop.f32.mrf.mxu0
    %v4196 = vadd.f32 %v1110, %v4195
    %v4197 = vpop.f32.mrf.mxu0
    %v4198 = vadd.f32 %v1110, %v4197
    %4199 = vmatmul.bf16.gmra.mxu0 %v791
    %v4200 = vpop.f32.mrf.mxu0
    %v4201 = vadd.f32 %v1110, %v4200
    %v4202 = vpop.f32.mrf.mxu0
    %v4203 = vadd.f32 %v1110, %v4202
    %4204 = vmatmul.bf16.gmra.mxu0 %v795
    %v4205 = vpop.f32.mrf.mxu0
    %v4206 = vadd.f32 %v1110, %v4205
    %v4207 = vpop.f32.mrf.mxu0
    %v4208 = vadd.f32 %v1110, %v4207
    %4209 = vmatmul.bf16.gmra.mxu0 %v799
    %v4210 = vpop.f32.mrf.mxu0
    %v4211 = vadd.f32 %v1110, %v4210
    %v4212 = vpop.f32.mrf.mxu0
    %v4213 = vadd.f32 %v1110, %v4212
    %4214 = vmatmul.bf16.gmra.mxu0 %v803
    %v4215 = vpop.f32.mrf.mxu0
    %v4216 = vadd.f32 %v1110, %v4215
    %v4217 = vpop.f32.mrf.mxu0
    %v4218 = vadd.f32 %v1110, %v4217
    %4219 = vmatmul.bf16.gmra.mxu0 %v807
    %v4220 = vpop.f32.mrf.mxu0
    %v4221 = vadd.f32 %v1110, %v4220
    %v4222 = vpop.f32.mrf.mxu0
    %v4223 = vadd.f32 %v1110, %v4222
    %4224 = vmatmul.bf16.gmra.mxu0 %v811
    %v4225 = vpop.f32.mrf.mxu0
    %v4226 = vadd.f32 %v1110, %v4225
    %v4227 = vpop.f32.mrf.mxu0
    %v4228 = vadd.f32 %v1110, %v4227
    %4229 = vmatmul.bf16.gmra.mxu0 %v815
    %v4230 = vpop.f32.mrf.mxu0
    %v4231 = vadd.f32 %v1110, %v4230
    %v4232 = vpop.f32.mrf.mxu0
    %v4233 = vadd.f32 %v1110, %v4232
    %4234 = vmatmul.bf16.gmra.mxu0 %v819
    %v4235 = vpop.f32.mrf.mxu0
    %v4236 = vadd.f32 %v1110, %v4235
    %v4237 = vpop.f32.mrf.mxu0
    %v4238 = vadd.f32 %v1110, %v4237
    %4239 = vmatmul.bf16.gmra.mxu0 %v823
    %v4240 = vpop.f32.mrf.mxu0
    %v4241 = vadd.f32 %v1110, %v4240
    %v4242 = vpop.f32.mrf.mxu0
    %v4243 = vadd.f32 %v1110, %v4242
    %4244 = vmatmul.bf16.gmra.mxu0 %v827
    %v4245 = vpop.f32.mrf.mxu0
    %v4246 = vadd.f32 %v1110, %v4245
    %v4247 = vpop.f32.mrf.mxu0
    %v4248 = vadd.f32 %v1110, %v4247
    %4249 = vmatmul.bf16.gmra.mxu0 %v831
    %v4250 = vpop.f32.mrf.mxu0
    %v4251 = vadd.f32 %v1110, %v4250
    %v4252 = vpop.f32.mrf.mxu0
    %v4253 = vadd.f32 %v1110, %v4252
    %4254 = vmatmul.bf16.gmra.mxu0 %v835
    %v4255 = vpop.f32.mrf.mxu0
    %v4256 = vadd.f32 %v1110, %v4255
    %v4257 = vpop.f32.mrf.mxu0
    %v4258 = vadd.f32 %v1110, %v4257
    %4259 = vmatmul.bf16.gmra.mxu0 %v839
    %v4260 = vpop.f32.mrf.mxu0
    %v4261 = vadd.f32 %v1110, %v4260
    %v4262 = vpop.f32.mrf.mxu0
    %v4263 = vadd.f32 %v1110, %v4262
    %4264 = vmatmul.bf16.gmra.mxu0 %v843
    %v4265 = vpop.f32.mrf.mxu0
    %v4266 = vadd.f32 %v1110, %v4265
    %v4267 = vpop.f32.mrf.mxu0
    %v4268 = vadd.f32 %v1110, %v4267
    %4269 = vdwg.mxu0
    %4270 = vmatpush.bf16.msra.mxu0 %v2014
    %4271 = vmatpush.bf16.msra.mxu0 %v2006
    %4272 = vmatpush.bf16.msra.mxu0 %v1998
    %4273 = vmatpush.bf16.msra.mxu0 %v1990
    %4274 = vmatpush.bf16.msra.mxu0 %v1982
    %4275 = vmatpush.bf16.msra.mxu0 %v1974
    %4276 = vmatpush.bf16.msra.mxu0 %v1966
    %4277 = vmatpush.bf16.msra.mxu0 %v1958
    %4278 = vmatmul.bf16.gmra.mxu0 %v784
    %v4279 = vpop.f32.mrf.mxu0
    %v4280 = vadd.f32 %v4191, %v4279
    %v4281 = vpop.f32.mrf.mxu0
    %v4282 = vadd.f32 %v4193, %v4281
    %4283 = vmatmul.bf16.gmra.mxu0 %v788
    %v4284 = vpop.f32.mrf.mxu0
    %v4285 = vadd.f32 %v4196, %v4284
    %v4286 = vpop.f32.mrf.mxu0
    %v4287 = vadd.f32 %v4198, %v4286
    %4288 = vmatmul.bf16.gmra.mxu0 %v792
    %v4289 = vpop.f32.mrf.mxu0
    %v4290 = vadd.f32 %v4201, %v4289
    %v4291 = vpop.f32.mrf.mxu0
    %v4292 = vadd.f32 %v4203, %v4291
    %4293 = vmatmul.bf16.gmra.mxu0 %v796
    %v4294 = vpop.f32.mrf.mxu0
    %v4295 = vadd.f32 %v4206, %v4294
    %v4296 = vpop.f32.mrf.mxu0
    %v4297 = vadd.f32 %v4208, %v4296
    %4298 = vmatmul.bf16.gmra.mxu0 %v800
    %v4299 = vpop.f32.mrf.mxu0
    %v4300 = vadd.f32 %v4211, %v4299
    %v4301 = vpop.f32.mrf.mxu0
    %v4302 = vadd.f32 %v4213, %v4301
    %4303 = vmatmul.bf16.gmra.mxu0 %v804
    %v4304 = vpop.f32.mrf.mxu0
    %v4305 = vadd.f32 %v4216, %v4304
    %v4306 = vpop.f32.mrf.mxu0
    %v4307 = vadd.f32 %v4218, %v4306
    %4308 = vmatmul.bf16.gmra.mxu0 %v808
    %v4309 = vpop.f32.mrf.mxu0
    %v4310 = vadd.f32 %v4221, %v4309
    %v4311 = vpop.f32.mrf.mxu0
    %v4312 = vadd.f32 %v4223, %v4311
    %4313 = vmatmul.bf16.gmra.mxu0 %v812
    %v4314 = vpop.f32.mrf.mxu0
    %v4315 = vadd.f32 %v4226, %v4314
    %v4316 = vpop.f32.mrf.mxu0
    %v4317 = vadd.f32 %v4228, %v4316
    %4318 = vmatmul.bf16.gmra.mxu0 %v816
    %v4319 = vpop.f32.mrf.mxu0
    %v4320 = vadd.f32 %v4231, %v4319
    %v4321 = vpop.f32.mrf.mxu0
    %v4322 = vadd.f32 %v4233, %v4321
    %4323 = vmatmul.bf16.gmra.mxu0 %v820
    %v4324 = vpop.f32.mrf.mxu0
    %v4325 = vadd.f32 %v4236, %v4324
    %v4326 = vpop.f32.mrf.mxu0
    %v4327 = vadd.f32 %v4238, %v4326
    %4328 = vmatmul.bf16.gmra.mxu0 %v824
    %v4329 = vpop.f32.mrf.mxu0
    %v4330 = vadd.f32 %v4241, %v4329
    %v4331 = vpop.f32.mrf.mxu0
    %v4332 = vadd.f32 %v4243, %v4331
    %4333 = vmatmul.bf16.gmra.mxu0 %v828
    %v4334 = vpop.f32.mrf.mxu0
    %v4335 = vadd.f32 %v4246, %v4334
    %v4336 = vpop.f32.mrf.mxu0
    %v4337 = vadd.f32 %v4248, %v4336
    %4338 = vmatmul.bf16.gmra.mxu0 %v832
    %v4339 = vpop.f32.mrf.mxu0
    %v4340 = vadd.f32 %v4251, %v4339
    %v4341 = vpop.f32.mrf.mxu0
    %v4342 = vadd.f32 %v4253, %v4341
    %4343 = vmatmul.bf16.gmra.mxu0 %v836
    %v4344 = vpop.f32.mrf.mxu0
    %v4345 = vadd.f32 %v4256, %v4344
    %v4346 = vpop.f32.mrf.mxu0
    %v4347 = vadd.f32 %v4258, %v4346
    %4348 = vmatmul.bf16.gmra.mxu0 %v840
    %v4349 = vpop.f32.mrf.mxu0
    %v4350 = vadd.f32 %v4261, %v4349
    %v4351 = vpop.f32.mrf.mxu0
    %v4352 = vadd.f32 %v4263, %v4351
    %4353 = vmatmul.bf16.gmra.mxu0 %v844
    %v4354 = vpop.f32.mrf.mxu0
    %v4355 = vadd.f32 %v4266, %v4354
    %v4356 = vpop.f32.mrf.mxu0
    %v4357 = vadd.f32 %v4268, %v4356
    %4358 = vdwg.mxu0
    %4359 = vmatpush.bf16.msra.mxu0 %v2078
    %4360 = vmatpush.bf16.msra.mxu0 %v2070
    %4361 = vmatpush.bf16.msra.mxu0 %v2062
    %4362 = vmatpush.bf16.msra.mxu0 %v2054
    %4363 = vmatpush.bf16.msra.mxu0 %v2046
    %4364 = vmatpush.bf16.msra.mxu0 %v2038
    %4365 = vmatpush.bf16.msra.mxu0 %v2030
    %4366 = vmatpush.bf16.msra.mxu0 %v2022
    %4367 = vmatmul.bf16.gmra.mxu0 %v785
    %v4368 = vpop.f32.mrf.mxu0
    %v4369 = vadd.f32 %v4280, %v4368
    %v4370 = vpop.f32.mrf.mxu0
    %v4371 = vadd.f32 %v4282, %v4370
    %4372 = vmatmul.bf16.gmra.mxu0 %v789
    %v4373 = vpop.f32.mrf.mxu0
    %v4374 = vadd.f32 %v4285, %v4373
    %v4375 = vpop.f32.mrf.mxu0
    %v4376 = vadd.f32 %v4287, %v4375
    %4377 = vmatmul.bf16.gmra.mxu0 %v793
    %v4378 = vpop.f32.mrf.mxu0
    %v4379 = vadd.f32 %v4290, %v4378
    %v4380 = vpop.f32.mrf.mxu0
    %v4381 = vadd.f32 %v4292, %v4380
    %4382 = vmatmul.bf16.gmra.mxu0 %v797
    %v4383 = vpop.f32.mrf.mxu0
    %v4384 = vadd.f32 %v4295, %v4383
    %v4385 = vpop.f32.mrf.mxu0
    %v4386 = vadd.f32 %v4297, %v4385
    %4387 = vmatmul.bf16.gmra.mxu0 %v801
    %v4388 = vpop.f32.mrf.mxu0
    %v4389 = vadd.f32 %v4300, %v4388
    %v4390 = vpop.f32.mrf.mxu0
    %v4391 = vadd.f32 %v4302, %v4390
    %4392 = vmatmul.bf16.gmra.mxu0 %v805
    %v4393 = vpop.f32.mrf.mxu0
    %v4394 = vadd.f32 %v4305, %v4393
    %v4395 = vpop.f32.mrf.mxu0
    %v4396 = vadd.f32 %v4307, %v4395
    %4397 = vmatmul.bf16.gmra.mxu0 %v809
    %v4398 = vpop.f32.mrf.mxu0
    %v4399 = vadd.f32 %v4310, %v4398
    %v4400 = vpop.f32.mrf.mxu0
    %v4401 = vadd.f32 %v4312, %v4400
    %4402 = vmatmul.bf16.gmra.mxu0 %v813
    %v4403 = vpop.f32.mrf.mxu0
    %v4404 = vadd.f32 %v4315, %v4403
    %v4405 = vpop.f32.mrf.mxu0
    %v4406 = vadd.f32 %v4317, %v4405
    %4407 = vmatmul.bf16.gmra.mxu0 %v817
    %v4408 = vpop.f32.mrf.mxu0
    %v4409 = vadd.f32 %v4320, %v4408
    %v4410 = vpop.f32.mrf.mxu0
    %v4411 = vadd.f32 %v4322, %v4410
    %4412 = vmatmul.bf16.gmra.mxu0 %v821
    %v4413 = vpop.f32.mrf.mxu0
    %v4414 = vadd.f32 %v4325, %v4413
    %v4415 = vpop.f32.mrf.mxu0
    %v4416 = vadd.f32 %v4327, %v4415
    %4417 = vmatmul.bf16.gmra.mxu0 %v825
    %v4418 = vpop.f32.mrf.mxu0
    %v4419 = vadd.f32 %v4330, %v4418
    %v4420 = vpop.f32.mrf.mxu0
    %v4421 = vadd.f32 %v4332, %v4420
    %4422 = vmatmul.bf16.gmra.mxu0 %v829
    %v4423 = vpop.f32.mrf.mxu0
    %v4424 = vadd.f32 %v4335, %v4423
    %v4425 = vpop.f32.mrf.mxu0
    %v4426 = vadd.f32 %v4337, %v4425
    %4427 = vmatmul.bf16.gmra.mxu0 %v833
    %v4428 = vpop.f32.mrf.mxu0
    %v4429 = vadd.f32 %v4340, %v4428
    %v4430 = vpop.f32.mrf.mxu0
    %v4431 = vadd.f32 %v4342, %v4430
    %4432 = vmatmul.bf16.gmra.mxu0 %v837
    %v4433 = vpop.f32.mrf.mxu0
    %v4434 = vadd.f32 %v4345, %v4433
    %v4435 = vpop.f32.mrf.mxu0
    %v4436 = vadd.f32 %v4347, %v4435
    %4437 = vmatmul.bf16.gmra.mxu0 %v841
    %v4438 = vpop.f32.mrf.mxu0
    %v4439 = vadd.f32 %v4350, %v4438
    %v4440 = vpop.f32.mrf.mxu0
    %v4441 = vadd.f32 %v4352, %v4440
    %4442 = vmatmul.bf16.gmra.mxu0 %v845
    %v4443 = vpop.f32.mrf.mxu0
    %v4444 = vadd.f32 %v4355, %v4443
    %v4445 = vpop.f32.mrf.mxu0
    %v4446 = vadd.f32 %v4357, %v4445
    %4447 = vdwg.mxu0
    %4448 = vmatpush.bf16.msra.mxu0 %v2142
    %4449 = vmatpush.bf16.msra.mxu0 %v2134
    %4450 = vmatpush.bf16.msra.mxu0 %v2126
    %4451 = vmatpush.bf16.msra.mxu0 %v2118
    %4452 = vmatpush.bf16.msra.mxu0 %v2110
    %4453 = vmatpush.bf16.msra.mxu0 %v2102
    %4454 = vmatpush.bf16.msra.mxu0 %v2094
    %4455 = vmatpush.bf16.msra.mxu0 %v2086
    %4456 = vmatmul.bf16.gmra.mxu0 %v786
    %v4457 = vpop.f32.mrf.mxu0
    %v4458 = vadd.f32 %v4369, %v4457
    %v4459 = vpop.f32.mrf.mxu0
    %v4460 = vadd.f32 %v4371, %v4459
    %4461 = vmatmul.bf16.gmra.mxu0 %v790
    %v4462 = vpop.f32.mrf.mxu0
    %v4463 = vadd.f32 %v4374, %v4462
    %v4464 = vpop.f32.mrf.mxu0
    %v4465 = vadd.f32 %v4376, %v4464
    %4466 = vmatmul.bf16.gmra.mxu0 %v794
    %v4467 = vpop.f32.mrf.mxu0
    %v4468 = vadd.f32 %v4379, %v4467
    %v4469 = vpop.f32.mrf.mxu0
    %v4470 = vadd.f32 %v4381, %v4469
    %4471 = vmatmul.bf16.gmra.mxu0 %v798
    %v4472 = vpop.f32.mrf.mxu0
    %v4473 = vadd.f32 %v4384, %v4472
    %v4474 = vpop.f32.mrf.mxu0
    %v4475 = vadd.f32 %v4386, %v4474
    %4476 = vmatmul.bf16.gmra.mxu0 %v802
    %v4477 = vpop.f32.mrf.mxu0
    %v4478 = vadd.f32 %v4389, %v4477
    %v4479 = vpop.f32.mrf.mxu0
    %v4480 = vadd.f32 %v4391, %v4479
    %4481 = vmatmul.bf16.gmra.mxu0 %v806
    %v4482 = vpop.f32.mrf.mxu0
    %v4483 = vadd.f32 %v4394, %v4482
    %v4484 = vpop.f32.mrf.mxu0
    %v4485 = vadd.f32 %v4396, %v4484
    %4486 = vmatmul.bf16.gmra.mxu0 %v810
    %v4487 = vpop.f32.mrf.mxu0
    %v4488 = vadd.f32 %v4399, %v4487
    %v4489 = vpop.f32.mrf.mxu0
    %v4490 = vadd.f32 %v4401, %v4489
    %4491 = vmatmul.bf16.gmra.mxu0 %v814
    %v4492 = vpop.f32.mrf.mxu0
    %v4493 = vadd.f32 %v4404, %v4492
    %v4494 = vpop.f32.mrf.mxu0
    %v4495 = vadd.f32 %v4406, %v4494
    %4496 = vmatmul.bf16.gmra.mxu0 %v818
    %v4497 = vpop.f32.mrf.mxu0
    %v4498 = vadd.f32 %v4409, %v4497
    %v4499 = vpop.f32.mrf.mxu0
    %v4500 = vadd.f32 %v4411, %v4499
    %4501 = vmatmul.bf16.gmra.mxu0 %v822
    %v4502 = vpop.f32.mrf.mxu0
    %v4503 = vadd.f32 %v4414, %v4502
    %v4504 = vpop.f32.mrf.mxu0
    %v4505 = vadd.f32 %v4416, %v4504
    %4506 = vmatmul.bf16.gmra.mxu0 %v826
    %v4507 = vpop.f32.mrf.mxu0
    %v4508 = vadd.f32 %v4419, %v4507
    %v4509 = vpop.f32.mrf.mxu0
    %v4510 = vadd.f32 %v4421, %v4509
    %4511 = vmatmul.bf16.gmra.mxu0 %v830
    %v4512 = vpop.f32.mrf.mxu0
    %v4513 = vadd.f32 %v4424, %v4512
    %v4514 = vpop.f32.mrf.mxu0
    %v4515 = vadd.f32 %v4426, %v4514
    %4516 = vmatmul.bf16.gmra.mxu0 %v834
    %v4517 = vpop.f32.mrf.mxu0
    %v4518 = vadd.f32 %v4429, %v4517
    %v4519 = vpop.f32.mrf.mxu0
    %v4520 = vadd.f32 %v4431, %v4519
    %4521 = vmatmul.bf16.gmra.mxu0 %v838
    %v4522 = vpop.f32.mrf.mxu0
    %v4523 = vadd.f32 %v4434, %v4522
    %v4524 = vpop.f32.mrf.mxu0
    %v4525 = vadd.f32 %v4436, %v4524
    %4526 = vmatmul.bf16.gmra.mxu0 %v842
    %v4527 = vpop.f32.mrf.mxu0
    %v4528 = vadd.f32 %v4439, %v4527
    %v4529 = vpop.f32.mrf.mxu0
    %v4530 = vadd.f32 %v4441, %v4529
    %4531 = vmatmul.bf16.gmra.mxu0 %v846
    %v4532 = vpop.f32.mrf.mxu0
    %v4533 = vadd.f32 %v4444, %v4532
    %v4534 = vpop.f32.mrf.mxu0
    %v4535 = vadd.f32 %v4446, %v4534
    %4536 = vdwg.mxu0
    %4537 = vmatpush.bf16.msra.mxu0 %v1951
    %4538 = vmatpush.bf16.msra.mxu0 %v1943
    %4539 = vmatpush.bf16.msra.mxu0 %v1935
    %4540 = vmatpush.bf16.msra.mxu0 %v1927
    %4541 = vmatpush.bf16.msra.mxu0 %v1919
    %4542 = vmatpush.bf16.msra.mxu0 %v1911
    %4543 = vmatpush.bf16.msra.mxu0 %v1903
    %4544 = vmatpush.bf16.msra.mxu0 %v1895
    %4545 = vmatmul.bf16.gmra.mxu0 %v783
    %v4546 = vpop.f32.mrf.mxu0
    %v4547 = vadd.f32 %v1111, %v4546
    %v4548 = vpop.f32.mrf.mxu0
    %v4549 = vadd.f32 %v1111, %v4548
    %4550 = vmatmul.bf16.gmra.mxu0 %v787
    %v4551 = vpop.f32.mrf.mxu0
    %v4552 = vadd.f32 %v1111, %v4551
    %v4553 = vpop.f32.mrf.mxu0
    %v4554 = vadd.f32 %v1111, %v4553
    %4555 = vmatmul.bf16.gmra.mxu0 %v791
    %v4556 = vpop.f32.mrf.mxu0
    %v4557 = vadd.f32 %v1111, %v4556
    %v4558 = vpop.f32.mrf.mxu0
    %v4559 = vadd.f32 %v1111, %v4558
    %4560 = vmatmul.bf16.gmra.mxu0 %v795
    %v4561 = vpop.f32.mrf.mxu0
    %v4562 = vadd.f32 %v1111, %v4561
    %v4563 = vpop.f32.mrf.mxu0
    %v4564 = vadd.f32 %v1111, %v4563
    %4565 = vmatmul.bf16.gmra.mxu0 %v799
    %v4566 = vpop.f32.mrf.mxu0
    %v4567 = vadd.f32 %v1111, %v4566
    %v4568 = vpop.f32.mrf.mxu0
    %v4569 = vadd.f32 %v1111, %v4568
    %4570 = vmatmul.bf16.gmra.mxu0 %v803
    %v4571 = vpop.f32.mrf.mxu0
    %v4572 = vadd.f32 %v1111, %v4571
    %v4573 = vpop.f32.mrf.mxu0
    %v4574 = vadd.f32 %v1111, %v4573
    %4575 = vmatmul.bf16.gmra.mxu0 %v807
    %v4576 = vpop.f32.mrf.mxu0
    %v4577 = vadd.f32 %v1111, %v4576
    %v4578 = vpop.f32.mrf.mxu0
    %v4579 = vadd.f32 %v1111, %v4578
    %4580 = vmatmul.bf16.gmra.mxu0 %v811
    %v4581 = vpop.f32.mrf.mxu0
    %v4582 = vadd.f32 %v1111, %v4581
    %v4583 = vpop.f32.mrf.mxu0
    %v4584 = vadd.f32 %v1111, %v4583
    %4585 = vmatmul.bf16.gmra.mxu0 %v815
    %v4586 = vpop.f32.mrf.mxu0
    %v4587 = vadd.f32 %v1111, %v4586
    %v4588 = vpop.f32.mrf.mxu0
    %v4589 = vadd.f32 %v1111, %v4588
    %4590 = vmatmul.bf16.gmra.mxu0 %v819
    %v4591 = vpop.f32.mrf.mxu0
    %v4592 = vadd.f32 %v1111, %v4591
    %v4593 = vpop.f32.mrf.mxu0
    %v4594 = vadd.f32 %v1111, %v4593
    %4595 = vmatmul.bf16.gmra.mxu0 %v823
    %v4596 = vpop.f32.mrf.mxu0
    %v4597 = vadd.f32 %v1111, %v4596
    %v4598 = vpop.f32.mrf.mxu0
    %v4599 = vadd.f32 %v1111, %v4598
    %4600 = vmatmul.bf16.gmra.mxu0 %v827
    %v4601 = vpop.f32.mrf.mxu0
    %v4602 = vadd.f32 %v1111, %v4601
    %v4603 = vpop.f32.mrf.mxu0
    %v4604 = vadd.f32 %v1111, %v4603
    %4605 = vmatmul.bf16.gmra.mxu0 %v831
    %v4606 = vpop.f32.mrf.mxu0
    %v4607 = vadd.f32 %v1111, %v4606
    %v4608 = vpop.f32.mrf.mxu0
    %v4609 = vadd.f32 %v1111, %v4608
    %4610 = vmatmul.bf16.gmra.mxu0 %v835
    %v4611 = vpop.f32.mrf.mxu0
    %v4612 = vadd.f32 %v1111, %v4611
    %v4613 = vpop.f32.mrf.mxu0
    %v4614 = vadd.f32 %v1111, %v4613
    %4615 = vmatmul.bf16.gmra.mxu0 %v839
    %v4616 = vpop.f32.mrf.mxu0
    %v4617 = vadd.f32 %v1111, %v4616
    %v4618 = vpop.f32.mrf.mxu0
    %v4619 = vadd.f32 %v1111, %v4618
    %4620 = vmatmul.bf16.gmra.mxu0 %v843
    %v4621 = vpop.f32.mrf.mxu0
    %v4622 = vadd.f32 %v1111, %v4621
    %v4623 = vpop.f32.mrf.mxu0
    %v4624 = vadd.f32 %v1111, %v4623
    %4625 = vdwg.mxu0
    %4626 = vmatpush.bf16.msra.mxu0 %v2015
    %4627 = vmatpush.bf16.msra.mxu0 %v2007
    %4628 = vmatpush.bf16.msra.mxu0 %v1999
    %4629 = vmatpush.bf16.msra.mxu0 %v1991
    %4630 = vmatpush.bf16.msra.mxu0 %v1983
    %4631 = vmatpush.bf16.msra.mxu0 %v1975
    %4632 = vmatpush.bf16.msra.mxu0 %v1967
    %4633 = vmatpush.bf16.msra.mxu0 %v1959
    %4634 = vmatmul.bf16.gmra.mxu0 %v784
    %v4635 = vpop.f32.mrf.mxu0
    %v4636 = vadd.f32 %v4547, %v4635
    %v4637 = vpop.f32.mrf.mxu0
    %v4638 = vadd.f32 %v4549, %v4637
    %4639 = vmatmul.bf16.gmra.mxu0 %v788
    %v4640 = vpop.f32.mrf.mxu0
    %v4641 = vadd.f32 %v4552, %v4640
    %v4642 = vpop.f32.mrf.mxu0
    %v4643 = vadd.f32 %v4554, %v4642
    %4644 = vmatmul.bf16.gmra.mxu0 %v792
    %v4645 = vpop.f32.mrf.mxu0
    %v4646 = vadd.f32 %v4557, %v4645
    %v4647 = vpop.f32.mrf.mxu0
    %v4648 = vadd.f32 %v4559, %v4647
    %4649 = vmatmul.bf16.gmra.mxu0 %v796
    %v4650 = vpop.f32.mrf.mxu0
    %v4651 = vadd.f32 %v4562, %v4650
    %v4652 = vpop.f32.mrf.mxu0
    %v4653 = vadd.f32 %v4564, %v4652
    %4654 = vmatmul.bf16.gmra.mxu0 %v800
    %v4655 = vpop.f32.mrf.mxu0
    %v4656 = vadd.f32 %v4567, %v4655
    %v4657 = vpop.f32.mrf.mxu0
    %v4658 = vadd.f32 %v4569, %v4657
    %4659 = vmatmul.bf16.gmra.mxu0 %v804
    %v4660 = vpop.f32.mrf.mxu0
    %v4661 = vadd.f32 %v4572, %v4660
    %v4662 = vpop.f32.mrf.mxu0
    %v4663 = vadd.f32 %v4574, %v4662
    %4664 = vmatmul.bf16.gmra.mxu0 %v808
    %v4665 = vpop.f32.mrf.mxu0
    %v4666 = vadd.f32 %v4577, %v4665
    %v4667 = vpop.f32.mrf.mxu0
    %v4668 = vadd.f32 %v4579, %v4667
    %4669 = vmatmul.bf16.gmra.mxu0 %v812
    %v4670 = vpop.f32.mrf.mxu0
    %v4671 = vadd.f32 %v4582, %v4670
    %v4672 = vpop.f32.mrf.mxu0
    %v4673 = vadd.f32 %v4584, %v4672
    %4674 = vmatmul.bf16.gmra.mxu0 %v816
    %v4675 = vpop.f32.mrf.mxu0
    %v4676 = vadd.f32 %v4587, %v4675
    %v4677 = vpop.f32.mrf.mxu0
    %v4678 = vadd.f32 %v4589, %v4677
    %4679 = vmatmul.bf16.gmra.mxu0 %v820
    %v4680 = vpop.f32.mrf.mxu0
    %v4681 = vadd.f32 %v4592, %v4680
    %v4682 = vpop.f32.mrf.mxu0
    %v4683 = vadd.f32 %v4594, %v4682
    %4684 = vmatmul.bf16.gmra.mxu0 %v824
    %v4685 = vpop.f32.mrf.mxu0
    %v4686 = vadd.f32 %v4597, %v4685
    %v4687 = vpop.f32.mrf.mxu0
    %v4688 = vadd.f32 %v4599, %v4687
    %4689 = vmatmul.bf16.gmra.mxu0 %v828
    %v4690 = vpop.f32.mrf.mxu0
    %v4691 = vadd.f32 %v4602, %v4690
    %v4692 = vpop.f32.mrf.mxu0
    %v4693 = vadd.f32 %v4604, %v4692
    %4694 = vmatmul.bf16.gmra.mxu0 %v832
    %v4695 = vpop.f32.mrf.mxu0
    %v4696 = vadd.f32 %v4607, %v4695
    %v4697 = vpop.f32.mrf.mxu0
    %v4698 = vadd.f32 %v4609, %v4697
    %4699 = vmatmul.bf16.gmra.mxu0 %v836
    %v4700 = vpop.f32.mrf.mxu0
    %v4701 = vadd.f32 %v4612, %v4700
    %v4702 = vpop.f32.mrf.mxu0
    %v4703 = vadd.f32 %v4614, %v4702
    %4704 = vmatmul.bf16.gmra.mxu0 %v840
    %v4705 = vpop.f32.mrf.mxu0
    %v4706 = vadd.f32 %v4617, %v4705
    %v4707 = vpop.f32.mrf.mxu0
    %v4708 = vadd.f32 %v4619, %v4707
    %4709 = vmatmul.bf16.gmra.mxu0 %v844
    %v4710 = vpop.f32.mrf.mxu0
    %v4711 = vadd.f32 %v4622, %v4710
    %v4712 = vpop.f32.mrf.mxu0
    %v4713 = vadd.f32 %v4624, %v4712
    %4714 = vdwg.mxu0
    %4715 = vmatpush.bf16.msra.mxu0 %v2079
    %4716 = vmatpush.bf16.msra.mxu0 %v2071
    %4717 = vmatpush.bf16.msra.mxu0 %v2063
    %4718 = vmatpush.bf16.msra.mxu0 %v2055
    %4719 = vmatpush.bf16.msra.mxu0 %v2047
    %4720 = vmatpush.bf16.msra.mxu0 %v2039
    %4721 = vmatpush.bf16.msra.mxu0 %v2031
    %4722 = vmatpush.bf16.msra.mxu0 %v2023
    %4723 = vmatmul.bf16.gmra.mxu0 %v785
    %v4724 = vpop.f32.mrf.mxu0
    %v4725 = vadd.f32 %v4636, %v4724
    %v4726 = vpop.f32.mrf.mxu0
    %v4727 = vadd.f32 %v4638, %v4726
    %4728 = vmatmul.bf16.gmra.mxu0 %v789
    %v4729 = vpop.f32.mrf.mxu0
    %v4730 = vadd.f32 %v4641, %v4729
    %v4731 = vpop.f32.mrf.mxu0
    %v4732 = vadd.f32 %v4643, %v4731
    %4733 = vmatmul.bf16.gmra.mxu0 %v793
    %v4734 = vpop.f32.mrf.mxu0
    %v4735 = vadd.f32 %v4646, %v4734
    %v4736 = vpop.f32.mrf.mxu0
    %v4737 = vadd.f32 %v4648, %v4736
    %4738 = vmatmul.bf16.gmra.mxu0 %v797
    %v4739 = vpop.f32.mrf.mxu0
    %v4740 = vadd.f32 %v4651, %v4739
    %v4741 = vpop.f32.mrf.mxu0
    %v4742 = vadd.f32 %v4653, %v4741
    %4743 = vmatmul.bf16.gmra.mxu0 %v801
    %v4744 = vpop.f32.mrf.mxu0
    %v4745 = vadd.f32 %v4656, %v4744
    %v4746 = vpop.f32.mrf.mxu0
    %v4747 = vadd.f32 %v4658, %v4746
    %4748 = vmatmul.bf16.gmra.mxu0 %v805
    %v4749 = vpop.f32.mrf.mxu0
    %v4750 = vadd.f32 %v4661, %v4749
    %v4751 = vpop.f32.mrf.mxu0
    %v4752 = vadd.f32 %v4663, %v4751
    %4753 = vmatmul.bf16.gmra.mxu0 %v809
    %v4754 = vpop.f32.mrf.mxu0
    %v4755 = vadd.f32 %v4666, %v4754
    %v4756 = vpop.f32.mrf.mxu0
    %v4757 = vadd.f32 %v4668, %v4756
    %4758 = vmatmul.bf16.gmra.mxu0 %v813
    %v4759 = vpop.f32.mrf.mxu0
    %v4760 = vadd.f32 %v4671, %v4759
    %v4761 = vpop.f32.mrf.mxu0
    %v4762 = vadd.f32 %v4673, %v4761
    %4763 = vmatmul.bf16.gmra.mxu0 %v817
    %v4764 = vpop.f32.mrf.mxu0
    %v4765 = vadd.f32 %v4676, %v4764
    %v4766 = vpop.f32.mrf.mxu0
    %v4767 = vadd.f32 %v4678, %v4766
    %4768 = vmatmul.bf16.gmra.mxu0 %v821
    %v4769 = vpop.f32.mrf.mxu0
    %v4770 = vadd.f32 %v4681, %v4769
    %v4771 = vpop.f32.mrf.mxu0
    %v4772 = vadd.f32 %v4683, %v4771
    %4773 = vmatmul.bf16.gmra.mxu0 %v825
    %v4774 = vpop.f32.mrf.mxu0
    %v4775 = vadd.f32 %v4686, %v4774
    %v4776 = vpop.f32.mrf.mxu0
    %v4777 = vadd.f32 %v4688, %v4776
    %4778 = vmatmul.bf16.gmra.mxu0 %v829
    %v4779 = vpop.f32.mrf.mxu0
    %v4780 = vadd.f32 %v4691, %v4779
    %v4781 = vpop.f32.mrf.mxu0
    %v4782 = vadd.f32 %v4693, %v4781
    %4783 = vmatmul.bf16.gmra.mxu0 %v833
    %v4784 = vpop.f32.mrf.mxu0
    %v4785 = vadd.f32 %v4696, %v4784
    %v4786 = vpop.f32.mrf.mxu0
    %v4787 = vadd.f32 %v4698, %v4786
    %4788 = vmatmul.bf16.gmra.mxu0 %v837
    %v4789 = vpop.f32.mrf.mxu0
    %v4790 = vadd.f32 %v4701, %v4789
    %v4791 = vpop.f32.mrf.mxu0
    %v4792 = vadd.f32 %v4703, %v4791
    %4793 = vmatmul.bf16.gmra.mxu0 %v841
    %v4794 = vpop.f32.mrf.mxu0
    %v4795 = vadd.f32 %v4706, %v4794
    %v4796 = vpop.f32.mrf.mxu0
    %v4797 = vadd.f32 %v4708, %v4796
    %4798 = vmatmul.bf16.gmra.mxu0 %v845
    %v4799 = vpop.f32.mrf.mxu0
    %v4800 = vadd.f32 %v4711, %v4799
    %v4801 = vpop.f32.mrf.mxu0
    %v4802 = vadd.f32 %v4713, %v4801
    %4803 = vdwg.mxu0
    %4804 = vmatpush.bf16.msra.mxu0 %v2143
    %4805 = vmatpush.bf16.msra.mxu0 %v2135
    %4806 = vmatpush.bf16.msra.mxu0 %v2127
    %4807 = vmatpush.bf16.msra.mxu0 %v2119
    %4808 = vmatpush.bf16.msra.mxu0 %v2111
    %4809 = vmatpush.bf16.msra.mxu0 %v2103
    %4810 = vmatpush.bf16.msra.mxu0 %v2095
    %4811 = vmatpush.bf16.msra.mxu0 %v2087
    %4812 = vmatmul.bf16.gmra.mxu0 %v786
    %v4813 = vpop.f32.mrf.mxu0
    %v4814 = vadd.f32 %v4725, %v4813
    %v4815 = vpop.f32.mrf.mxu0
    %v4816 = vadd.f32 %v4727, %v4815
    %4817 = vmatmul.bf16.gmra.mxu0 %v790
    %v4818 = vpop.f32.mrf.mxu0
    %v4819 = vadd.f32 %v4730, %v4818
    %v4820 = vpop.f32.mrf.mxu0
    %v4821 = vadd.f32 %v4732, %v4820
    %4822 = vmatmul.bf16.gmra.mxu0 %v794
    %v4823 = vpop.f32.mrf.mxu0
    %v4824 = vadd.f32 %v4735, %v4823
    %v4825 = vpop.f32.mrf.mxu0
    %v4826 = vadd.f32 %v4737, %v4825
    %4827 = vmatmul.bf16.gmra.mxu0 %v798
    %v4828 = vpop.f32.mrf.mxu0
    %v4829 = vadd.f32 %v4740, %v4828
    %v4830 = vpop.f32.mrf.mxu0
    %v4831 = vadd.f32 %v4742, %v4830
    %4832 = vmatmul.bf16.gmra.mxu0 %v802
    %v4833 = vpop.f32.mrf.mxu0
    %v4834 = vadd.f32 %v4745, %v4833
    %v4835 = vpop.f32.mrf.mxu0
    %v4836 = vadd.f32 %v4747, %v4835
    %4837 = vmatmul.bf16.gmra.mxu0 %v806
    %v4838 = vpop.f32.mrf.mxu0
    %v4839 = vadd.f32 %v4750, %v4838
    %v4840 = vpop.f32.mrf.mxu0
    %v4841 = vadd.f32 %v4752, %v4840
    %4842 = vmatmul.bf16.gmra.mxu0 %v810
    %v4843 = vpop.f32.mrf.mxu0
    %v4844 = vadd.f32 %v4755, %v4843
    %v4845 = vpop.f32.mrf.mxu0
    %v4846 = vadd.f32 %v4757, %v4845
    %4847 = vmatmul.bf16.gmra.mxu0 %v814
    %v4848 = vpop.f32.mrf.mxu0
    %v4849 = vadd.f32 %v4760, %v4848
    %v4850 = vpop.f32.mrf.mxu0
    %v4851 = vadd.f32 %v4762, %v4850
    %4852 = vmatmul.bf16.gmra.mxu0 %v818
    %v4853 = vpop.f32.mrf.mxu0
    %v4854 = vadd.f32 %v4765, %v4853
    %v4855 = vpop.f32.mrf.mxu0
    %v4856 = vadd.f32 %v4767, %v4855
    %4857 = vmatmul.bf16.gmra.mxu0 %v822
    %v4858 = vpop.f32.mrf.mxu0
    %v4859 = vadd.f32 %v4770, %v4858
    %v4860 = vpop.f32.mrf.mxu0
    %v4861 = vadd.f32 %v4772, %v4860
    %4862 = vmatmul.bf16.gmra.mxu0 %v826
    %v4863 = vpop.f32.mrf.mxu0
    %v4864 = vadd.f32 %v4775, %v4863
    %v4865 = vpop.f32.mrf.mxu0
    %v4866 = vadd.f32 %v4777, %v4865
    %4867 = vmatmul.bf16.gmra.mxu0 %v830
    %v4868 = vpop.f32.mrf.mxu0
    %v4869 = vadd.f32 %v4780, %v4868
    %v4870 = vpop.f32.mrf.mxu0
    %v4871 = vadd.f32 %v4782, %v4870
    %4872 = vmatmul.bf16.gmra.mxu0 %v834
    %v4873 = vpop.f32.mrf.mxu0
    %v4874 = vadd.f32 %v4785, %v4873
    %v4875 = vpop.f32.mrf.mxu0
    %v4876 = vadd.f32 %v4787, %v4875
    %4877 = vmatmul.bf16.gmra.mxu0 %v838
    %v4878 = vpop.f32.mrf.mxu0
    %v4879 = vadd.f32 %v4790, %v4878
    %v4880 = vpop.f32.mrf.mxu0
    %v4881 = vadd.f32 %v4792, %v4880
    %4882 = vmatmul.bf16.gmra.mxu0 %v842
    %v4883 = vpop.f32.mrf.mxu0
    %v4884 = vadd.f32 %v4795, %v4883
    %v4885 = vpop.f32.mrf.mxu0
    %v4886 = vadd.f32 %v4797, %v4885
    %4887 = vmatmul.bf16.gmra.mxu0 %v846
    %v4888 = vpop.f32.mrf.mxu0
    %v4889 = vadd.f32 %v4800, %v4888
    %v4890 = vpop.f32.mrf.mxu0
    %v4891 = vadd.f32 %v4802, %v4890
    %4892 = vdwg.mxu0
    %4893 = vmatpush.bf16.msra.mxu0 %v1952
    %4894 = vmatpush.bf16.msra.mxu0 %v1944
    %4895 = vmatpush.bf16.msra.mxu0 %v1936
    %4896 = vmatpush.bf16.msra.mxu0 %v1928
    %4897 = vmatpush.bf16.msra.mxu0 %v1920
    %4898 = vmatpush.bf16.msra.mxu0 %v1912
    %4899 = vmatpush.bf16.msra.mxu0 %v1904
    %4900 = vmatpush.bf16.msra.mxu0 %v1896
    %4901 = vmatmul.bf16.gmra.mxu0 %v783
    %v4902 = vpop.f32.mrf.mxu0
    %v4903 = vadd.f32 %v1112, %v4902
    %v4904 = vpop.f32.mrf.mxu0
    %v4905 = vadd.f32 %v1112, %v4904
    %4906 = vmatmul.bf16.gmra.mxu0 %v787
    %v4907 = vpop.f32.mrf.mxu0
    %v4908 = vadd.f32 %v1112, %v4907
    %v4909 = vpop.f32.mrf.mxu0
    %v4910 = vadd.f32 %v1112, %v4909
    %4911 = vmatmul.bf16.gmra.mxu0 %v791
    %v4912 = vpop.f32.mrf.mxu0
    %v4913 = vadd.f32 %v1112, %v4912
    %v4914 = vpop.f32.mrf.mxu0
    %v4915 = vadd.f32 %v1112, %v4914
    %4916 = vmatmul.bf16.gmra.mxu0 %v795
    %v4917 = vpop.f32.mrf.mxu0
    %v4918 = vadd.f32 %v1112, %v4917
    %v4919 = vpop.f32.mrf.mxu0
    %v4920 = vadd.f32 %v1112, %v4919
    %4921 = vmatmul.bf16.gmra.mxu0 %v799
    %v4922 = vpop.f32.mrf.mxu0
    %v4923 = vadd.f32 %v1112, %v4922
    %v4924 = vpop.f32.mrf.mxu0
    %v4925 = vadd.f32 %v1112, %v4924
    %4926 = vmatmul.bf16.gmra.mxu0 %v803
    %v4927 = vpop.f32.mrf.mxu0
    %v4928 = vadd.f32 %v1112, %v4927
    %v4929 = vpop.f32.mrf.mxu0
    %v4930 = vadd.f32 %v1112, %v4929
    %4931 = vmatmul.bf16.gmra.mxu0 %v807
    %v4932 = vpop.f32.mrf.mxu0
    %v4933 = vadd.f32 %v1112, %v4932
    %v4934 = vpop.f32.mrf.mxu0
    %v4935 = vadd.f32 %v1112, %v4934
    %4936 = vmatmul.bf16.gmra.mxu0 %v811
    %v4937 = vpop.f32.mrf.mxu0
    %v4938 = vadd.f32 %v1112, %v4937
    %v4939 = vpop.f32.mrf.mxu0
    %v4940 = vadd.f32 %v1112, %v4939
    %4941 = vmatmul.bf16.gmra.mxu0 %v815
    %v4942 = vpop.f32.mrf.mxu0
    %v4943 = vadd.f32 %v1112, %v4942
    %v4944 = vpop.f32.mrf.mxu0
    %v4945 = vadd.f32 %v1112, %v4944
    %4946 = vmatmul.bf16.gmra.mxu0 %v819
    %v4947 = vpop.f32.mrf.mxu0
    %v4948 = vadd.f32 %v1112, %v4947
    %v4949 = vpop.f32.mrf.mxu0
    %v4950 = vadd.f32 %v1112, %v4949
    %4951 = vmatmul.bf16.gmra.mxu0 %v823
    %v4952 = vpop.f32.mrf.mxu0
    %v4953 = vadd.f32 %v1112, %v4952
    %v4954 = vpop.f32.mrf.mxu0
    %v4955 = vadd.f32 %v1112, %v4954
    %4956 = vmatmul.bf16.gmra.mxu0 %v827
    %v4957 = vpop.f32.mrf.mxu0
    %v4958 = vadd.f32 %v1112, %v4957
    %v4959 = vpop.f32.mrf.mxu0
    %v4960 = vadd.f32 %v1112, %v4959
    %4961 = vmatmul.bf16.gmra.mxu0 %v831
    %v4962 = vpop.f32.mrf.mxu0
    %v4963 = vadd.f32 %v1112, %v4962
    %v4964 = vpop.f32.mrf.mxu0
    %v4965 = vadd.f32 %v1112, %v4964
    %4966 = vmatmul.bf16.gmra.mxu0 %v835
    %v4967 = vpop.f32.mrf.mxu0
    %v4968 = vadd.f32 %v1112, %v4967
    %v4969 = vpop.f32.mrf.mxu0
    %v4970 = vadd.f32 %v1112, %v4969
    %4971 = vmatmul.bf16.gmra.mxu0 %v839
    %v4972 = vpop.f32.mrf.mxu0
    %v4973 = vadd.f32 %v1112, %v4972
    %v4974 = vpop.f32.mrf.mxu0
    %v4975 = vadd.f32 %v1112, %v4974
    %4976 = vmatmul.bf16.gmra.mxu0 %v843
    %v4977 = vpop.f32.mrf.mxu0
    %v4978 = vadd.f32 %v1112, %v4977
    %v4979 = vpop.f32.mrf.mxu0
    %v4980 = vadd.f32 %v1112, %v4979
    %4981 = vdwg.mxu0
    %4982 = vmatpush.bf16.msra.mxu0 %v2016
    %4983 = vmatpush.bf16.msra.mxu0 %v2008
    %4984 = vmatpush.bf16.msra.mxu0 %v2000
    %4985 = vmatpush.bf16.msra.mxu0 %v1992
    %4986 = vmatpush.bf16.msra.mxu0 %v1984
    %4987 = vmatpush.bf16.msra.mxu0 %v1976
    %4988 = vmatpush.bf16.msra.mxu0 %v1968
    %4989 = vmatpush.bf16.msra.mxu0 %v1960
    %4990 = vmatmul.bf16.gmra.mxu0 %v784
    %v4991 = vpop.f32.mrf.mxu0
    %v4992 = vadd.f32 %v4903, %v4991
    %v4993 = vpop.f32.mrf.mxu0
    %v4994 = vadd.f32 %v4905, %v4993
    %4995 = vmatmul.bf16.gmra.mxu0 %v788
    %v4996 = vpop.f32.mrf.mxu0
    %v4997 = vadd.f32 %v4908, %v4996
    %v4998 = vpop.f32.mrf.mxu0
    %v4999 = vadd.f32 %v4910, %v4998
    %5000 = vmatmul.bf16.gmra.mxu0 %v792
    %v5001 = vpop.f32.mrf.mxu0
    %v5002 = vadd.f32 %v4913, %v5001
    %v5003 = vpop.f32.mrf.mxu0
    %v5004 = vadd.f32 %v4915, %v5003
    %5005 = vmatmul.bf16.gmra.mxu0 %v796
    %v5006 = vpop.f32.mrf.mxu0
    %v5007 = vadd.f32 %v4918, %v5006
    %v5008 = vpop.f32.mrf.mxu0
    %v5009 = vadd.f32 %v4920, %v5008
    %5010 = vmatmul.bf16.gmra.mxu0 %v800
    %v5011 = vpop.f32.mrf.mxu0
    %v5012 = vadd.f32 %v4923, %v5011
    %v5013 = vpop.f32.mrf.mxu0
    %v5014 = vadd.f32 %v4925, %v5013
    %5015 = vmatmul.bf16.gmra.mxu0 %v804
    %v5016 = vpop.f32.mrf.mxu0
    %v5017 = vadd.f32 %v4928, %v5016
    %v5018 = vpop.f32.mrf.mxu0
    %v5019 = vadd.f32 %v4930, %v5018
    %5020 = vmatmul.bf16.gmra.mxu0 %v808
    %v5021 = vpop.f32.mrf.mxu0
    %v5022 = vadd.f32 %v4933, %v5021
    %v5023 = vpop.f32.mrf.mxu0
    %v5024 = vadd.f32 %v4935, %v5023
    %5025 = vmatmul.bf16.gmra.mxu0 %v812
    %v5026 = vpop.f32.mrf.mxu0
    %v5027 = vadd.f32 %v4938, %v5026
    %v5028 = vpop.f32.mrf.mxu0
    %v5029 = vadd.f32 %v4940, %v5028
    %5030 = vmatmul.bf16.gmra.mxu0 %v816
    %v5031 = vpop.f32.mrf.mxu0
    %v5032 = vadd.f32 %v4943, %v5031
    %v5033 = vpop.f32.mrf.mxu0
    %v5034 = vadd.f32 %v4945, %v5033
    %5035 = vmatmul.bf16.gmra.mxu0 %v820
    %v5036 = vpop.f32.mrf.mxu0
    %v5037 = vadd.f32 %v4948, %v5036
    %v5038 = vpop.f32.mrf.mxu0
    %v5039 = vadd.f32 %v4950, %v5038
    %5040 = vmatmul.bf16.gmra.mxu0 %v824
    %v5041 = vpop.f32.mrf.mxu0
    %v5042 = vadd.f32 %v4953, %v5041
    %v5043 = vpop.f32.mrf.mxu0
    %v5044 = vadd.f32 %v4955, %v5043
    %5045 = vmatmul.bf16.gmra.mxu0 %v828
    %v5046 = vpop.f32.mrf.mxu0
    %v5047 = vadd.f32 %v4958, %v5046
    %v5048 = vpop.f32.mrf.mxu0
    %v5049 = vadd.f32 %v4960, %v5048
    %5050 = vmatmul.bf16.gmra.mxu0 %v832
    %v5051 = vpop.f32.mrf.mxu0
    %v5052 = vadd.f32 %v4963, %v5051
    %v5053 = vpop.f32.mrf.mxu0
    %v5054 = vadd.f32 %v4965, %v5053
    %5055 = vmatmul.bf16.gmra.mxu0 %v836
    %v5056 = vpop.f32.mrf.mxu0
    %v5057 = vadd.f32 %v4968, %v5056
    %v5058 = vpop.f32.mrf.mxu0
    %v5059 = vadd.f32 %v4970, %v5058
    %5060 = vmatmul.bf16.gmra.mxu0 %v840
    %v5061 = vpop.f32.mrf.mxu0
    %v5062 = vadd.f32 %v4973, %v5061
    %v5063 = vpop.f32.mrf.mxu0
    %v5064 = vadd.f32 %v4975, %v5063
    %5065 = vmatmul.bf16.gmra.mxu0 %v844
    %v5066 = vpop.f32.mrf.mxu0
    %v5067 = vadd.f32 %v4978, %v5066
    %v5068 = vpop.f32.mrf.mxu0
    %v5069 = vadd.f32 %v4980, %v5068
    %5070 = vdwg.mxu0
    %5071 = vmatpush.bf16.msra.mxu0 %v2080
    %5072 = vmatpush.bf16.msra.mxu0 %v2072
    %5073 = vmatpush.bf16.msra.mxu0 %v2064
    %5074 = vmatpush.bf16.msra.mxu0 %v2056
    %5075 = vmatpush.bf16.msra.mxu0 %v2048
    %5076 = vmatpush.bf16.msra.mxu0 %v2040
    %5077 = vmatpush.bf16.msra.mxu0 %v2032
    %5078 = vmatpush.bf16.msra.mxu0 %v2024
    %5079 = vmatmul.bf16.gmra.mxu0 %v785
    %v5080 = vpop.f32.mrf.mxu0
    %v5081 = vadd.f32 %v4992, %v5080
    %v5082 = vpop.f32.mrf.mxu0
    %v5083 = vadd.f32 %v4994, %v5082
    %5084 = vmatmul.bf16.gmra.mxu0 %v789
    %v5085 = vpop.f32.mrf.mxu0
    %v5086 = vadd.f32 %v4997, %v5085
    %v5087 = vpop.f32.mrf.mxu0
    %v5088 = vadd.f32 %v4999, %v5087
    %5089 = vmatmul.bf16.gmra.mxu0 %v793
    %v5090 = vpop.f32.mrf.mxu0
    %v5091 = vadd.f32 %v5002, %v5090
    %v5092 = vpop.f32.mrf.mxu0
    %v5093 = vadd.f32 %v5004, %v5092
    %5094 = vmatmul.bf16.gmra.mxu0 %v797
    %v5095 = vpop.f32.mrf.mxu0
    %v5096 = vadd.f32 %v5007, %v5095
    %v5097 = vpop.f32.mrf.mxu0
    %v5098 = vadd.f32 %v5009, %v5097
    %5099 = vmatmul.bf16.gmra.mxu0 %v801
    %v5100 = vpop.f32.mrf.mxu0
    %v5101 = vadd.f32 %v5012, %v5100
    %v5102 = vpop.f32.mrf.mxu0
    %v5103 = vadd.f32 %v5014, %v5102
    %5104 = vmatmul.bf16.gmra.mxu0 %v805
    %v5105 = vpop.f32.mrf.mxu0
    %v5106 = vadd.f32 %v5017, %v5105
    %v5107 = vpop.f32.mrf.mxu0
    %v5108 = vadd.f32 %v5019, %v5107
    %5109 = vmatmul.bf16.gmra.mxu0 %v809
    %v5110 = vpop.f32.mrf.mxu0
    %v5111 = vadd.f32 %v5022, %v5110
    %v5112 = vpop.f32.mrf.mxu0
    %v5113 = vadd.f32 %v5024, %v5112
    %5114 = vmatmul.bf16.gmra.mxu0 %v813
    %v5115 = vpop.f32.mrf.mxu0
    %v5116 = vadd.f32 %v5027, %v5115
    %v5117 = vpop.f32.mrf.mxu0
    %v5118 = vadd.f32 %v5029, %v5117
    %5119 = vmatmul.bf16.gmra.mxu0 %v817
    %v5120 = vpop.f32.mrf.mxu0
    %v5121 = vadd.f32 %v5032, %v5120
    %v5122 = vpop.f32.mrf.mxu0
    %v5123 = vadd.f32 %v5034, %v5122
    %5124 = vmatmul.bf16.gmra.mxu0 %v821
    %v5125 = vpop.f32.mrf.mxu0
    %v5126 = vadd.f32 %v5037, %v5125
    %v5127 = vpop.f32.mrf.mxu0
    %v5128 = vadd.f32 %v5039, %v5127
    %5129 = vmatmul.bf16.gmra.mxu0 %v825
    %v5130 = vpop.f32.mrf.mxu0
    %v5131 = vadd.f32 %v5042, %v5130
    %v5132 = vpop.f32.mrf.mxu0
    %v5133 = vadd.f32 %v5044, %v5132
    %5134 = vmatmul.bf16.gmra.mxu0 %v829
    %v5135 = vpop.f32.mrf.mxu0
    %v5136 = vadd.f32 %v5047, %v5135
    %v5137 = vpop.f32.mrf.mxu0
    %v5138 = vadd.f32 %v5049, %v5137
    %5139 = vmatmul.bf16.gmra.mxu0 %v833
    %v5140 = vpop.f32.mrf.mxu0
    %v5141 = vadd.f32 %v5052, %v5140
    %v5142 = vpop.f32.mrf.mxu0
    %v5143 = vadd.f32 %v5054, %v5142
    %5144 = vmatmul.bf16.gmra.mxu0 %v837
    %v5145 = vpop.f32.mrf.mxu0
    %v5146 = vadd.f32 %v5057, %v5145
    %v5147 = vpop.f32.mrf.mxu0
    %v5148 = vadd.f32 %v5059, %v5147
    %5149 = vmatmul.bf16.gmra.mxu0 %v841
    %v5150 = vpop.f32.mrf.mxu0
    %v5151 = vadd.f32 %v5062, %v5150
    %v5152 = vpop.f32.mrf.mxu0
    %v5153 = vadd.f32 %v5064, %v5152
    %5154 = vmatmul.bf16.gmra.mxu0 %v845
    %v5155 = vpop.f32.mrf.mxu0
    %v5156 = vadd.f32 %v5067, %v5155
    %v5157 = vpop.f32.mrf.mxu0
    %v5158 = vadd.f32 %v5069, %v5157
    %5159 = vdwg.mxu0
    %5160 = vmatpush.bf16.msra.mxu0 %v2144
    %5161 = vmatpush.bf16.msra.mxu0 %v2136
    %5162 = vmatpush.bf16.msra.mxu0 %v2128
    %5163 = vmatpush.bf16.msra.mxu0 %v2120
    %5164 = vmatpush.bf16.msra.mxu0 %v2112
    %5165 = vmatpush.bf16.msra.mxu0 %v2104
    %5166 = vmatpush.bf16.msra.mxu0 %v2096
    %5167 = vmatpush.bf16.msra.mxu0 %v2088
    %5168 = vmatmul.bf16.gmra.mxu0 %v786
    %v5169 = vpop.f32.mrf.mxu0
    %v5170 = vadd.f32 %v5081, %v5169
    %v5171 = vpop.f32.mrf.mxu0
    %v5172 = vadd.f32 %v5083, %v5171
    %5173 = vmatmul.bf16.gmra.mxu0 %v790
    %v5174 = vpop.f32.mrf.mxu0
    %v5175 = vadd.f32 %v5086, %v5174
    %v5176 = vpop.f32.mrf.mxu0
    %v5177 = vadd.f32 %v5088, %v5176
    %5178 = vmatmul.bf16.gmra.mxu0 %v794
    %v5179 = vpop.f32.mrf.mxu0
    %v5180 = vadd.f32 %v5091, %v5179
    %v5181 = vpop.f32.mrf.mxu0
    %v5182 = vadd.f32 %v5093, %v5181
    %5183 = vmatmul.bf16.gmra.mxu0 %v798
    %v5184 = vpop.f32.mrf.mxu0
    %v5185 = vadd.f32 %v5096, %v5184
    %v5186 = vpop.f32.mrf.mxu0
    %v5187 = vadd.f32 %v5098, %v5186
    %5188 = vmatmul.bf16.gmra.mxu0 %v802
    %v5189 = vpop.f32.mrf.mxu0
    %v5190 = vadd.f32 %v5101, %v5189
    %v5191 = vpop.f32.mrf.mxu0
    %v5192 = vadd.f32 %v5103, %v5191
    %5193 = vmatmul.bf16.gmra.mxu0 %v806
    %v5194 = vpop.f32.mrf.mxu0
    %v5195 = vadd.f32 %v5106, %v5194
    %v5196 = vpop.f32.mrf.mxu0
    %v5197 = vadd.f32 %v5108, %v5196
    %5198 = vmatmul.bf16.gmra.mxu0 %v810
    %v5199 = vpop.f32.mrf.mxu0
    %v5200 = vadd.f32 %v5111, %v5199
    %v5201 = vpop.f32.mrf.mxu0
    %v5202 = vadd.f32 %v5113, %v5201
    %5203 = vmatmul.bf16.gmra.mxu0 %v814
    %v5204 = vpop.f32.mrf.mxu0
    %v5205 = vadd.f32 %v5116, %v5204
    %v5206 = vpop.f32.mrf.mxu0
    %v5207 = vadd.f32 %v5118, %v5206
    %5208 = vmatmul.bf16.gmra.mxu0 %v818
    %v5209 = vpop.f32.mrf.mxu0
    %v5210 = vadd.f32 %v5121, %v5209
    %v5211 = vpop.f32.mrf.mxu0
    %v5212 = vadd.f32 %v5123, %v5211
    %5213 = vmatmul.bf16.gmra.mxu0 %v822
    %v5214 = vpop.f32.mrf.mxu0
    %v5215 = vadd.f32 %v5126, %v5214
    %v5216 = vpop.f32.mrf.mxu0
    %v5217 = vadd.f32 %v5128, %v5216
    %5218 = vmatmul.bf16.gmra.mxu0 %v826
    %v5219 = vpop.f32.mrf.mxu0
    %v5220 = vadd.f32 %v5131, %v5219
    %v5221 = vpop.f32.mrf.mxu0
    %v5222 = vadd.f32 %v5133, %v5221
    %5223 = vmatmul.bf16.gmra.mxu0 %v830
    %v5224 = vpop.f32.mrf.mxu0
    %v5225 = vadd.f32 %v5136, %v5224
    %v5226 = vpop.f32.mrf.mxu0
    %v5227 = vadd.f32 %v5138, %v5226
    %5228 = vmatmul.bf16.gmra.mxu0 %v834
    %v5229 = vpop.f32.mrf.mxu0
    %v5230 = vadd.f32 %v5141, %v5229
    %v5231 = vpop.f32.mrf.mxu0
    %v5232 = vadd.f32 %v5143, %v5231
    %5233 = vmatmul.bf16.gmra.mxu0 %v838
    %v5234 = vpop.f32.mrf.mxu0
    %v5235 = vadd.f32 %v5146, %v5234
    %v5236 = vpop.f32.mrf.mxu0
    %v5237 = vadd.f32 %v5148, %v5236
    %5238 = vmatmul.bf16.gmra.mxu0 %v842
    %v5239 = vpop.f32.mrf.mxu0
    %v5240 = vadd.f32 %v5151, %v5239
    %v5241 = vpop.f32.mrf.mxu0
    %v5242 = vadd.f32 %v5153, %v5241
    %5243 = vmatmul.bf16.gmra.mxu0 %v846
    %v5244 = vpop.f32.mrf.mxu0
    %v5245 = vadd.f32 %v5156, %v5244
    %v5246 = vpop.f32.mrf.mxu0
    %v5247 = vadd.f32 %v5158, %v5246
    %5248 = vdwg.mxu0
    %v5249 = vmax.f32 %v2678, 0.0
    %v5250 = vmax.f32 %v3034, 0.0
    %v5251 = vmax.f32 %v3390, 0.0
    %v5252 = vmax.f32 %v3746, 0.0
    %v5253 = vmax.f32 %v4102, 0.0
    %v5254 = vmax.f32 %v4458, 0.0
    %v5255 = vmax.f32 %v4814, 0.0
    %v5256 = vmax.f32 %v5170, 0.0
    %v5257 = vmax.f32 %v2680, 0.0
    %v5258 = vmax.f32 %v3036, 0.0
    %v5259 = vmax.f32 %v3392, 0.0
    %v5260 = vmax.f32 %v3748, 0.0
    %v5261 = vmax.f32 %v4104, 0.0
    %v5262 = vmax.f32 %v4460, 0.0
    %v5263 = vmax.f32 %v4816, 0.0
    %v5264 = vmax.f32 %v5172, 0.0
    %v5265 = vmax.f32 %v2683, 0.0
    %v5266 = vmax.f32 %v3039, 0.0
    %v5267 = vmax.f32 %v3395, 0.0
    %v5268 = vmax.f32 %v3751, 0.0
    %v5269 = vmax.f32 %v4107, 0.0
    %v5270 = vmax.f32 %v4463, 0.0
    %v5271 = vmax.f32 %v4819, 0.0
    %v5272 = vmax.f32 %v5175, 0.0
    %v5273 = vmax.f32 %v2685, 0.0
    %v5274 = vmax.f32 %v3041, 0.0
    %v5275 = vmax.f32 %v3397, 0.0
    %v5276 = vmax.f32 %v3753, 0.0
    %v5277 = vmax.f32 %v4109, 0.0
    %v5278 = vmax.f32 %v4465, 0.0
    %v5279 = vmax.f32 %v4821, 0.0
    %v5280 = vmax.f32 %v5177, 0.0
    %v5281 = vmax.f32 %v2688, 0.0
    %v5282 = vmax.f32 %v3044, 0.0
    %v5283 = vmax.f32 %v3400, 0.0
    %v5284 = vmax.f32 %v3756, 0.0
    %v5285 = vmax.f32 %v4112, 0.0
    %v5286 = vmax.f32 %v4468, 0.0
    %v5287 = vmax.f32 %v4824, 0.0
    %v5288 = vmax.f32 %v5180, 0.0
    %v5289 = vmax.f32 %v2690, 0.0
    %v5290 = vmax.f32 %v3046, 0.0
    %v5291 = vmax.f32 %v3402, 0.0
    %v5292 = vmax.f32 %v3758, 0.0
    %v5293 = vmax.f32 %v4114, 0.0
    %v5294 = vmax.f32 %v4470, 0.0
    %v5295 = vmax.f32 %v4826, 0.0
    %v5296 = vmax.f32 %v5182, 0.0
    %v5297 = vmax.f32 %v2693, 0.0
    %v5298 = vmax.f32 %v3049, 0.0
    %v5299 = vmax.f32 %v3405, 0.0
    %v5300 = vmax.f32 %v3761, 0.0
    %v5301 = vmax.f32 %v4117, 0.0
    %v5302 = vmax.f32 %v4473, 0.0
    %v5303 = vmax.f32 %v4829, 0.0
    %v5304 = vmax.f32 %v5185, 0.0
    %v5305 = vmax.f32 %v2695, 0.0
    %v5306 = vmax.f32 %v3051, 0.0
    %v5307 = vmax.f32 %v3407, 0.0
    %v5308 = vmax.f32 %v3763, 0.0
    %v5309 = vmax.f32 %v4119, 0.0
    %v5310 = vmax.f32 %v4475, 0.0
    %v5311 = vmax.f32 %v4831, 0.0
    %v5312 = vmax.f32 %v5187, 0.0
    %v5313 = vmax.f32 %v2698, 0.0
    %v5314 = vmax.f32 %v3054, 0.0
    %v5315 = vmax.f32 %v3410, 0.0
    %v5316 = vmax.f32 %v3766, 0.0
    %v5317 = vmax.f32 %v4122, 0.0
    %v5318 = vmax.f32 %v4478, 0.0
    %v5319 = vmax.f32 %v4834, 0.0
    %v5320 = vmax.f32 %v5190, 0.0
    %v5321 = vmax.f32 %v2700, 0.0
    %v5322 = vmax.f32 %v3056, 0.0
    %v5323 = vmax.f32 %v3412, 0.0
    %v5324 = vmax.f32 %v3768, 0.0
    %v5325 = vmax.f32 %v4124, 0.0
    %v5326 = vmax.f32 %v4480, 0.0
    %v5327 = vmax.f32 %v4836, 0.0
    %v5328 = vmax.f32 %v5192, 0.0
    %v5329 = vmax.f32 %v2703, 0.0
    %v5330 = vmax.f32 %v3059, 0.0
    %v5331 = vmax.f32 %v3415, 0.0
    %v5332 = vmax.f32 %v3771, 0.0
    %v5333 = vmax.f32 %v4127, 0.0
    %v5334 = vmax.f32 %v4483, 0.0
    %v5335 = vmax.f32 %v4839, 0.0
    %v5336 = vmax.f32 %v5195, 0.0
    %v5337 = vmax.f32 %v2705, 0.0
    %v5338 = vmax.f32 %v3061, 0.0
    %v5339 = vmax.f32 %v3417, 0.0
    %v5340 = vmax.f32 %v3773, 0.0
    %v5341 = vmax.f32 %v4129, 0.0
    %v5342 = vmax.f32 %v4485, 0.0
    %v5343 = vmax.f32 %v4841, 0.0
    %v5344 = vmax.f32 %v5197, 0.0
    %v5345 = vmax.f32 %v2708, 0.0
    %v5346 = vmax.f32 %v3064, 0.0
    %v5347 = vmax.f32 %v3420, 0.0
    %v5348 = vmax.f32 %v3776, 0.0
    %v5349 = vmax.f32 %v4132, 0.0
    %v5350 = vmax.f32 %v4488, 0.0
    %v5351 = vmax.f32 %v4844, 0.0
    %v5352 = vmax.f32 %v5200, 0.0
    %v5353 = vmax.f32 %v2710, 0.0
    %v5354 = vmax.f32 %v3066, 0.0
    %v5355 = vmax.f32 %v3422, 0.0
    %v5356 = vmax.f32 %v3778, 0.0
    %v5357 = vmax.f32 %v4134, 0.0
    %v5358 = vmax.f32 %v4490, 0.0
    %v5359 = vmax.f32 %v4846, 0.0
    %v5360 = vmax.f32 %v5202, 0.0
    %v5361 = vmax.f32 %v2713, 0.0
    %v5362 = vmax.f32 %v3069, 0.0
    %v5363 = vmax.f32 %v3425, 0.0
    %v5364 = vmax.f32 %v3781, 0.0
    %v5365 = vmax.f32 %v4137, 0.0
    %v5366 = vmax.f32 %v4493, 0.0
    %v5367 = vmax.f32 %v4849, 0.0
    %v5368 = vmax.f32 %v5205, 0.0
    %v5369 = vmax.f32 %v2715, 0.0
    %v5370 = vmax.f32 %v3071, 0.0
    %v5371 = vmax.f32 %v3427, 0.0
    %v5372 = vmax.f32 %v3783, 0.0
    %v5373 = vmax.f32 %v4139, 0.0
    %v5374 = vmax.f32 %v4495, 0.0
    %v5375 = vmax.f32 %v4851, 0.0
    %v5376 = vmax.f32 %v5207, 0.0
    %v5377 = vmax.f32 %v2718, 0.0
    %v5378 = vmax.f32 %v3074, 0.0
    %v5379 = vmax.f32 %v3430, 0.0
    %v5380 = vmax.f32 %v3786, 0.0
    %v5381 = vmax.f32 %v4142, 0.0
    %v5382 = vmax.f32 %v4498, 0.0
    %v5383 = vmax.f32 %v4854, 0.0
    %v5384 = vmax.f32 %v5210, 0.0
    %v5385 = vmax.f32 %v2720, 0.0
    %v5386 = vmax.f32 %v3076, 0.0
    %v5387 = vmax.f32 %v3432, 0.0
    %v5388 = vmax.f32 %v3788, 0.0
    %v5389 = vmax.f32 %v4144, 0.0
    %v5390 = vmax.f32 %v4500, 0.0
    %v5391 = vmax.f32 %v4856, 0.0
    %v5392 = vmax.f32 %v5212, 0.0
    %v5393 = vmax.f32 %v2723, 0.0
    %v5394 = vmax.f32 %v3079, 0.0
    %v5395 = vmax.f32 %v3435, 0.0
    %v5396 = vmax.f32 %v3791, 0.0
    %v5397 = vmax.f32 %v4147, 0.0
    %v5398 = vmax.f32 %v4503, 0.0
    %v5399 = vmax.f32 %v4859, 0.0
    %v5400 = vmax.f32 %v5215, 0.0
    %v5401 = vmax.f32 %v2725, 0.0
    %v5402 = vmax.f32 %v3081, 0.0
    %v5403 = vmax.f32 %v3437, 0.0
    %v5404 = vmax.f32 %v3793, 0.0
    %v5405 = vmax.f32 %v4149, 0.0
    %v5406 = vmax.f32 %v4505, 0.0
    %v5407 = vmax.f32 %v4861, 0.0
    %v5408 = vmax.f32 %v5217, 0.0
    %v5409 = vmax.f32 %v2728, 0.0
    %v5410 = vmax.f32 %v3084, 0.0
    %v5411 = vmax.f32 %v3440, 0.0
    %v5412 = vmax.f32 %v3796, 0.0
    %v5413 = vmax.f32 %v4152, 0.0
    %v5414 = vmax.f32 %v4508, 0.0
    %v5415 = vmax.f32 %v4864, 0.0
    %v5416 = vmax.f32 %v5220, 0.0
    %v5417 = vmax.f32 %v2730, 0.0
    %v5418 = vmax.f32 %v3086, 0.0
    %v5419 = vmax.f32 %v3442, 0.0
    %v5420 = vmax.f32 %v3798, 0.0
    %v5421 = vmax.f32 %v4154, 0.0
    %v5422 = vmax.f32 %v4510, 0.0
    %v5423 = vmax.f32 %v4866, 0.0
    %v5424 = vmax.f32 %v5222, 0.0
    %v5425 = vmax.f32 %v2733, 0.0
    %v5426 = vmax.f32 %v3089, 0.0
    %v5427 = vmax.f32 %v3445, 0.0
    %v5428 = vmax.f32 %v3801, 0.0
    %v5429 = vmax.f32 %v4157, 0.0
    %v5430 = vmax.f32 %v4513, 0.0
    %v5431 = vmax.f32 %v4869, 0.0
    %v5432 = vmax.f32 %v5225, 0.0
    %v5433 = vmax.f32 %v2735, 0.0
    %v5434 = vmax.f32 %v3091, 0.0
    %v5435 = vmax.f32 %v3447, 0.0
    %v5436 = vmax.f32 %v3803, 0.0
    %v5437 = vmax.f32 %v4159, 0.0
    %v5438 = vmax.f32 %v4515, 0.0
    %v5439 = vmax.f32 %v4871, 0.0
    %v5440 = vmax.f32 %v5227, 0.0
    %v5441 = vmax.f32 %v2738, 0.0
    %v5442 = vmax.f32 %v3094, 0.0
    %v5443 = vmax.f32 %v3450, 0.0
    %v5444 = vmax.f32 %v3806, 0.0
    %v5445 = vmax.f32 %v4162, 0.0
    %v5446 = vmax.f32 %v4518, 0.0
    %v5447 = vmax.f32 %v4874, 0.0
    %v5448 = vmax.f32 %v5230, 0.0
    %v5449 = vmax.f32 %v2740, 0.0
    %v5450 = vmax.f32 %v3096, 0.0
    %v5451 = vmax.f32 %v3452, 0.0
    %v5452 = vmax.f32 %v3808, 0.0
    %v5453 = vmax.f32 %v4164, 0.0
    %v5454 = vmax.f32 %v4520, 0.0
    %v5455 = vmax.f32 %v4876, 0.0
    %v5456 = vmax.f32 %v5232, 0.0
    %v5457 = vmax.f32 %v2743, 0.0
    %v5458 = vmax.f32 %v3099, 0.0
    %v5459 = vmax.f32 %v3455, 0.0
    %v5460 = vmax.f32 %v3811, 0.0
    %v5461 = vmax.f32 %v4167, 0.0
    %v5462 = vmax.f32 %v4523, 0.0
    %v5463 = vmax.f32 %v4879, 0.0
    %v5464 = vmax.f32 %v5235, 0.0
    %v5465 = vmax.f32 %v2745, 0.0
    %v5466 = vmax.f32 %v3101, 0.0
    %v5467 = vmax.f32 %v3457, 0.0
    %v5468 = vmax.f32 %v3813, 0.0
    %v5469 = vmax.f32 %v4169, 0.0
    %v5470 = vmax.f32 %v4525, 0.0
    %v5471 = vmax.f32 %v4881, 0.0
    %v5472 = vmax.f32 %v5237, 0.0
    %v5473 = vmax.f32 %v2748, 0.0
    %v5474 = vmax.f32 %v3104, 0.0
    %v5475 = vmax.f32 %v3460, 0.0
    %v5476 = vmax.f32 %v3816, 0.0
    %v5477 = vmax.f32 %v4172, 0.0
    %v5478 = vmax.f32 %v4528, 0.0
    %v5479 = vmax.f32 %v4884, 0.0
    %v5480 = vmax.f32 %v5240, 0.0
    %v5481 = vmax.f32 %v2750, 0.0
    %v5482 = vmax.f32 %v3106, 0.0
    %v5483 = vmax.f32 %v3462, 0.0
    %v5484 = vmax.f32 %v3818, 0.0
    %v5485 = vmax.f32 %v4174, 0.0
    %v5486 = vmax.f32 %v4530, 0.0
    %v5487 = vmax.f32 %v4886, 0.0
    %v5488 = vmax.f32 %v5242, 0.0
    %v5489 = vmax.f32 %v2753, 0.0
    %v5490 = vmax.f32 %v3109, 0.0
    %v5491 = vmax.f32 %v3465, 0.0
    %v5492 = vmax.f32 %v3821, 0.0
    %v5493 = vmax.f32 %v4177, 0.0
    %v5494 = vmax.f32 %v4533, 0.0
    %v5495 = vmax.f32 %v4889, 0.0
    %v5496 = vmax.f32 %v5245, 0.0
    %v5497 = vmax.f32 %v2755, 0.0
    %v5498 = vmax.f32 %v3111, 0.0
    %v5499 = vmax.f32 %v3467, 0.0
    %v5500 = vmax.f32 %v3823, 0.0
    %v5501 = vmax.f32 %v4179, 0.0
    %v5502 = vmax.f32 %v4535, 0.0
    %v5503 = vmax.f32 %v4891, 0.0
    %v5504 = vmax.f32 %v5247, 0.0
    %v5505 = vld [vmem:[%s5] sm:$0xff]
    %v5507 = vperm.slane %v5505, 0
    %v5508 = vperm.slane %v5505, 1
    %v5509 = vperm.slane %v5505, 2
    %v5510 = vperm.slane %v5505, 3
    %v5511 = vperm.slane %v5505, 4
    %v5512 = vperm.slane %v5505, 5
    %v5513 = vperm.slane %v5505, 6
    %v5514 = vperm.slane %v5505, 7
    %v5523 = vmul.f32 %v5249, %v5507
    %v5524 = vmul.f32 %v5250, %v5508
    %v5525 = vmul.f32 %v5251, %v5509
    %v5526 = vmul.f32 %v5252, %v5510
    %v5527 = vmul.f32 %v5253, %v5511
    %v5528 = vmul.f32 %v5254, %v5512
    %v5529 = vmul.f32 %v5255, %v5513
    %v5530 = vmul.f32 %v5256, %v5514
    %v5531 = vmul.f32 %v5257, %v5507
    %v5532 = vmul.f32 %v5258, %v5508
    %v5533 = vmul.f32 %v5259, %v5509
    %v5534 = vmul.f32 %v5260, %v5510
    %v5535 = vmul.f32 %v5261, %v5511
    %v5536 = vmul.f32 %v5262, %v5512
    %v5537 = vmul.f32 %v5263, %v5513
    %v5538 = vmul.f32 %v5264, %v5514
    %v5539 = vmul.f32 %v5265, %v5507
    %v5540 = vmul.f32 %v5266, %v5508
    %v5541 = vmul.f32 %v5267, %v5509
    %v5542 = vmul.f32 %v5268, %v5510
    %v5543 = vmul.f32 %v5269, %v5511
    %v5544 = vmul.f32 %v5270, %v5512
    %v5545 = vmul.f32 %v5271, %v5513
    %v5546 = vmul.f32 %v5272, %v5514
    %v5547 = vmul.f32 %v5273, %v5507
    %v5548 = vmul.f32 %v5274, %v5508
    %v5549 = vmul.f32 %v5275, %v5509
    %v5550 = vmul.f32 %v5276, %v5510
    %v5551 = vmul.f32 %v5277, %v5511
    %v5552 = vmul.f32 %v5278, %v5512
    %v5553 = vmul.f32 %v5279, %v5513
    %v5554 = vmul.f32 %v5280, %v5514
    %v5555 = vmul.f32 %v5281, %v5507
    %v5556 = vmul.f32 %v5282, %v5508
    %v5557 = vmul.f32 %v5283, %v5509
    %v5558 = vmul.f32 %v5284, %v5510
    %v5559 = vmul.f32 %v5285, %v5511
    %v5560 = vmul.f32 %v5286, %v5512
    %v5561 = vmul.f32 %v5287, %v5513
    %v5562 = vmul.f32 %v5288, %v5514
    %v5563 = vmul.f32 %v5289, %v5507
    %v5564 = vmul.f32 %v5290, %v5508
    %v5565 = vmul.f32 %v5291, %v5509
    %v5566 = vmul.f32 %v5292, %v5510
    %v5567 = vmul.f32 %v5293, %v5511
    %v5568 = vmul.f32 %v5294, %v5512
    %v5569 = vmul.f32 %v5295, %v5513
    %v5570 = vmul.f32 %v5296, %v5514
    %v5571 = vmul.f32 %v5297, %v5507
    %v5572 = vmul.f32 %v5298, %v5508
    %v5573 = vmul.f32 %v5299, %v5509
    %v5574 = vmul.f32 %v5300, %v5510
    %v5575 = vmul.f32 %v5301, %v5511
    %v5576 = vmul.f32 %v5302, %v5512
    %v5577 = vmul.f32 %v5303, %v5513
    %v5578 = vmul.f32 %v5304, %v5514
    %v5579 = vmul.f32 %v5305, %v5507
    %v5580 = vmul.f32 %v5306, %v5508
    %v5581 = vmul.f32 %v5307, %v5509
    %v5582 = vmul.f32 %v5308, %v5510
    %v5583 = vmul.f32 %v5309, %v5511
    %v5584 = vmul.f32 %v5310, %v5512
    %v5585 = vmul.f32 %v5311, %v5513
    %v5586 = vmul.f32 %v5312, %v5514
    %v5587 = vmul.f32 %v5313, %v5507
    %v5588 = vmul.f32 %v5314, %v5508
    %v5589 = vmul.f32 %v5315, %v5509
    %v5590 = vmul.f32 %v5316, %v5510
    %v5591 = vmul.f32 %v5317, %v5511
    %v5592 = vmul.f32 %v5318, %v5512
    %v5593 = vmul.f32 %v5319, %v5513
    %v5594 = vmul.f32 %v5320, %v5514
    %v5595 = vmul.f32 %v5321, %v5507
    %v5596 = vmul.f32 %v5322, %v5508
    %v5597 = vmul.f32 %v5323, %v5509
    %v5598 = vmul.f32 %v5324, %v5510
    %v5599 = vmul.f32 %v5325, %v5511
    %v5600 = vmul.f32 %v5326, %v5512
    %v5601 = vmul.f32 %v5327, %v5513
    %v5602 = vmul.f32 %v5328, %v5514
    %v5603 = vmul.f32 %v5329, %v5507
    %v5604 = vmul.f32 %v5330, %v5508
    %v5605 = vmul.f32 %v5331, %v5509
    %v5606 = vmul.f32 %v5332, %v5510
    %v5607 = vmul.f32 %v5333, %v5511
    %v5608 = vmul.f32 %v5334, %v5512
    %v5609 = vmul.f32 %v5335, %v5513
    %v5610 = vmul.f32 %v5336, %v5514
    %v5611 = vmul.f32 %v5337, %v5507
    %v5612 = vmul.f32 %v5338, %v5508
    %v5613 = vmul.f32 %v5339, %v5509
    %v5614 = vmul.f32 %v5340, %v5510
    %v5615 = vmul.f32 %v5341, %v5511
    %v5616 = vmul.f32 %v5342, %v5512
    %v5617 = vmul.f32 %v5343, %v5513
    %v5618 = vmul.f32 %v5344, %v5514
    %v5619 = vmul.f32 %v5345, %v5507
    %v5620 = vmul.f32 %v5346, %v5508
    %v5621 = vmul.f32 %v5347, %v5509
    %v5622 = vmul.f32 %v5348, %v5510
    %v5623 = vmul.f32 %v5349, %v5511
    %v5624 = vmul.f32 %v5350, %v5512
    %v5625 = vmul.f32 %v5351, %v5513
    %v5626 = vmul.f32 %v5352, %v5514
    %v5627 = vmul.f32 %v5353, %v5507
    %v5628 = vmul.f32 %v5354, %v5508
    %v5629 = vmul.f32 %v5355, %v5509
    %v5630 = vmul.f32 %v5356, %v5510
    %v5631 = vmul.f32 %v5357, %v5511
    %v5632 = vmul.f32 %v5358, %v5512
    %v5633 = vmul.f32 %v5359, %v5513
    %v5634 = vmul.f32 %v5360, %v5514
    %v5635 = vmul.f32 %v5361, %v5507
    %v5636 = vmul.f32 %v5362, %v5508
    %v5637 = vmul.f32 %v5363, %v5509
    %v5638 = vmul.f32 %v5364, %v5510
    %v5639 = vmul.f32 %v5365, %v5511
    %v5640 = vmul.f32 %v5366, %v5512
    %v5641 = vmul.f32 %v5367, %v5513
    %v5642 = vmul.f32 %v5368, %v5514
    %v5643 = vmul.f32 %v5369, %v5507
    %v5644 = vmul.f32 %v5370, %v5508
    %v5645 = vmul.f32 %v5371, %v5509
    %v5646 = vmul.f32 %v5372, %v5510
    %v5647 = vmul.f32 %v5373, %v5511
    %v5648 = vmul.f32 %v5374, %v5512
    %v5649 = vmul.f32 %v5375, %v5513
    %v5650 = vmul.f32 %v5376, %v5514
    %v5651 = vmul.f32 %v5377, %v5507
    %v5652 = vmul.f32 %v5378, %v5508
    %v5653 = vmul.f32 %v5379, %v5509
    %v5654 = vmul.f32 %v5380, %v5510
    %v5655 = vmul.f32 %v5381, %v5511
    %v5656 = vmul.f32 %v5382, %v5512
    %v5657 = vmul.f32 %v5383, %v5513
    %v5658 = vmul.f32 %v5384, %v5514
    %v5659 = vmul.f32 %v5385, %v5507
    %v5660 = vmul.f32 %v5386, %v5508
    %v5661 = vmul.f32 %v5387, %v5509
    %v5662 = vmul.f32 %v5388, %v5510
    %v5663 = vmul.f32 %v5389, %v5511
    %v5664 = vmul.f32 %v5390, %v5512
    %v5665 = vmul.f32 %v5391, %v5513
    %v5666 = vmul.f32 %v5392, %v5514
    %v5667 = vmul.f32 %v5393, %v5507
    %v5668 = vmul.f32 %v5394, %v5508
    %v5669 = vmul.f32 %v5395, %v5509
    %v5670 = vmul.f32 %v5396, %v5510
    %v5671 = vmul.f32 %v5397, %v5511
    %v5672 = vmul.f32 %v5398, %v5512
    %v5673 = vmul.f32 %v5399, %v5513
    %v5674 = vmul.f32 %v5400, %v5514
    %v5675 = vmul.f32 %v5401, %v5507
    %v5676 = vmul.f32 %v5402, %v5508
    %v5677 = vmul.f32 %v5403, %v5509
    %v5678 = vmul.f32 %v5404, %v5510
    %v5679 = vmul.f32 %v5405, %v5511
    %v5680 = vmul.f32 %v5406, %v5512
    %v5681 = vmul.f32 %v5407, %v5513
    %v5682 = vmul.f32 %v5408, %v5514
    %v5683 = vmul.f32 %v5409, %v5507
    %v5684 = vmul.f32 %v5410, %v5508
    %v5685 = vmul.f32 %v5411, %v5509
    %v5686 = vmul.f32 %v5412, %v5510
    %v5687 = vmul.f32 %v5413, %v5511
    %v5688 = vmul.f32 %v5414, %v5512
    %v5689 = vmul.f32 %v5415, %v5513
    %v5690 = vmul.f32 %v5416, %v5514
    %v5691 = vmul.f32 %v5417, %v5507
    %v5692 = vmul.f32 %v5418, %v5508
    %v5693 = vmul.f32 %v5419, %v5509
    %v5694 = vmul.f32 %v5420, %v5510
    %v5695 = vmul.f32 %v5421, %v5511
    %v5696 = vmul.f32 %v5422, %v5512
    %v5697 = vmul.f32 %v5423, %v5513
    %v5698 = vmul.f32 %v5424, %v5514
    %v5699 = vmul.f32 %v5425, %v5507
    %v5700 = vmul.f32 %v5426, %v5508
    %v5701 = vmul.f32 %v5427, %v5509
    %v5702 = vmul.f32 %v5428, %v5510
    %v5703 = vmul.f32 %v5429, %v5511
    %v5704 = vmul.f32 %v5430, %v5512
    %v5705 = vmul.f32 %v5431, %v5513
    %v5706 = vmul.f32 %v5432, %v5514
    %v5707 = vmul.f32 %v5433, %v5507
    %v5708 = vmul.f32 %v5434, %v5508
    %v5709 = vmul.f32 %v5435, %v5509
    %v5710 = vmul.f32 %v5436, %v5510
    %v5711 = vmul.f32 %v5437, %v5511
    %v5712 = vmul.f32 %v5438, %v5512
    %v5713 = vmul.f32 %v5439, %v5513
    %v5714 = vmul.f32 %v5440, %v5514
    %v5715 = vmul.f32 %v5441, %v5507
    %v5716 = vmul.f32 %v5442, %v5508
    %v5717 = vmul.f32 %v5443, %v5509
    %v5718 = vmul.f32 %v5444, %v5510
    %v5719 = vmul.f32 %v5445, %v5511
    %v5720 = vmul.f32 %v5446, %v5512
    %v5721 = vmul.f32 %v5447, %v5513
    %v5722 = vmul.f32 %v5448, %v5514
    %v5723 = vmul.f32 %v5449, %v5507
    %v5724 = vmul.f32 %v5450, %v5508
    %v5725 = vmul.f32 %v5451, %v5509
    %v5726 = vmul.f32 %v5452, %v5510
    %v5727 = vmul.f32 %v5453, %v5511
    %v5728 = vmul.f32 %v5454, %v5512
    %v5729 = vmul.f32 %v5455, %v5513
    %v5730 = vmul.f32 %v5456, %v5514
    %v5731 = vmul.f32 %v5457, %v5507
    %v5732 = vmul.f32 %v5458, %v5508
    %v5733 = vmul.f32 %v5459, %v5509
    %v5734 = vmul.f32 %v5460, %v5510
    %v5735 = vmul.f32 %v5461, %v5511
    %v5736 = vmul.f32 %v5462, %v5512
    %v5737 = vmul.f32 %v5463, %v5513
    %v5738 = vmul.f32 %v5464, %v5514
    %v5739 = vmul.f32 %v5465, %v5507
    %v5740 = vmul.f32 %v5466, %v5508
    %v5741 = vmul.f32 %v5467, %v5509
    %v5742 = vmul.f32 %v5468, %v5510
    %v5743 = vmul.f32 %v5469, %v5511
    %v5744 = vmul.f32 %v5470, %v5512
    %v5745 = vmul.f32 %v5471, %v5513
    %v5746 = vmul.f32 %v5472, %v5514
    %v5747 = vmul.f32 %v5473, %v5507
    %v5748 = vmul.f32 %v5474, %v5508
    %v5749 = vmul.f32 %v5475, %v5509
    %v5750 = vmul.f32 %v5476, %v5510
    %v5751 = vmul.f32 %v5477, %v5511
    %v5752 = vmul.f32 %v5478, %v5512
    %v5753 = vmul.f32 %v5479, %v5513
    %v5754 = vmul.f32 %v5480, %v5514
    %v5755 = vmul.f32 %v5481, %v5507
    %v5756 = vmul.f32 %v5482, %v5508
    %v5757 = vmul.f32 %v5483, %v5509
    %v5758 = vmul.f32 %v5484, %v5510
    %v5759 = vmul.f32 %v5485, %v5511
    %v5760 = vmul.f32 %v5486, %v5512
    %v5761 = vmul.f32 %v5487, %v5513
    %v5762 = vmul.f32 %v5488, %v5514
    %v5763 = vmul.f32 %v5489, %v5507
    %v5764 = vmul.f32 %v5490, %v5508
    %v5765 = vmul.f32 %v5491, %v5509
    %v5766 = vmul.f32 %v5492, %v5510
    %v5767 = vmul.f32 %v5493, %v5511
    %v5768 = vmul.f32 %v5494, %v5512
    %v5769 = vmul.f32 %v5495, %v5513
    %v5770 = vmul.f32 %v5496, %v5514
    %v5771 = vmul.f32 %v5497, %v5507
    %v5772 = vmul.f32 %v5498, %v5508
    %v5773 = vmul.f32 %v5499, %v5509
    %v5774 = vmul.f32 %v5500, %v5510
    %v5775 = vmul.f32 %v5501, %v5511
    %v5776 = vmul.f32 %v5502, %v5512
    %v5777 = vmul.f32 %v5503, %v5513
    %v5778 = vmul.f32 %v5504, %v5514
    %v5779 = vadd.f32 %v5523, %v5524
    %v5780 = vadd.f32 %v5779, %v5525
    %v5781 = vadd.f32 %v5780, %v5526
    %v5782 = vadd.f32 %v5781, %v5527
    %v5783 = vadd.f32 %v5782, %v5528
    %v5784 = vadd.f32 %v5783, %v5529
    %v5785 = vadd.f32 %v5784, %v5530
    %5786 = vadd.xlane.f32.xlu0 %v5785
    %v5787 = vpop.xlane.xlu0 %5786
    %v5788 = vadd.f32 %v5531, %v5532
    %v5789 = vadd.f32 %v5788, %v5533
    %v5790 = vadd.f32 %v5789, %v5534
    %v5791 = vadd.f32 %v5790, %v5535
    %v5792 = vadd.f32 %v5791, %v5536
    %v5793 = vadd.f32 %v5792, %v5537
    %v5794 = vadd.f32 %v5793, %v5538
    %5795 = vadd.xlane.f32.xlu0 %v5794
    %v5796 = vpop.xlane.xlu0 %5795
    %v5797 = vadd.f32 %v5539, %v5540
    %v5798 = vadd.f32 %v5797, %v5541
    %v5799 = vadd.f32 %v5798, %v5542
    %v5800 = vadd.f32 %v5799, %v5543
    %v5801 = vadd.f32 %v5800, %v5544
    %v5802 = vadd.f32 %v5801, %v5545
    %v5803 = vadd.f32 %v5802, %v5546
    %5804 = vadd.xlane.f32.xlu0 %v5803
    %v5805 = vpop.xlane.xlu0 %5804
    %v5806 = vadd.f32 %v5547, %v5548
    %v5807 = vadd.f32 %v5806, %v5549
    %v5808 = vadd.f32 %v5807, %v5550
    %v5809 = vadd.f32 %v5808, %v5551
    %v5810 = vadd.f32 %v5809, %v5552
    %v5811 = vadd.f32 %v5810, %v5553
    %v5812 = vadd.f32 %v5811, %v5554
    %5813 = vadd.xlane.f32.xlu0 %v5812
    %v5814 = vpop.xlane.xlu0 %5813
    %v5815 = vadd.f32 %v5555, %v5556
    %v5816 = vadd.f32 %v5815, %v5557
    %v5817 = vadd.f32 %v5816, %v5558
    %v5818 = vadd.f32 %v5817, %v5559
    %v5819 = vadd.f32 %v5818, %v5560
    %v5820 = vadd.f32 %v5819, %v5561
    %v5821 = vadd.f32 %v5820, %v5562
    %5822 = vadd.xlane.f32.xlu0 %v5821
    %v5823 = vpop.xlane.xlu0 %5822
    %v5824 = vadd.f32 %v5563, %v5564
    %v5825 = vadd.f32 %v5824, %v5565
    %v5826 = vadd.f32 %v5825, %v5566
    %v5827 = vadd.f32 %v5826, %v5567
    %v5828 = vadd.f32 %v5827, %v5568
    %v5829 = vadd.f32 %v5828, %v5569
    %v5830 = vadd.f32 %v5829, %v5570
    %5831 = vadd.xlane.f32.xlu0 %v5830
    %v5832 = vpop.xlane.xlu0 %5831
    %v5833 = vadd.f32 %v5571, %v5572
    %v5834 = vadd.f32 %v5833, %v5573
    %v5835 = vadd.f32 %v5834, %v5574
    %v5836 = vadd.f32 %v5835, %v5575
    %v5837 = vadd.f32 %v5836, %v5576
    %v5838 = vadd.f32 %v5837, %v5577
    %v5839 = vadd.f32 %v5838, %v5578
    %5840 = vadd.xlane.f32.xlu0 %v5839
    %v5841 = vpop.xlane.xlu0 %5840
    %v5842 = vadd.f32 %v5579, %v5580
    %v5843 = vadd.f32 %v5842, %v5581
    %v5844 = vadd.f32 %v5843, %v5582
    %v5845 = vadd.f32 %v5844, %v5583
    %v5846 = vadd.f32 %v5845, %v5584
    %v5847 = vadd.f32 %v5846, %v5585
    %v5848 = vadd.f32 %v5847, %v5586
    %5849 = vadd.xlane.f32.xlu0 %v5848
    %v5850 = vpop.xlane.xlu0 %5849
    %v5851 = vadd.f32 %v5587, %v5588
    %v5852 = vadd.f32 %v5851, %v5589
    %v5853 = vadd.f32 %v5852, %v5590
    %v5854 = vadd.f32 %v5853, %v5591
    %v5855 = vadd.f32 %v5854, %v5592
    %v5856 = vadd.f32 %v5855, %v5593
    %v5857 = vadd.f32 %v5856, %v5594
    %5858 = vadd.xlane.f32.xlu0 %v5857
    %v5859 = vpop.xlane.xlu0 %5858
    %v5860 = vadd.f32 %v5595, %v5596
    %v5861 = vadd.f32 %v5860, %v5597
    %v5862 = vadd.f32 %v5861, %v5598
    %v5863 = vadd.f32 %v5862, %v5599
    %v5864 = vadd.f32 %v5863, %v5600
    %v5865 = vadd.f32 %v5864, %v5601
    %v5866 = vadd.f32 %v5865, %v5602
    %5867 = vadd.xlane.f32.xlu0 %v5866
    %v5868 = vpop.xlane.xlu0 %5867
    %v5869 = vadd.f32 %v5603, %v5604
    %v5870 = vadd.f32 %v5869, %v5605
    %v5871 = vadd.f32 %v5870, %v5606
    %v5872 = vadd.f32 %v5871, %v5607
    %v5873 = vadd.f32 %v5872, %v5608
    %v5874 = vadd.f32 %v5873, %v5609
    %v5875 = vadd.f32 %v5874, %v5610
    %5876 = vadd.xlane.f32.xlu0 %v5875
    %v5877 = vpop.xlane.xlu0 %5876
    %v5878 = vadd.f32 %v5611, %v5612
    %v5879 = vadd.f32 %v5878, %v5613
    %v5880 = vadd.f32 %v5879, %v5614
    %v5881 = vadd.f32 %v5880, %v5615
    %v5882 = vadd.f32 %v5881, %v5616
    %v5883 = vadd.f32 %v5882, %v5617
    %v5884 = vadd.f32 %v5883, %v5618
    %5885 = vadd.xlane.f32.xlu0 %v5884
    %v5886 = vpop.xlane.xlu0 %5885
    %v5887 = vadd.f32 %v5619, %v5620
    %v5888 = vadd.f32 %v5887, %v5621
    %v5889 = vadd.f32 %v5888, %v5622
    %v5890 = vadd.f32 %v5889, %v5623
    %v5891 = vadd.f32 %v5890, %v5624
    %v5892 = vadd.f32 %v5891, %v5625
    %v5893 = vadd.f32 %v5892, %v5626
    %5894 = vadd.xlane.f32.xlu0 %v5893
    %v5895 = vpop.xlane.xlu0 %5894
    %v5896 = vadd.f32 %v5627, %v5628
    %v5897 = vadd.f32 %v5896, %v5629
    %v5898 = vadd.f32 %v5897, %v5630
    %v5899 = vadd.f32 %v5898, %v5631
    %v5900 = vadd.f32 %v5899, %v5632
    %v5901 = vadd.f32 %v5900, %v5633
    %v5902 = vadd.f32 %v5901, %v5634
    %5903 = vadd.xlane.f32.xlu0 %v5902
    %v5904 = vpop.xlane.xlu0 %5903
    %v5905 = vadd.f32 %v5635, %v5636
    %v5906 = vadd.f32 %v5905, %v5637
    %v5907 = vadd.f32 %v5906, %v5638
    %v5908 = vadd.f32 %v5907, %v5639
    %v5909 = vadd.f32 %v5908, %v5640
    %v5910 = vadd.f32 %v5909, %v5641
    %v5911 = vadd.f32 %v5910, %v5642
    %5912 = vadd.xlane.f32.xlu0 %v5911
    %v5913 = vpop.xlane.xlu0 %5912
    %v5914 = vadd.f32 %v5643, %v5644
    %v5915 = vadd.f32 %v5914, %v5645
    %v5916 = vadd.f32 %v5915, %v5646
    %v5917 = vadd.f32 %v5916, %v5647
    %v5918 = vadd.f32 %v5917, %v5648
    %v5919 = vadd.f32 %v5918, %v5649
    %v5920 = vadd.f32 %v5919, %v5650
    %5921 = vadd.xlane.f32.xlu0 %v5920
    %v5922 = vpop.xlane.xlu0 %5921
    %v5923 = vadd.f32 %v5651, %v5652
    %v5924 = vadd.f32 %v5923, %v5653
    %v5925 = vadd.f32 %v5924, %v5654
    %v5926 = vadd.f32 %v5925, %v5655
    %v5927 = vadd.f32 %v5926, %v5656
    %v5928 = vadd.f32 %v5927, %v5657
    %v5929 = vadd.f32 %v5928, %v5658
    %5930 = vadd.xlane.f32.xlu0 %v5929
    %v5931 = vpop.xlane.xlu0 %5930
    %v5932 = vadd.f32 %v5659, %v5660
    %v5933 = vadd.f32 %v5932, %v5661
    %v5934 = vadd.f32 %v5933, %v5662
    %v5935 = vadd.f32 %v5934, %v5663
    %v5936 = vadd.f32 %v5935, %v5664
    %v5937 = vadd.f32 %v5936, %v5665
    %v5938 = vadd.f32 %v5937, %v5666
    %5939 = vadd.xlane.f32.xlu0 %v5938
    %v5940 = vpop.xlane.xlu0 %5939
    %v5941 = vadd.f32 %v5667, %v5668
    %v5942 = vadd.f32 %v5941, %v5669
    %v5943 = vadd.f32 %v5942, %v5670
    %v5944 = vadd.f32 %v5943, %v5671
    %v5945 = vadd.f32 %v5944, %v5672
    %v5946 = vadd.f32 %v5945, %v5673
    %v5947 = vadd.f32 %v5946, %v5674
    %5948 = vadd.xlane.f32.xlu0 %v5947
    %v5949 = vpop.xlane.xlu0 %5948
    %v5950 = vadd.f32 %v5675, %v5676
    %v5951 = vadd.f32 %v5950, %v5677
    %v5952 = vadd.f32 %v5951, %v5678
    %v5953 = vadd.f32 %v5952, %v5679
    %v5954 = vadd.f32 %v5953, %v5680
    %v5955 = vadd.f32 %v5954, %v5681
    %v5956 = vadd.f32 %v5955, %v5682
    %5957 = vadd.xlane.f32.xlu0 %v5956
    %v5958 = vpop.xlane.xlu0 %5957
    %v5959 = vadd.f32 %v5683, %v5684
    %v5960 = vadd.f32 %v5959, %v5685
    %v5961 = vadd.f32 %v5960, %v5686
    %v5962 = vadd.f32 %v5961, %v5687
    %v5963 = vadd.f32 %v5962, %v5688
    %v5964 = vadd.f32 %v5963, %v5689
    %v5965 = vadd.f32 %v5964, %v5690
    %5966 = vadd.xlane.f32.xlu0 %v5965
    %v5967 = vpop.xlane.xlu0 %5966
    %v5968 = vadd.f32 %v5691, %v5692
    %v5969 = vadd.f32 %v5968, %v5693
    %v5970 = vadd.f32 %v5969, %v5694
    %v5971 = vadd.f32 %v5970, %v5695
    %v5972 = vadd.f32 %v5971, %v5696
    %v5973 = vadd.f32 %v5972, %v5697
    %v5974 = vadd.f32 %v5973, %v5698
    %5975 = vadd.xlane.f32.xlu0 %v5974
    %v5976 = vpop.xlane.xlu0 %5975
    %v5977 = vadd.f32 %v5699, %v5700
    %v5978 = vadd.f32 %v5977, %v5701
    %v5979 = vadd.f32 %v5978, %v5702
    %v5980 = vadd.f32 %v5979, %v5703
    %v5981 = vadd.f32 %v5980, %v5704
    %v5982 = vadd.f32 %v5981, %v5705
    %v5983 = vadd.f32 %v5982, %v5706
    %5984 = vadd.xlane.f32.xlu0 %v5983
    %v5985 = vpop.xlane.xlu0 %5984
    %v5986 = vadd.f32 %v5707, %v5708
    %v5987 = vadd.f32 %v5986, %v5709
    %v5988 = vadd.f32 %v5987, %v5710
    %v5989 = vadd.f32 %v5988, %v5711
    %v5990 = vadd.f32 %v5989, %v5712
    %v5991 = vadd.f32 %v5990, %v5713
    %v5992 = vadd.f32 %v5991, %v5714
    %5993 = vadd.xlane.f32.xlu0 %v5992
    %v5994 = vpop.xlane.xlu0 %5993
    %v5995 = vadd.f32 %v5715, %v5716
    %v5996 = vadd.f32 %v5995, %v5717
    %v5997 = vadd.f32 %v5996, %v5718
    %v5998 = vadd.f32 %v5997, %v5719
    %v5999 = vadd.f32 %v5998, %v5720
    %v6000 = vadd.f32 %v5999, %v5721
    %v6001 = vadd.f32 %v6000, %v5722
    %6002 = vadd.xlane.f32.xlu0 %v6001
    %v6003 = vpop.xlane.xlu0 %6002
    %v6004 = vadd.f32 %v5723, %v5724
    %v6005 = vadd.f32 %v6004, %v5725
    %v6006 = vadd.f32 %v6005, %v5726
    %v6007 = vadd.f32 %v6006, %v5727
    %v6008 = vadd.f32 %v6007, %v5728
    %v6009 = vadd.f32 %v6008, %v5729
    %v6010 = vadd.f32 %v6009, %v5730
    %6011 = vadd.xlane.f32.xlu0 %v6010
    %v6012 = vpop.xlane.xlu0 %6011
    %v6013 = vadd.f32 %v5731, %v5732
    %v6014 = vadd.f32 %v6013, %v5733
    %v6015 = vadd.f32 %v6014, %v5734
    %v6016 = vadd.f32 %v6015, %v5735
    %v6017 = vadd.f32 %v6016, %v5736
    %v6018 = vadd.f32 %v6017, %v5737
    %v6019 = vadd.f32 %v6018, %v5738
    %6020 = vadd.xlane.f32.xlu0 %v6019
    %v6021 = vpop.xlane.xlu0 %6020
    %v6022 = vadd.f32 %v5739, %v5740
    %v6023 = vadd.f32 %v6022, %v5741
    %v6024 = vadd.f32 %v6023, %v5742
    %v6025 = vadd.f32 %v6024, %v5743
    %v6026 = vadd.f32 %v6025, %v5744
    %v6027 = vadd.f32 %v6026, %v5745
    %v6028 = vadd.f32 %v6027, %v5746
    %6029 = vadd.xlane.f32.xlu0 %v6028
    %v6030 = vpop.xlane.xlu0 %6029
    %v6031 = vadd.f32 %v5747, %v5748
    %v6032 = vadd.f32 %v6031, %v5749
    %v6033 = vadd.f32 %v6032, %v5750
    %v6034 = vadd.f32 %v6033, %v5751
    %v6035 = vadd.f32 %v6034, %v5752
    %v6036 = vadd.f32 %v6035, %v5753
    %v6037 = vadd.f32 %v6036, %v5754
    %6038 = vadd.xlane.f32.xlu0 %v6037
    %v6039 = vpop.xlane.xlu0 %6038
    %v6040 = vadd.f32 %v5755, %v5756
    %v6041 = vadd.f32 %v6040, %v5757
    %v6042 = vadd.f32 %v6041, %v5758
    %v6043 = vadd.f32 %v6042, %v5759
    %v6044 = vadd.f32 %v6043, %v5760
    %v6045 = vadd.f32 %v6044, %v5761
    %v6046 = vadd.f32 %v6045, %v5762
    %6047 = vadd.xlane.f32.xlu0 %v6046
    %v6048 = vpop.xlane.xlu0 %6047
    %v6049 = vadd.f32 %v5763, %v5764
    %v6050 = vadd.f32 %v6049, %v5765
    %v6051 = vadd.f32 %v6050, %v5766
    %v6052 = vadd.f32 %v6051, %v5767
    %v6053 = vadd.f32 %v6052, %v5768
    %v6054 = vadd.f32 %v6053, %v5769
    %v6055 = vadd.f32 %v6054, %v5770
    %6056 = vadd.xlane.f32.xlu0 %v6055
    %v6057 = vpop.xlane.xlu0 %6056
    %v6058 = vadd.f32 %v5771, %v5772
    %v6059 = vadd.f32 %v6058, %v5773
    %v6060 = vadd.f32 %v6059, %v5774
    %v6061 = vadd.f32 %v6060, %v5775
    %v6062 = vadd.f32 %v6061, %v5776
    %v6063 = vadd.f32 %v6062, %v5777
    %v6064 = vadd.f32 %v6063, %v5778
    %6065 = vadd.xlane.f32.xlu0 %v6064
    %v6066 = vpop.xlane.xlu0 %6065
    %v6067 = vld [vmem:[#allocation2] sm:$0x1]
    %v6069 = vperm.slane %v6067, 0
    %v6071 = vadd.f32 %v5787, %v6069
    %v6072 = vadd.f32 %v5796, %v6069
    %v6073 = vadd.f32 %v5805, %v6069
    %v6074 = vadd.f32 %v5814, %v6069
    %v6075 = vadd.f32 %v5823, %v6069
    %v6076 = vadd.f32 %v5832, %v6069
    %v6077 = vadd.f32 %v5841, %v6069
    %v6078 = vadd.f32 %v5850, %v6069
    %v6079 = vadd.f32 %v5859, %v6069
    %v6080 = vadd.f32 %v5868, %v6069
    %v6081 = vadd.f32 %v5877, %v6069
    %v6082 = vadd.f32 %v5886, %v6069
    %v6083 = vadd.f32 %v5895, %v6069
    %v6084 = vadd.f32 %v5904, %v6069
    %v6085 = vadd.f32 %v5913, %v6069
    %v6086 = vadd.f32 %v5922, %v6069
    %v6087 = vadd.f32 %v5931, %v6069
    %v6088 = vadd.f32 %v5940, %v6069
    %v6089 = vadd.f32 %v5949, %v6069
    %v6090 = vadd.f32 %v5958, %v6069
    %v6091 = vadd.f32 %v5967, %v6069
    %v6092 = vadd.f32 %v5976, %v6069
    %v6093 = vadd.f32 %v5985, %v6069
    %v6094 = vadd.f32 %v5994, %v6069
    %v6095 = vadd.f32 %v6003, %v6069
    %v6096 = vadd.f32 %v6012, %v6069
    %v6097 = vadd.f32 %v6021, %v6069
    %v6098 = vadd.f32 %v6030, %v6069
    %v6099 = vadd.f32 %v6039, %v6069
    %v6100 = vadd.f32 %v6048, %v6069
    %v6101 = vadd.f32 %v6057, %v6069
    %v6102 = vadd.f32 %v6066, %v6069
    %vm6103 = vcmask 7168
    %6104 = vst.msk [vmem:[%s7] sm:$0xff] %vm6103, %v6071
    %6105 = vst.msk [vmem:[%s7 + $0x8] sm:$0xff] %vm6103, %v6072
    %6106 = vst.msk [vmem:[%s7 + $0x10] sm:$0xff] %vm6103, %v6073
    %6107 = vst.msk [vmem:[%s7 + $0x18] sm:$0xff] %vm6103, %v6074
    %6108 = vst.msk [vmem:[%s7 + $0x20] sm:$0xff] %vm6103, %v6075
    %6109 = vst.msk [vmem:[%s7 + $0x28] sm:$0xff] %vm6103, %v6076
    %6110 = vst.msk [vmem:[%s7 + $0x30] sm:$0xff] %vm6103, %v6077
    %6111 = vst.msk [vmem:[%s7 + $0x38] sm:$0xff] %vm6103, %v6078
    %6112 = vst.msk [vmem:[%s7 + $0x40] sm:$0xff] %vm6103, %v6079
    %6113 = vst.msk [vmem:[%s7 + $0x48] sm:$0xff] %vm6103, %v6080
    %6114 = vst.msk [vmem:[%s7 + $0x50] sm:$0xff] %vm6103, %v6081
    %6115 = vst.msk [vmem:[%s7 + $0x58] sm:$0xff] %vm6103, %v6082
    %6116 = vst.msk [vmem:[%s7 + $0x60] sm:$0xff] %vm6103, %v6083
    %6117 = vst.msk [vmem:[%s7 + $0x68] sm:$0xff] %vm6103, %v6084
    %6118 = vst.msk [vmem:[%s7 + $0x70] sm:$0xff] %vm6103, %v6085
    %6119 = vst.msk [vmem:[%s7 + $0x78] sm:$0xff] %vm6103, %v6086
    %6120 = vst.msk [vmem:[%s7 + $0x80] sm:$0xff] %vm6103, %v6087
    %6121 = vst.msk [vmem:[%s7 + $0x88] sm:$0xff] %vm6103, %v6088
    %6122 = vst.msk [vmem:[%s7 + $0x90] sm:$0xff] %vm6103, %v6089
    %6123 = vst.msk [vmem:[%s7 + $0x98] sm:$0xff] %vm6103, %v6090
    %6124 = vst.msk [vmem:[%s7 + $0xa0] sm:$0xff] %vm6103, %v6091
    %6125 = vst.msk [vmem:[%s7 + $0xa8] sm:$0xff] %vm6103, %v6092
    %6126 = vst.msk [vmem:[%s7 + $0xb0] sm:$0xff] %vm6103, %v6093
    %6127 = vst.msk [vmem:[%s7 + $0xb8] sm:$0xff] %vm6103, %v6094
    %6128 = vst.msk [vmem:[%s7 + $0xc0] sm:$0xff] %vm6103, %v6095
    %6129 = vst.msk [vmem:[%s7 + $0xc8] sm:$0xff] %vm6103, %v6096
    %6130 = vst.msk [vmem:[%s7 + $0xd0] sm:$0xff] %vm6103, %v6097
    %6131 = vst.msk [vmem:[%s7 + $0xd8] sm:$0xff] %vm6103, %v6098
    %6132 = vst.msk [vmem:[%s7 + $0xe0] sm:$0xff] %vm6103, %v6099
    %6133 = vst.msk [vmem:[%s7 + $0xe8] sm:$0xff] %vm6103, %v6100
    %6134 = vst.msk [vmem:[%s7 + $0xf0] sm:$0xff] %vm6103, %v6101
    %6135 = vst.msk [vmem:[%s7 + $0xf8] sm:$0xff] %vm6103, %v6102
    // Predicated region
    $region34: #{tpu_custom_call.1} parent=1 // pred_check
      _
    $region35: #{tpu_custom_call.1} parent=1 // pred_check_branch
      %6137 = sbr.rel (0) target = $region37
    $region36: #{tpu_custom_call.1} parent=1 // pred_region
      _
    $region37: #{tpu_custom_call.1} parent=1 // pred_fallthru
      _
    // Predicated region
    $region38: #{tpu_custom_call.1} parent=1 // pred_check
      _
    $region39: #{tpu_custom_call.1} parent=1 // pred_check_branch
      %6139 = sbr.rel (0) target = $region41
    $region40: #{tpu_custom_call.1} parent=1 // pred_region
      _
    $region41: #{tpu_custom_call.1} parent=1 // pred_fallthru
      _
    %6140 = vsyncpa [#allocation4], 1

</llo_original>
